<compile_context>
chip_gen: v6e
topology: v6e:2x2x1
jax: 0.10.0
libtpu: 0.0.40
codegen_flags: <defaults>
</compile_context>

<pallas_src>
import numpy as np
import jax
import jax.numpy as jnp
from jax import lax
from jax.experimental import pallas as pl
from jax.experimental.pallas import tpu as pltpu

# ----------------------------- config (cfg) ----------------------------------
N_USERS = 10
TOTAL_EMB_DIM = 32            # E = cfg.total_emb_dim
HIDDEN_DIM = TOTAL_EMB_DIM    # H (== E because long_short_term_method == 'ini')
ST_HIST_LEN = 8               # T = cfg.st_hist_len
HIST_LEN = 10                 # L (full history length, sliced to T)
BATCH = 16
BLOCK_B = 8                   # batch tile (sublane-aligned); "parallel" grid axis


# ------------------------------ Pallas kernel --------------------------------
def _lstur_gru_kernel(x_ref, m_ref, h0_ref, wih_ref, whh_ref, b_ref, out_ref,
                      gr_s, gz_s, gn_s, m_s):
    # x_ref:   (BT, T, E)  bf16 short-term history tile (batch-major)
    # m_ref:   (BT, T, 1)  f32 validity mask (prefix lengths from hm_st)
    # h0_ref:  (BT, H)     f32 long-term user embedding (GRU initial hidden)
    # wih_ref: (3, E, H)   bf16 input weights, gate order [r, z, n]
    # whh_ref: (3, H, H)   bf16 hidden weights, gate order [r, z, n]
    # b_ref:   (4, 1, H)   f32 biases [b_ir+b_hr | b_iz+b_hz | b_in | b_hn]
    # scratch: gr_s/gz_s/gn_s/m_s (BT, T, H) f32
    BT, T, E = x_ref.shape
    H = h0_ref.shape[1]

    # per-gate weights: each matmul output starts at lane 0 (no gate slicing).
    w_ir, w_iz, w_in = wih_ref[0], wih_ref[1], wih_ref[2]
    w_hr, w_hz, w_hn = whh_ref[0], whh_ref[1], whh_ref[2]
    b_r, b_z, b_in, b_hn = b_ref[0], b_ref[1], b_ref[2], b_ref[3]     # (1, H)

    # ---- hoisted, off-the-serial-chain work ---------------------------------
    # (1) input-side gate projections for all T steps in one matmul per gate.
    x_flat = x_ref[...].reshape(BT * T, E)                            # bf16
    gr_s[...] = (jnp.dot(x_flat, w_ir, preferred_element_type=jnp.float32)
                 + b_r).reshape(BT, T, H)
    gz_s[...] = (jnp.dot(x_flat, w_iz, preferred_element_type=jnp.float32)
                 + b_z).reshape(BT, T, H)
    gn_s[...] = (jnp.dot(x_flat, w_in, preferred_element_type=jnp.float32)
                 + b_in).reshape(BT, T, H)
    # (2) lane-dense mask: broadcast (BT,T,1)->(BT,T,H) once; per-step blend
    #     becomes vld + vcmp + vsel with no per-step lane broadcast.
    m_s[...] = jnp.broadcast_to(m_ref[...], (BT, T, H))
    # (3) hoist the b_hn broadcast (JAX does not CSE broadcast_in_dim).
    b_hn_b = jnp.broadcast_to(b_hn, (BT, H))

    # ---- serial recurrence: fully unrolled (T static & tiny) ----------------
    # Only the three (BT,H)@(H,H) matmuls + gate math remain on the chain;
    # elementwise math stays f32 (v5e has no bf16 VPU/EUP).
    h = h0_ref[...]                                                   # (BT, H)
    for t in range(T):
        hb = h.astype(jnp.bfloat16)
        gh_r = jnp.dot(hb, w_hr, preferred_element_type=jnp.float32)
        gh_z = jnp.dot(hb, w_hz, preferred_element_type=jnp.float32)
        gh_n = jnp.dot(hb, w_hn, preferred_element_type=jnp.float32)
        r = jax.nn.sigmoid(gr_s[:, t, :] + gh_r)
        z = jax.nn.sigmoid(gz_s[:, t, :] + gh_z)
        n = jnp.tanh(gn_s[:, t, :] + r * (gh_n + b_hn_b))
        h_new = n + z * (h - n)                      # == (1 - z) * n + z * h
        # packed-sequence semantics: only update inside the valid prefix.
        # where() keeps garbage in padded timesteps from leaking via 0 * NaN.
        h = jnp.where(m_s[:, t, :] > 0.0, h_new, h)

    out_ref[...] = h
    # TODO(synk): present the output as a lane-dense (BT*H//128, 128) slab
    # (unmasked vst) and keep w_h* weight-stationary in the MXU via
    # pltpu.matmul_push_rhs / matmul_acc_lhs across the unrolled steps.


def lstur_gru(x, m, h0, w_ih, w_hh, b_cat, *, block_b=BLOCK_B):
    B, T, E = x.shape
    H = h0.shape[1]
    nb = pl.cdiv(B, block_b)
    Bp = nb * block_b
    if Bp != B:                                   # pad batch to a tile multiple
        pad = Bp - B
        x = jnp.pad(x, ((0, pad), (0, 0), (0, 0)))
        m = jnp.pad(m, ((0, pad), (0, 0), (0, 0)))
        h0 = jnp.pad(h0, ((0, pad), (0, 0)))

    out = pl.pallas_call(
        _lstur_gru_kernel,
        out_shape=jax.ShapeDtypeStruct((Bp, H), jnp.float32),
        grid_spec=pltpu.PrefetchScalarGridSpec(
            num_scalar_prefetch=0,
            grid=(nb,),
            in_specs=[
                pl.BlockSpec((block_b, T, E), lambda b: (b, 0, 0)),   # x tile
                pl.BlockSpec((block_b, T, 1), lambda b: (b, 0, 0)),   # mask tile
                pl.BlockSpec((block_b, H), lambda b: (b, 0)),         # h0 tile
                pl.BlockSpec((3, E, H), lambda b: (0, 0, 0)),         # resident w_ih
                pl.BlockSpec((3, H, H), lambda b: (0, 0, 0)),         # resident w_hh
                pl.BlockSpec((4, 1, H), lambda b: (0, 0, 0)),         # resident biases
            ],
            out_specs=pl.BlockSpec((block_b, H), lambda b: (b, 0)),
            scratch_shapes=[pltpu.VMEM((block_b, T, H), jnp.float32)] * 4,
        ),
        compiler_params=pltpu.CompilerParams(
            dimension_semantics=("parallel",)),
    )(x, m, h0, w_ih, w_hh, b_cat)
    return out[:B]


# -------------------------- parameter preparation -----------------------------
def _prepare_gru_params(params):
    """Gate-stacked (3,E,H)/(3,H,H)/(3,1,H) -> kernel layout.

    Weights cast to bf16 for the MXU (f32 accumulation in-kernel); biases stay
    f32.  b_ir+b_hr / b_iz+b_hz / b_in are folded into the hoisted input
    projections; b_hn stays separate because of r * (gh_n + b_hn).
    """
    w_ih = params["w_ih"].astype(jnp.bfloat16)                 # (3, E, H)
    w_hh = params["w_hh"].astype(jnp.bfloat16)                 # (3, H, H)
    b_ih, b_hh = params["b_ih"], params["b_hh"]                # (3, 1, H) each
    b_cat = jnp.stack([b_ih[0] + b_hh[0],                      # r
                       b_ih[1] + b_hh[1],                      # z
                       b_ih[2],                                # n (input side)
                       b_hh[2]], axis=0).astype(jnp.float32)   # (4, 1, H)
    return w_ih, w_hh, b_cat


# ------------------------------ module forward --------------------------------
def lstur_user_encoder(history_features, user_ids, params):
    h, hm = history_features                 # h: (B, L, E), hm: (B, L, 1)
    # long-term encoder: nn.Embedding(n_users+1, H, padding_idx=0), squeeze(1)
    u_lt = jnp.take(params["user_emb"], user_ids.squeeze(1), axis=0)   # (B, H)
    # self.dropout(u_lt): identity at inference (p_user_dropout not applied)

    h_st = h[:, :ST_HIST_LEN]                # (B, T, E), batch-major (no transpose)
    hm_st = hm[:, :ST_HIST_LEN]              # (B, T, 1)

    w_ih, w_hh, b_cat = _prepare_gru_params(params)

    # bf16 x stream (MXU operands + half the HBM traffic); mask/h0 stay f32.
    # 'ini': _, u = gru(packed(h_st), u_lt.unsqueeze(0)); return u.squeeze(0).unsqueeze(1)
    u = lstur_gru(h_st.astype(jnp.bfloat16), hm_st.astype(jnp.float32),
                  u_lt.astype(jnp.float32), w_ih, w_hh, b_cat)
    return u[:, None, :]                     # (B, 1, H)


# ------------------------------ JAX reference ---------------------------------
def _reference(h, hm, user_ids, params):
    u_lt = jnp.take(params["user_emb"], user_ids.squeeze(1), axis=0)
    h_st = h[:, :ST_HIST_LEN]
    m_st = hm[:, :ST_HIST_LEN, 0]
    w_ir, w_iz, w_in = params["w_ih"]
    w_hr, w_hz, w_hn = params["w_hh"]
    b_ir, b_iz, b_in = params["b_ih"][:, 0]
    b_hr, b_hz, b_hn = params["b_hh"][:, 0]

    def step(h_prev, xm):
        x_t, m_t = xm
        r = jax.nn.sigmoid(x_t @ w_ir + b_ir + h_prev @ w_hr + b_hr)
        z = jax.nn.sigmoid(x_t @ w_iz + b_iz + h_prev @ w_hz + b_hz)
        n = jnp.tanh(x_t @ w_in + b_in + r * (h_prev @ w_hn + b_hn))
        h_new = (1.0 - z) * n + z * h_prev
        m = m_t[:, None]
        return m * h_new + (1.0 - m) * h_prev, None

    h_fin, _ = lax.scan(step, u_lt,
                        (jnp.transpose(h_st, (1, 0, 2)), jnp.transpose(m_st)))
    return h_fin[:, None, :]


# ---------------------------------- main --------------------------------------
if __name__ == "__main__":
    key = jax.random.PRNGKey(0)
    ks = jax.random.split(key, 8)

    # deterministic synthetic parameters (shapes per nn.Embedding / nn.GRU)
    user_emb = 0.1 * jax.random.normal(ks[0], (N_USERS + 1, HIDDEN_DIM), jnp.float32)
    user_emb = user_emb.at[0].set(0.0)       # padding_idx=0
    s = 1.0 / np.sqrt(HIDDEN_DIM)
    w_ih = jax.random.uniform(ks[1], (3, TOTAL_EMB_DIM, HIDDEN_DIM), jnp.float32, -s, s)
    w_hh = jax.random.uniform(ks[2], (3, HIDDEN_DIM, HIDDEN_DIM), jnp.float32, -s, s)
    b_ih = jax.random.uniform(ks[3], (3, 1, HIDDEN_DIM), jnp.float32, -s, s)
    b_hh = jax.random.uniform(ks[4], (3, 1, HIDDEN_DIM), jnp.float32, -s, s)
    params = dict(user_emb=user_emb, w_ih=w_ih, w_hh=w_hh, b_ih=b_ih, b_hh=b_hh)

    # example inputs (B=16 so the batch grid has 2 "parallel" steps of BLOCK_B=8)
    h = jax.random.normal(ks[5], (BATCH, HIST_LEN, TOTAL_EMB_DIM), jnp.float32)
    lengths = jnp.array([5, 3, 8, 1, 0, 10, 7, 2, 8, 4, 6, 0, 1, 9, 3, 8], jnp.int32)
    hm = (jnp.arange(HIST_LEN)[None, :] < lengths[:, None]).astype(jnp.float32)[..., None]
    user_ids = jax.random.randint(ks[6], (BATCH, 1), 0, N_USERS + 1)

    fwd = jax.jit(lambda hh, mm, uid: lstur_user_encoder((hh, mm), uid, params))
    out = jax.block_until_ready(fwd(h, hm, user_ids))

    ref = _reference(h, hm, user_ids, params)
    assert out.shape == (BATCH, 1, HIDDEN_DIM)
    # tolerance loosened vs fp32 (1e-5) because MXU operands are bf16
    assert np.allclose(np.asarray(out), np.asarray(ref), rtol=3e-2, atol=3e-2)
    print("KERNEL_OK")
</pallas_src>

<mosaic_0001>
module attributes {stable_mosaic.version = 11 : i64} {
  func.func @_lstur_gru_kernel(%arg0: i32, %arg1: memref<8x8x32xbf16, #tpu.memory_space<vmem>>, %arg2: memref<8x8x1xf32, #tpu.memory_space<vmem>>, %arg3: memref<8x32xf32, #tpu.memory_space<vmem>>, %arg4: memref<3x32x32xbf16, #tpu.memory_space<vmem>>, %arg5: memref<3x32x32xbf16, #tpu.memory_space<vmem>>, %arg6: memref<4x1x32xf32, #tpu.memory_space<vmem>>, %arg7: memref<8x32xf32, #tpu.memory_space<vmem>>, %arg8: memref<8x8x32xf32, #tpu.memory_space<vmem>>, %arg9: memref<8x8x32xf32, #tpu.memory_space<vmem>>, %arg10: memref<8x8x32xf32, #tpu.memory_space<vmem>>, %arg11: memref<8x8x32xf32, #tpu.memory_space<vmem>>) attributes {dimension_semantics = [#tpu.dimension_semantics<parallel>], iteration_bounds = array<i64: 2>, scalar_prefetch = 0 : i64, scratch_operands = 4 : i64, tpu.core_type = #tpu.core_type<tc>, window_params = [{transform_indices = @transform_0, window_bounds = array<i64: 8, 8, 32>}, {transform_indices = @transform_1, window_bounds = array<i64: 8, 8, 1>}, {transform_indices = @transform_2, window_bounds = array<i64: 8, 32>}, {pipeline_mode = #tpu.pipeline_mode<synchronous>, transform_indices = @transform_3, window_bounds = array<i64: 3, 32, 32>}, {pipeline_mode = #tpu.pipeline_mode<synchronous>, transform_indices = @transform_4, window_bounds = array<i64: 3, 32, 32>}, {pipeline_mode = #tpu.pipeline_mode<synchronous>, transform_indices = @transform_5, window_bounds = array<i64: 4, 1, 32>}, {transform_indices = @transform_6, window_bounds = array<i64: 8, 32>}]} {
    %c0 = arith.constant 0 : index
    %c0_0 = arith.constant 0 : index
    %c0_1 = arith.constant 0 : index
    %0 = vector.load %arg4[%c0, %c0_0, %c0_1] : memref<3x32x32xbf16, #tpu.memory_space<vmem>>, vector<1x32x32xbf16>
    %1 = vector.shape_cast %0 : vector<1x32x32xbf16> to vector<32x32xbf16>
    %c1 = arith.constant 1 : index
    %c0_2 = arith.constant 0 : index
    %c0_3 = arith.constant 0 : index
    %2 = vector.load %arg4[%c1, %c0_2, %c0_3] : memref<3x32x32xbf16, #tpu.memory_space<vmem>>, vector<1x32x32xbf16>
    %3 = vector.shape_cast %2 : vector<1x32x32xbf16> to vector<32x32xbf16>
    %c2 = arith.constant 2 : index
    %c0_4 = arith.constant 0 : index
    %c0_5 = arith.constant 0 : index
    %4 = vector.load %arg4[%c2, %c0_4, %c0_5] : memref<3x32x32xbf16, #tpu.memory_space<vmem>>, vector<1x32x32xbf16>
    %5 = vector.shape_cast %4 : vector<1x32x32xbf16> to vector<32x32xbf16>
    %c0_6 = arith.constant 0 : index
    %c0_7 = arith.constant 0 : index
    %c0_8 = arith.constant 0 : index
    %6 = vector.load %arg5[%c0_6, %c0_7, %c0_8] : memref<3x32x32xbf16, #tpu.memory_space<vmem>>, vector<1x32x32xbf16>
    %7 = vector.shape_cast %6 : vector<1x32x32xbf16> to vector<32x32xbf16>
    %c1_9 = arith.constant 1 : index
    %c0_10 = arith.constant 0 : index
    %c0_11 = arith.constant 0 : index
    %8 = vector.load %arg5[%c1_9, %c0_10, %c0_11] : memref<3x32x32xbf16, #tpu.memory_space<vmem>>, vector<1x32x32xbf16>
    %9 = vector.shape_cast %8 : vector<1x32x32xbf16> to vector<32x32xbf16>
    %c2_12 = arith.constant 2 : index
    %c0_13 = arith.constant 0 : index
    %c0_14 = arith.constant 0 : index
    %10 = vector.load %arg5[%c2_12, %c0_13, %c0_14] : memref<3x32x32xbf16, #tpu.memory_space<vmem>>, vector<1x32x32xbf16>
    %11 = vector.shape_cast %10 : vector<1x32x32xbf16> to vector<32x32xbf16>
    %c0_15 = arith.constant 0 : index
    %c0_16 = arith.constant 0 : index
    %c0_17 = arith.constant 0 : index
    %12 = vector.load %arg6[%c0_15, %c0_16, %c0_17] : memref<4x1x32xf32, #tpu.memory_space<vmem>>, vector<1x1x32xf32>
    %13 = vector.shape_cast %12 : vector<1x1x32xf32> to vector<1x32xf32>
    %c1_18 = arith.constant 1 : index
    %c0_19 = arith.constant 0 : index
    %c0_20 = arith.constant 0 : index
    %14 = vector.load %arg6[%c1_18, %c0_19, %c0_20] : memref<4x1x32xf32, #tpu.memory_space<vmem>>, vector<1x1x32xf32>
    %15 = vector.shape_cast %14 : vector<1x1x32xf32> to vector<1x32xf32>
    %c2_21 = arith.constant 2 : index
    %c0_22 = arith.constant 0 : index
    %c0_23 = arith.constant 0 : index
    %16 = vector.load %arg6[%c2_21, %c0_22, %c0_23] : memref<4x1x32xf32, #tpu.memory_space<vmem>>, vector<1x1x32xf32>
    %17 = vector.shape_cast %16 : vector<1x1x32xf32> to vector<1x32xf32>
    %c3 = arith.constant 3 : index
    %c0_24 = arith.constant 0 : index
    %c0_25 = arith.constant 0 : index
    %18 = vector.load %arg6[%c3, %c0_24, %c0_25] : memref<4x1x32xf32, #tpu.memory_space<vmem>>, vector<1x1x32xf32>
    %19 = vector.shape_cast %18 : vector<1x1x32xf32> to vector<1x32xf32>
    %c0_26 = arith.constant 0 : index
    %c0_27 = arith.constant 0 : index
    %c0_28 = arith.constant 0 : index
    %20 = vector.load %arg1[%c0_26, %c0_27, %c0_28] : memref<8x8x32xbf16, #tpu.memory_space<vmem>>, vector<8x8x32xbf16>
    %21 = vector.shape_cast %20 : vector<8x8x32xbf16> to vector<64x32xbf16>
    %cst = arith.constant dense<0.000000e+00> : vector<64x32xf32>
    %22 = tpu.matmul %21, %1, %cst {dimension_numbers = #tpu.dot_dimension_numbers<[1], [0], [0], [1], [0, 0, 1, 1], [], []>} : vector<64x32xbf16>, vector<32x32xbf16>, vector<64x32xf32> -> vector<64x32xf32>
    %23 = vector.broadcast %13 : vector<1x32xf32> to vector<64x32xf32>
    %24 = arith.addf %22, %23 : vector<64x32xf32>
    %25 = vector.shape_cast %24 : vector<64x32xf32> to vector<8x8x32xf32>
    %c0_29 = arith.constant 0 : index
    %c0_30 = arith.constant 0 : index
    %c0_31 = arith.constant 0 : index
    %26 = vector.load %arg8[%c0_29, %c0_30, %c0_31] : memref<8x8x32xf32, #tpu.memory_space<vmem>>, vector<8x8x32xf32>
    tpu.vector_store %arg8[%c0_29, %c0_30, %c0_31], %25 {strides = array<i32>} : memref<8x8x32xf32, #tpu.memory_space<vmem>>, vector<8x8x32xf32>,
    %cst_32 = arith.constant dense<0.000000e+00> : vector<64x32xf32>
    %27 = tpu.matmul %21, %3, %cst_32 {dimension_numbers = #tpu.dot_dimension_numbers<[1], [0], [0], [1], [0, 0, 1, 1], [], []>} : vector<64x32xbf16>, vector<32x32xbf16>, vector<64x32xf32> -> vector<64x32xf32>
    %28 = vector.broadcast %15 : vector<1x32xf32> to vector<64x32xf32>
    %29 = arith.addf %27, %28 : vector<64x32xf32>
    %30 = vector.shape_cast %29 : vector<64x32xf32> to vector<8x8x32xf32>
    %c0_33 = arith.constant 0 : index
    %c0_34 = arith.constant 0 : index
    %c0_35 = arith.constant 0 : index
    %31 = vector.load %arg9[%c0_33, %c0_34, %c0_35] : memref<8x8x32xf32, #tpu.memory_space<vmem>>, vector<8x8x32xf32>
    tpu.vector_store %arg9[%c0_33, %c0_34, %c0_35], %30 {strides = array<i32>} : memref<8x8x32xf32, #tpu.memory_space<vmem>>, vector<8x8x32xf32>,
    %cst_36 = arith.constant dense<0.000000e+00> : vector<64x32xf32>
    %32 = tpu.matmul %21, %5, %cst_36 {dimension_numbers = #tpu.dot_dimension_numbers<[1], [0], [0], [1], [0, 0, 1, 1], [], []>} : vector<64x32xbf16>, vector<32x32xbf16>, vector<64x32xf32> -> vector<64x32xf32>
    %33 = vector.broadcast %17 : vector<1x32xf32> to vector<64x32xf32>
    %34 = arith.addf %32, %33 : vector<64x32xf32>
    %35 = vector.shape_cast %34 : vector<64x32xf32> to vector<8x8x32xf32>
    %c0_37 = arith.constant 0 : index
    %c0_38 = arith.constant 0 : index
    %c0_39 = arith.constant 0 : index
    %36 = vector.load %arg10[%c0_37, %c0_38, %c0_39] : memref<8x8x32xf32, #tpu.memory_space<vmem>>, vector<8x8x32xf32>
    tpu.vector_store %arg10[%c0_37, %c0_38, %c0_39], %35 {strides = array<i32>} : memref<8x8x32xf32, #tpu.memory_space<vmem>>, vector<8x8x32xf32>,
    %c0_40 = arith.constant 0 : index
    %c0_41 = arith.constant 0 : index
    %c0_42 = arith.constant 0 : index
    %37 = vector.load %arg2[%c0_40, %c0_41, %c0_42] : memref<8x8x1xf32, #tpu.memory_space<vmem>>, vector<8x8x1xf32>
    %38 = vector.shape_cast %37 : vector<8x8x1xf32> to vector<8x8x1xf32>
    %39 = vector.broadcast %38 : vector<8x8x1xf32> to vector<8x8x32xf32>
    %c0_43 = arith.constant 0 : index
    %c0_44 = arith.constant 0 : index
    %c0_45 = arith.constant 0 : index
    %40 = vector.load %arg11[%c0_43, %c0_44, %c0_45] : memref<8x8x32xf32, #tpu.memory_space<vmem>>, vector<8x8x32xf32>
    tpu.vector_store %arg11[%c0_43, %c0_44, %c0_45], %39 {strides = array<i32>} : memref<8x8x32xf32, #tpu.memory_space<vmem>>, vector<8x8x32xf32>,
    %41 = vector.shape_cast %19 : vector<1x32xf32> to vector<1x32xf32>
    %42 = vector.broadcast %41 : vector<1x32xf32> to vector<8x32xf32>
    %c0_46 = arith.constant 0 : index
    %c0_47 = arith.constant 0 : index
    %43 = vector.load %arg3[%c0_46, %c0_47] : memref<8x32xf32, #tpu.memory_space<vmem>>, vector<8x32xf32>
    %44 = arith.truncf %43 : vector<8x32xf32> to vector<8x32xbf16>
    %cst_48 = arith.constant dense<0.000000e+00> : vector<8x32xf32>
    %45 = tpu.matmul %44, %7, %cst_48 {dimension_numbers = #tpu.dot_dimension_numbers<[1], [0], [0], [1], [0, 0, 1, 1], [], []>} : vector<8x32xbf16>, vector<32x32xbf16>, vector<8x32xf32> -> vector<8x32xf32>
    %cst_49 = arith.constant dense<0.000000e+00> : vector<8x32xf32>
    %46 = tpu.matmul %44, %9, %cst_49 {dimension_numbers = #tpu.dot_dimension_numbers<[1], [0], [0], [1], [0, 0, 1, 1], [], []>} : vector<8x32xbf16>, vector<32x32xbf16>, vector<8x32xf32> -> vector<8x32xf32>
    %cst_50 = arith.constant dense<0.000000e+00> : vector<8x32xf32>
    %47 = tpu.matmul %44, %11, %cst_50 {dimension_numbers = #tpu.dot_dimension_numbers<[1], [0], [0], [1], [0, 0, 1, 1], [], []>} : vector<8x32xbf16>, vector<32x32xbf16>, vector<8x32xf32> -> vector<8x32xf32>
    %c0_51 = arith.constant 0 : index
    %c0_52 = arith.constant 0 : index
    %c0_53 = arith.constant 0 : index
    %48 = vector.load %arg8[%c0_51, %c0_52, %c0_53] : memref<8x8x32xf32, #tpu.memory_space<vmem>>, vector<8x1x32xf32>
    %49 = vector.shape_cast %48 : vector<8x1x32xf32> to vector<8x32xf32>
    %50 = arith.addf %49, %45 : vector<8x32xf32>
    %51 = arith.negf %50 : vector<8x32xf32>
    %52 = math.exp %51 : vector<8x32xf32>
    %cst_54 = arith.constant 1.000000e+00 : f32
    %53 = vector.broadcast %cst_54 : f32 to vector<8x32xf32>
    %54 = arith.addf %53, %52 : vector<8x32xf32>
    %55 = arith.divf %53, %54 : vector<8x32xf32>
    %c0_55 = arith.constant 0 : index
    %c0_56 = arith.constant 0 : index
    %c0_57 = arith.constant 0 : index
    %56 = vector.load %arg9[%c0_55, %c0_56, %c0_57] : memref<8x8x32xf32, #tpu.memory_space<vmem>>, vector<8x1x32xf32>
    %57 = vector.shape_cast %56 : vector<8x1x32xf32> to vector<8x32xf32>
    %58 = arith.addf %57, %46 : vector<8x32xf32>
    %59 = arith.negf %58 : vector<8x32xf32>
    %60 = math.exp %59 : vector<8x32xf32>
    %cst_58 = arith.constant 1.000000e+00 : f32
    %61 = vector.broadcast %cst_58 : f32 to vector<8x32xf32>
    %62 = arith.addf %61, %60 : vector<8x32xf32>
    %63 = arith.divf %61, %62 : vector<8x32xf32>
    %c0_59 = arith.constant 0 : index
    %c0_60 = arith.constant 0 : index
    %c0_61 = arith.constant 0 : index
    %64 = vector.load %arg10[%c0_59, %c0_60, %c0_61] : memref<8x8x32xf32, #tpu.memory_space<vmem>>, vector<8x1x32xf32>
    %65 = vector.shape_cast %64 : vector<8x1x32xf32> to vector<8x32xf32>
    %66 = arith.addf %47, %42 : vector<8x32xf32>
    %67 = arith.mulf %55, %66 : vector<8x32xf32>
    %68 = arith.addf %65, %67 : vector<8x32xf32>
    %69 = math.tanh %68 : vector<8x32xf32>
    %70 = arith.subf %43, %69 : vector<8x32xf32>
    %71 = arith.mulf %63, %70 : vector<8x32xf32>
    %72 = arith.addf %69, %71 : vector<8x32xf32>
    %c0_62 = arith.constant 0 : index
    %c0_63 = arith.constant 0 : index
    %c0_64 = arith.constant 0 : index
    %73 = vector.load %arg11[%c0_62, %c0_63, %c0_64] : memref<8x8x32xf32, #tpu.memory_space<vmem>>, vector<8x1x32xf32>
    %74 = vector.shape_cast %73 : vector<8x1x32xf32> to vector<8x32xf32>
    %cst_65 = arith.constant 0.000000e+00 : f32
    %75 = vector.broadcast %cst_65 : f32 to vector<8x32xf32>
    %76 = arith.cmpf ogt, %74, %75 : vector<8x32xf32>
    %77 = arith.select %76, %72, %43 : vector<8x32xi1>, vector<8x32xf32>
    %78 = arith.truncf %77 : vector<8x32xf32> to vector<8x32xbf16>
    %cst_66 = arith.constant dense<0.000000e+00> : vector<8x32xf32>
    %79 = tpu.matmul %78, %7, %cst_66 {dimension_numbers = #tpu.dot_dimension_numbers<[1], [0], [0], [1], [0, 0, 1, 1], [], []>} : vector<8x32xbf16>, vector<32x32xbf16>, vector<8x32xf32> -> vector<8x32xf32>
    %cst_67 = arith.constant dense<0.000000e+00> : vector<8x32xf32>
    %80 = tpu.matmul %78, %9, %cst_67 {dimension_numbers = #tpu.dot_dimension_numbers<[1], [0], [0], [1], [0, 0, 1, 1], [], []>} : vector<8x32xbf16>, vector<32x32xbf16>, vector<8x32xf32> -> vector<8x32xf32>
    %cst_68 = arith.constant dense<0.000000e+00> : vector<8x32xf32>
    %81 = tpu.matmul %78, %11, %cst_68 {dimension_numbers = #tpu.dot_dimension_numbers<[1], [0], [0], [1], [0, 0, 1, 1], [], []>} : vector<8x32xbf16>, vector<32x32xbf16>, vector<8x32xf32> -> vector<8x32xf32>
    %c0_69 = arith.constant 0 : index
    %c1_70 = arith.constant 1 : index
    %c0_71 = arith.constant 0 : index
    %82 = vector.load %arg8[%c0_69, %c1_70, %c0_71] : memref<8x8x32xf32, #tpu.memory_space<vmem>>, vector<8x1x32xf32>
    %83 = vector.shape_cast %82 : vector<8x1x32xf32> to vector<8x32xf32>
    %84 = arith.addf %83, %79 : vector<8x32xf32>
    %85 = arith.negf %84 : vector<8x32xf32>
    %86 = math.exp %85 : vector<8x32xf32>
    %cst_72 = arith.constant 1.000000e+00 : f32
    %87 = vector.broadcast %cst_72 : f32 to vector<8x32xf32>
    %88 = arith.addf %87, %86 : vector<8x32xf32>
    %89 = arith.divf %87, %88 : vector<8x32xf32>
    %c0_73 = arith.constant 0 : index
    %c1_74 = arith.constant 1 : index
    %c0_75 = arith.constant 0 : index
    %90 = vector.load %arg9[%c0_73, %c1_74, %c0_75] : memref<8x8x32xf32, #tpu.memory_space<vmem>>, vector<8x1x32xf32>
    %91 = vector.shape_cast %90 : vector<8x1x32xf32> to vector<8x32xf32>
    %92 = arith.addf %91, %80 : vector<8x32xf32>
    %93 = arith.negf %92 : vector<8x32xf32>
    %94 = math.exp %93 : vector<8x32xf32>
    %cst_76 = arith.constant 1.000000e+00 : f32
    %95 = vector.broadcast %cst_76 : f32 to vector<8x32xf32>
    %96 = arith.addf %95, %94 : vector<8x32xf32>
    %97 = arith.divf %95, %96 : vector<8x32xf32>
    %c0_77 = arith.constant 0 : index
    %c1_78 = arith.constant 1 : index
    %c0_79 = arith.constant 0 : index
    %98 = vector.load %arg10[%c0_77, %c1_78, %c0_79] : memref<8x8x32xf32, #tpu.memory_space<vmem>>, vector<8x1x32xf32>
    %99 = vector.shape_cast %98 : vector<8x1x32xf32> to vector<8x32xf32>
    %100 = arith.addf %81, %42 : vector<8x32xf32>
    %101 = arith.mulf %89, %100 : vector<8x32xf32>
    %102 = arith.addf %99, %101 : vector<8x32xf32>
    %103 = math.tanh %102 : vector<8x32xf32>
    %104 = arith.subf %77, %103 : vector<8x32xf32>
    %105 = arith.mulf %97, %104 : vector<8x32xf32>
    %106 = arith.addf %103, %105 : vector<8x32xf32>
    %c0_80 = arith.constant 0 : index
    %c1_81 = arith.constant 1 : index
    %c0_82 = arith.constant 0 : index
    %107 = vector.load %arg11[%c0_80, %c1_81, %c0_82] : memref<8x8x32xf32, #tpu.memory_space<vmem>>, vector<8x1x32xf32>
    %108 = vector.shape_cast %107 : vector<8x1x32xf32> to vector<8x32xf32>
    %cst_83 = arith.constant 0.000000e+00 : f32
    %109 = vector.broadcast %cst_83 : f32 to vector<8x32xf32>
    %110 = arith.cmpf ogt, %108, %109 : vector<8x32xf32>
    %111 = arith.select %110, %106, %77 : vector<8x32xi1>, vector<8x32xf32>
    %112 = arith.truncf %111 : vector<8x32xf32> to vector<8x32xbf16>
    %cst_84 = arith.constant dense<0.000000e+00> : vector<8x32xf32>
    %113 = tpu.matmul %112, %7, %cst_84 {dimension_numbers = #tpu.dot_dimension_numbers<[1], [0], [0], [1], [0, 0, 1, 1], [], []>} : vector<8x32xbf16>, vector<32x32xbf16>, vector<8x32xf32> -> vector<8x32xf32>
    %cst_85 = arith.constant dense<0.000000e+00> : vector<8x32xf32>
    %114 = tpu.matmul %112, %9, %cst_85 {dimension_numbers = #tpu.dot_dimension_numbers<[1], [0], [0], [1], [0, 0, 1, 1], [], []>} : vector<8x32xbf16>, vector<32x32xbf16>, vector<8x32xf32> -> vector<8x32xf32>
    %cst_86 = arith.constant dense<0.000000e+00> : vector<8x32xf32>
    %115 = tpu.matmul %112, %11, %cst_86 {dimension_numbers = #tpu.dot_dimension_numbers<[1], [0], [0], [1], [0, 0, 1, 1], [], []>} : vector<8x32xbf16>, vector<32x32xbf16>, vector<8x32xf32> -> vector<8x32xf32>
    %c0_87 = arith.constant 0 : index
    %c2_88 = arith.constant 2 : index
    %c0_89 = arith.constant 0 : index
    %116 = vector.load %arg8[%c0_87, %c2_88, %c0_89] : memref<8x8x32xf32, #tpu.memory_space<vmem>>, vector<8x1x32xf32>
    %117 = vector.shape_cast %116 : vector<8x1x32xf32> to vector<8x32xf32>
    %118 = arith.addf %117, %113 : vector<8x32xf32>
    %119 = arith.negf %118 : vector<8x32xf32>
    %120 = math.exp %119 : vector<8x32xf32>
    %cst_90 = arith.constant 1.000000e+00 : f32
    %121 = vector.broadcast %cst_90 : f32 to vector<8x32xf32>
    %122 = arith.addf %121, %120 : vector<8x32xf32>
    %123 = arith.divf %121, %122 : vector<8x32xf32>
    %c0_91 = arith.constant 0 : index
    %c2_92 = arith.constant 2 : index
    %c0_93 = arith.constant 0 : index
    %124 = vector.load %arg9[%c0_91, %c2_92, %c0_93] : memref<8x8x32xf32, #tpu.memory_space<vmem>>, vector<8x1x32xf32>
    %125 = vector.shape_cast %124 : vector<8x1x32xf32> to vector<8x32xf32>
    %126 = arith.addf %125, %114 : vector<8x32xf32>
    %127 = arith.negf %126 : vector<8x32xf32>
    %128 = math.exp %127 : vector<8x32xf32>
    %cst_94 = arith.constant 1.000000e+00 : f32
    %129 = vector.broadcast %cst_94 : f32 to vector<8x32xf32>
    %130 = arith.addf %129, %128 : vector<8x32xf32>
    %131 = arith.divf %129, %130 : vector<8x32xf32>
    %c0_95 = arith.constant 0 : index
    %c2_96 = arith.constant 2 : index
    %c0_97 = arith.constant 0 : index
    %132 = vector.load %arg10[%c0_95, %c2_96, %c0_97] : memref<8x8x32xf32, #tpu.memory_space<vmem>>, vector<8x1x32xf32>
    %133 = vector.shape_cast %132 : vector<8x1x32xf32> to vector<8x32xf32>
    %134 = arith.addf %115, %42 : vector<8x32xf32>
    %135 = arith.mulf %123, %134 : vector<8x32xf32>
    %136 = arith.addf %133, %135 : vector<8x32xf32>
    %137 = math.tanh %136 : vector<8x32xf32>
    %138 = arith.subf %111, %137 : vector<8x32xf32>
    %139 = arith.mulf %131, %138 : vector<8x32xf32>
    %140 = arith.addf %137, %139 : vector<8x32xf32>
    %c0_98 = arith.constant 0 : index
    %c2_99 = arith.constant 2 : index
    %c0_100 = arith.constant 0 : index
    %141 = vector.load %arg11[%c0_98, %c2_99, %c0_100] : memref<8x8x32xf32, #tpu.memory_space<vmem>>, vector<8x1x32xf32>
    %142 = vector.shape_cast %141 : vector<8x1x32xf32> to vector<8x32xf32>
    %cst_101 = arith.constant 0.000000e+00 : f32
    %143 = vector.broadcast %cst_101 : f32 to vector<8x32xf32>
    %144 = arith.cmpf ogt, %142, %143 : vector<8x32xf32>
    %145 = arith.select %144, %140, %111 : vector<8x32xi1>, vector<8x32xf32>
    %146 = arith.truncf %145 : vector<8x32xf32> to vector<8x32xbf16>
    %cst_102 = arith.constant dense<0.000000e+00> : vector<8x32xf32>
    %147 = tpu.matmul %146, %7, %cst_102 {dimension_numbers = #tpu.dot_dimension_numbers<[1], [0], [0], [1], [0, 0, 1, 1], [], []>} : vector<8x32xbf16>, vector<32x32xbf16>, vector<8x32xf32> -> vector<8x32xf32>
    %cst_103 = arith.constant dense<0.000000e+00> : vector<8x32xf32>
    %148 = tpu.matmul %146, %9, %cst_103 {dimension_numbers = #tpu.dot_dimension_numbers<[1], [0], [0], [1], [0, 0, 1, 1], [], []>} : vector<8x32xbf16>, vector<32x32xbf16>, vector<8x32xf32> -> vector<8x32xf32>
    %cst_104 = arith.constant dense<0.000000e+00> : vector<8x32xf32>
    %149 = tpu.matmul %146, %11, %cst_104 {dimension_numbers = #tpu.dot_dimension_numbers<[1], [0], [0], [1], [0, 0, 1, 1], [], []>} : vector<8x32xbf16>, vector<32x32xbf16>, vector<8x32xf32> -> vector<8x32xf32>
    %c0_105 = arith.constant 0 : index
    %c3_106 = arith.constant 3 : index
    %c0_107 = arith.constant 0 : index
    %150 = vector.load %arg8[%c0_105, %c3_106, %c0_107] : memref<8x8x32xf32, #tpu.memory_space<vmem>>, vector<8x1x32xf32>
    %151 = vector.shape_cast %150 : vector<8x1x32xf32> to vector<8x32xf32>
    %152 = arith.addf %151, %147 : vector<8x32xf32>
    %153 = arith.negf %152 : vector<8x32xf32>
    %154 = math.exp %153 : vector<8x32xf32>
    %cst_108 = arith.constant 1.000000e+00 : f32
    %155 = vector.broadcast %cst_108 : f32 to vector<8x32xf32>
    %156 = arith.addf %155, %154 : vector<8x32xf32>
    %157 = arith.divf %155, %156 : vector<8x32xf32>
    %c0_109 = arith.constant 0 : index
    %c3_110 = arith.constant 3 : index
    %c0_111 = arith.constant 0 : index
    %158 = vector.load %arg9[%c0_109, %c3_110, %c0_111] : memref<8x8x32xf32, #tpu.memory_space<vmem>>, vector<8x1x32xf32>
    %159 = vector.shape_cast %158 : vector<8x1x32xf32> to vector<8x32xf32>
    %160 = arith.addf %159, %148 : vector<8x32xf32>
    %161 = arith.negf %160 : vector<8x32xf32>
    %162 = math.exp %161 : vector<8x32xf32>
    %cst_112 = arith.constant 1.000000e+00 : f32
    %163 = vector.broadcast %cst_112 : f32 to vector<8x32xf32>
    %164 = arith.addf %163, %162 : vector<8x32xf32>
    %165 = arith.divf %163, %164 : vector<8x32xf32>
    %c0_113 = arith.constant 0 : index
    %c3_114 = arith.constant 3 : index
    %c0_115 = arith.constant 0 : index
    %166 = vector.load %arg10[%c0_113, %c3_114, %c0_115] : memref<8x8x32xf32, #tpu.memory_space<vmem>>, vector<8x1x32xf32>
    %167 = vector.shape_cast %166 : vector<8x1x32xf32> to vector<8x32xf32>
    %168 = arith.addf %149, %42 : vector<8x32xf32>
    %169 = arith.mulf %157, %168 : vector<8x32xf32>
    %170 = arith.addf %167, %169 : vector<8x32xf32>
    %171 = math.tanh %170 : vector<8x32xf32>
    %172 = arith.subf %145, %171 : vector<8x32xf32>
    %173 = arith.mulf %165, %172 : vector<8x32xf32>
    %174 = arith.addf %171, %173 : vector<8x32xf32>
    %c0_116 = arith.constant 0 : index
    %c3_117 = arith.constant 3 : index
    %c0_118 = arith.constant 0 : index
    %175 = vector.load %arg11[%c0_116, %c3_117, %c0_118] : memref<8x8x32xf32, #tpu.memory_space<vmem>>, vector<8x1x32xf32>
    %176 = vector.shape_cast %175 : vector<8x1x32xf32> to vector<8x32xf32>
    %cst_119 = arith.constant 0.000000e+00 : f32
    %177 = vector.broadcast %cst_119 : f32 to vector<8x32xf32>
    %178 = arith.cmpf ogt, %176, %177 : vector<8x32xf32>
    %179 = arith.select %178, %174, %145 : vector<8x32xi1>, vector<8x32xf32>
    %180 = arith.truncf %179 : vector<8x32xf32> to vector<8x32xbf16>
    %cst_120 = arith.constant dense<0.000000e+00> : vector<8x32xf32>
    %181 = tpu.matmul %180, %7, %cst_120 {dimension_numbers = #tpu.dot_dimension_numbers<[1], [0], [0], [1], [0, 0, 1, 1], [], []>} : vector<8x32xbf16>, vector<32x32xbf16>, vector<8x32xf32> -> vector<8x32xf32>
    %cst_121 = arith.constant dense<0.000000e+00> : vector<8x32xf32>
    %182 = tpu.matmul %180, %9, %cst_121 {dimension_numbers = #tpu.dot_dimension_numbers<[1], [0], [0], [1], [0, 0, 1, 1], [], []>} : vector<8x32xbf16>, vector<32x32xbf16>, vector<8x32xf32> -> vector<8x32xf32>
    %cst_122 = arith.constant dense<0.000000e+00> : vector<8x32xf32>
    %183 = tpu.matmul %180, %11, %cst_122 {dimension_numbers = #tpu.dot_dimension_numbers<[1], [0], [0], [1], [0, 0, 1, 1], [], []>} : vector<8x32xbf16>, vector<32x32xbf16>, vector<8x32xf32> -> vector<8x32xf32>
    %c0_123 = arith.constant 0 : index
    %c4 = arith.constant 4 : index
    %c0_124 = arith.constant 0 : index
    %184 = vector.load %arg8[%c0_123, %c4, %c0_124] : memref<8x8x32xf32, #tpu.memory_space<vmem>>, vector<8x1x32xf32>
    %185 = vector.shape_cast %184 : vector<8x1x32xf32> to vector<8x32xf32>
    %186 = arith.addf %185, %181 : vector<8x32xf32>
    %187 = arith.negf %186 : vector<8x32xf32>
    %188 = math.exp %187 : vector<8x32xf32>
    %cst_125 = arith.constant 1.000000e+00 : f32
    %189 = vector.broadcast %cst_125 : f32 to vector<8x32xf32>
    %190 = arith.addf %189, %188 : vector<8x32xf32>
    %191 = arith.divf %189, %190 : vector<8x32xf32>
    %c0_126 = arith.constant 0 : index
    %c4_127 = arith.constant 4 : index
    %c0_128 = arith.constant 0 : index
    %192 = vector.load %arg9[%c0_126, %c4_127, %c0_128] : memref<8x8x32xf32, #tpu.memory_space<vmem>>, vector<8x1x32xf32>
    %193 = vector.shape_cast %192 : vector<8x1x32xf32> to vector<8x32xf32>
    %194 = arith.addf %193, %182 : vector<8x32xf32>
    %195 = arith.negf %194 : vector<8x32xf32>
    %196 = math.exp %195 : vector<8x32xf32>
    %cst_129 = arith.constant 1.000000e+00 : f32
    %197 = vector.broadcast %cst_129 : f32 to vector<8x32xf32>
    %198 = arith.addf %197, %196 : vector<8x32xf32>
    %199 = arith.divf %197, %198 : vector<8x32xf32>
    %c0_130 = arith.constant 0 : index
    %c4_131 = arith.constant 4 : index
    %c0_132 = arith.constant 0 : index
    %200 = vector.load %arg10[%c0_130, %c4_131, %c0_132] : memref<8x8x32xf32, #tpu.memory_space<vmem>>, vector<8x1x32xf32>
    %201 = vector.shape_cast %200 : vector<8x1x32xf32> to vector<8x32xf32>
    %202 = arith.addf %183, %42 : vector<8x32xf32>
    %203 = arith.mulf %191, %202 : vector<8x32xf32>
    %204 = arith.addf %201, %203 : vector<8x32xf32>
    %205 = math.tanh %204 : vector<8x32xf32>
    %206 = arith.subf %179, %205 : vector<8x32xf32>
    %207 = arith.mulf %199, %206 : vector<8x32xf32>
    %208 = arith.addf %205, %207 : vector<8x32xf32>
    %c0_133 = arith.constant 0 : index
    %c4_134 = arith.constant 4 : index
    %c0_135 = arith.constant 0 : index
    %209 = vector.load %arg11[%c0_133, %c4_134, %c0_135] : memref<8x8x32xf32, #tpu.memory_space<vmem>>, vector<8x1x32xf32>
    %210 = vector.shape_cast %209 : vector<8x1x32xf32> to vector<8x32xf32>
    %cst_136 = arith.constant 0.000000e+00 : f32
    %211 = vector.broadcast %cst_136 : f32 to vector<8x32xf32>
    %212 = arith.cmpf ogt, %210, %211 : vector<8x32xf32>
    %213 = arith.select %212, %208, %179 : vector<8x32xi1>, vector<8x32xf32>
    %214 = arith.truncf %213 : vector<8x32xf32> to vector<8x32xbf16>
    %cst_137 = arith.constant dense<0.000000e+00> : vector<8x32xf32>
    %215 = tpu.matmul %214, %7, %cst_137 {dimension_numbers = #tpu.dot_dimension_numbers<[1], [0], [0], [1], [0, 0, 1, 1], [], []>} : vector<8x32xbf16>, vector<32x32xbf16>, vector<8x32xf32> -> vector<8x32xf32>
    %cst_138 = arith.constant dense<0.000000e+00> : vector<8x32xf32>
    %216 = tpu.matmul %214, %9, %cst_138 {dimension_numbers = #tpu.dot_dimension_numbers<[1], [0], [0], [1], [0, 0, 1, 1], [], []>} : vector<8x32xbf16>, vector<32x32xbf16>, vector<8x32xf32> -> vector<8x32xf32>
    %cst_139 = arith.constant dense<0.000000e+00> : vector<8x32xf32>
    %217 = tpu.matmul %214, %11, %cst_139 {dimension_numbers = #tpu.dot_dimension_numbers<[1], [0], [0], [1], [0, 0, 1, 1], [], []>} : vector<8x32xbf16>, vector<32x32xbf16>, vector<8x32xf32> -> vector<8x32xf32>
    %c0_140 = arith.constant 0 : index
    %c5 = arith.constant 5 : index
    %c0_141 = arith.constant 0 : index
    %218 = vector.load %arg8[%c0_140, %c5, %c0_141] : memref<8x8x32xf32, #tpu.memory_space<vmem>>, vector<8x1x32xf32>
    %219 = vector.shape_cast %218 : vector<8x1x32xf32> to vector<8x32xf32>
    %220 = arith.addf %219, %215 : vector<8x32xf32>
    %221 = arith.negf %220 : vector<8x32xf32>
    %222 = math.exp %221 : vector<8x32xf32>
    %cst_142 = arith.constant 1.000000e+00 : f32
    %223 = vector.broadcast %cst_142 : f32 to vector<8x32xf32>
    %224 = arith.addf %223, %222 : vector<8x32xf32>
    %225 = arith.divf %223, %224 : vector<8x32xf32>
    %c0_143 = arith.constant 0 : index
    %c5_144 = arith.constant 5 : index
    %c0_145 = arith.constant 0 : index
    %226 = vector.load %arg9[%c0_143, %c5_144, %c0_145] : memref<8x8x32xf32, #tpu.memory_space<vmem>>, vector<8x1x32xf32>
    %227 = vector.shape_cast %226 : vector<8x1x32xf32> to vector<8x32xf32>
    %228 = arith.addf %227, %216 : vector<8x32xf32>
    %229 = arith.negf %228 : vector<8x32xf32>
    %230 = math.exp %229 : vector<8x32xf32>
    %cst_146 = arith.constant 1.000000e+00 : f32
    %231 = vector.broadcast %cst_146 : f32 to vector<8x32xf32>
    %232 = arith.addf %231, %230 : vector<8x32xf32>
    %233 = arith.divf %231, %232 : vector<8x32xf32>
    %c0_147 = arith.constant 0 : index
    %c5_148 = arith.constant 5 : index
    %c0_149 = arith.constant 0 : index
    %234 = vector.load %arg10[%c0_147, %c5_148, %c0_149] : memref<8x8x32xf32, #tpu.memory_space<vmem>>, vector<8x1x32xf32>
    %235 = vector.shape_cast %234 : vector<8x1x32xf32> to vector<8x32xf32>
    %236 = arith.addf %217, %42 : vector<8x32xf32>
    %237 = arith.mulf %225, %236 : vector<8x32xf32>
    %238 = arith.addf %235, %237 : vector<8x32xf32>
    %239 = math.tanh %238 : vector<8x32xf32>
    %240 = arith.subf %213, %239 : vector<8x32xf32>
    %241 = arith.mulf %233, %240 : vector<8x32xf32>
    %242 = arith.addf %239, %241 : vector<8x32xf32>
    %c0_150 = arith.constant 0 : index
    %c5_151 = arith.constant 5 : index
    %c0_152 = arith.constant 0 : index
    %243 = vector.load %arg11[%c0_150, %c5_151, %c0_152] : memref<8x8x32xf32, #tpu.memory_space<vmem>>, vector<8x1x32xf32>
    %244 = vector.shape_cast %243 : vector<8x1x32xf32> to vector<8x32xf32>
    %cst_153 = arith.constant 0.000000e+00 : f32
    %245 = vector.broadcast %cst_153 : f32 to vector<8x32xf32>
    %246 = arith.cmpf ogt, %244, %245 : vector<8x32xf32>
    %247 = arith.select %246, %242, %213 : vector<8x32xi1>, vector<8x32xf32>
    %248 = arith.truncf %247 : vector<8x32xf32> to vector<8x32xbf16>
    %cst_154 = arith.constant dense<0.000000e+00> : vector<8x32xf32>
    %249 = tpu.matmul %248, %7, %cst_154 {dimension_numbers = #tpu.dot_dimension_numbers<[1], [0], [0], [1], [0, 0, 1, 1], [], []>} : vector<8x32xbf16>, vector<32x32xbf16>, vector<8x32xf32> -> vector<8x32xf32>
    %cst_155 = arith.constant dense<0.000000e+00> : vector<8x32xf32>
    %250 = tpu.matmul %248, %9, %cst_155 {dimension_numbers = #tpu.dot_dimension_numbers<[1], [0], [0], [1], [0, 0, 1, 1], [], []>} : vector<8x32xbf16>, vector<32x32xbf16>, vector<8x32xf32> -> vector<8x32xf32>
    %cst_156 = arith.constant dense<0.000000e+00> : vector<8x32xf32>
    %251 = tpu.matmul %248, %11, %cst_156 {dimension_numbers = #tpu.dot_dimension_numbers<[1], [0], [0], [1], [0, 0, 1, 1], [], []>} : vector<8x32xbf16>, vector<32x32xbf16>, vector<8x32xf32> -> vector<8x32xf32>
    %c0_157 = arith.constant 0 : index
    %c6 = arith.constant 6 : index
    %c0_158 = arith.constant 0 : index
    %252 = vector.load %arg8[%c0_157, %c6, %c0_158] : memref<8x8x32xf32, #tpu.memory_space<vmem>>, vector<8x1x32xf32>
    %253 = vector.shape_cast %252 : vector<8x1x32xf32> to vector<8x32xf32>
    %254 = arith.addf %253, %249 : vector<8x32xf32>
    %255 = arith.negf %254 : vector<8x32xf32>
    %256 = math.exp %255 : vector<8x32xf32>
    %cst_159 = arith.constant 1.000000e+00 : f32
    %257 = vector.broadcast %cst_159 : f32 to vector<8x32xf32>
    %258 = arith.addf %257, %256 : vector<8x32xf32>
    %259 = arith.divf %257, %258 : vector<8x32xf32>
    %c0_160 = arith.constant 0 : index
    %c6_161 = arith.constant 6 : index
    %c0_162 = arith.constant 0 : index
    %260 = vector.load %arg9[%c0_160, %c6_161, %c0_162] : memref<8x8x32xf32, #tpu.memory_space<vmem>>, vector<8x1x32xf32>
    %261 = vector.shape_cast %260 : vector<8x1x32xf32> to vector<8x32xf32>
    %262 = arith.addf %261, %250 : vector<8x32xf32>
    %263 = arith.negf %262 : vector<8x32xf32>
    %264 = math.exp %263 : vector<8x32xf32>
    %cst_163 = arith.constant 1.000000e+00 : f32
    %265 = vector.broadcast %cst_163 : f32 to vector<8x32xf32>
    %266 = arith.addf %265, %264 : vector<8x32xf32>
    %267 = arith.divf %265, %266 : vector<8x32xf32>
    %c0_164 = arith.constant 0 : index
    %c6_165 = arith.constant 6 : index
    %c0_166 = arith.constant 0 : index
    %268 = vector.load %arg10[%c0_164, %c6_165, %c0_166] : memref<8x8x32xf32, #tpu.memory_space<vmem>>, vector<8x1x32xf32>
    %269 = vector.shape_cast %268 : vector<8x1x32xf32> to vector<8x32xf32>
    %270 = arith.addf %251, %42 : vector<8x32xf32>
    %271 = arith.mulf %259, %270 : vector<8x32xf32>
    %272 = arith.addf %269, %271 : vector<8x32xf32>
    %273 = math.tanh %272 : vector<8x32xf32>
    %274 = arith.subf %247, %273 : vector<8x32xf32>
    %275 = arith.mulf %267, %274 : vector<8x32xf32>
    %276 = arith.addf %273, %275 : vector<8x32xf32>
    %c0_167 = arith.constant 0 : index
    %c6_168 = arith.constant 6 : index
    %c0_169 = arith.constant 0 : index
    %277 = vector.load %arg11[%c0_167, %c6_168, %c0_169] : memref<8x8x32xf32, #tpu.memory_space<vmem>>, vector<8x1x32xf32>
    %278 = vector.shape_cast %277 : vector<8x1x32xf32> to vector<8x32xf32>
    %cst_170 = arith.constant 0.000000e+00 : f32
    %279 = vector.broadcast %cst_170 : f32 to vector<8x32xf32>
    %280 = arith.cmpf ogt, %278, %279 : vector<8x32xf32>
    %281 = arith.select %280, %276, %247 : vector<8x32xi1>, vector<8x32xf32>
    %282 = arith.truncf %281 : vector<8x32xf32> to vector<8x32xbf16>
    %cst_171 = arith.constant dense<0.000000e+00> : vector<8x32xf32>
    %283 = tpu.matmul %282, %7, %cst_171 {dimension_numbers = #tpu.dot_dimension_numbers<[1], [0], [0], [1], [0, 0, 1, 1], [], []>} : vector<8x32xbf16>, vector<32x32xbf16>, vector<8x32xf32> -> vector<8x32xf32>
    %cst_172 = arith.constant dense<0.000000e+00> : vector<8x32xf32>
    %284 = tpu.matmul %282, %9, %cst_172 {dimension_numbers = #tpu.dot_dimension_numbers<[1], [0], [0], [1], [0, 0, 1, 1], [], []>} : vector<8x32xbf16>, vector<32x32xbf16>, vector<8x32xf32> -> vector<8x32xf32>
    %cst_173 = arith.constant dense<0.000000e+00> : vector<8x32xf32>
    %285 = tpu.matmul %282, %11, %cst_173 {dimension_numbers = #tpu.dot_dimension_numbers<[1], [0], [0], [1], [0, 0, 1, 1], [], []>} : vector<8x32xbf16>, vector<32x32xbf16>, vector<8x32xf32> -> vector<8x32xf32>
    %c0_174 = arith.constant 0 : index
    %c7 = arith.constant 7 : index
    %c0_175 = arith.constant 0 : index
    %286 = vector.load %arg8[%c0_174, %c7, %c0_175] : memref<8x8x32xf32, #tpu.memory_space<vmem>>, vector<8x1x32xf32>
    %287 = vector.shape_cast %286 : vector<8x1x32xf32> to vector<8x32xf32>
    %288 = arith.addf %287, %283 : vector<8x32xf32>
    %289 = arith.negf %288 : vector<8x32xf32>
    %290 = math.exp %289 : vector<8x32xf32>
    %cst_176 = arith.constant 1.000000e+00 : f32
    %291 = vector.broadcast %cst_176 : f32 to vector<8x32xf32>
    %292 = arith.addf %291, %290 : vector<8x32xf32>
    %293 = arith.divf %291, %292 : vector<8x32xf32>
    %c0_177 = arith.constant 0 : index
    %c7_178 = arith.constant 7 : index
    %c0_179 = arith.constant 0 : index
    %294 = vector.load %arg9[%c0_177, %c7_178, %c0_179] : memref<8x8x32xf32, #tpu.memory_space<vmem>>, vector<8x1x32xf32>
    %295 = vector.shape_cast %294 : vector<8x1x32xf32> to vector<8x32xf32>
    %296 = arith.addf %295, %284 : vector<8x32xf32>
    %297 = arith.negf %296 : vector<8x32xf32>
    %298 = math.exp %297 : vector<8x32xf32>
    %cst_180 = arith.constant 1.000000e+00 : f32
    %299 = vector.broadcast %cst_180 : f32 to vector<8x32xf32>
    %300 = arith.addf %299, %298 : vector<8x32xf32>
    %301 = arith.divf %299, %300 : vector<8x32xf32>
    %c0_181 = arith.constant 0 : index
    %c7_182 = arith.constant 7 : index
    %c0_183 = arith.constant 0 : index
    %302 = vector.load %arg10[%c0_181, %c7_182, %c0_183] : memref<8x8x32xf32, #tpu.memory_space<vmem>>, vector<8x1x32xf32>
    %303 = vector.shape_cast %302 : vector<8x1x32xf32> to vector<8x32xf32>
    %304 = arith.addf %285, %42 : vector<8x32xf32>
    %305 = arith.mulf %293, %304 : vector<8x32xf32>
    %306 = arith.addf %303, %305 : vector<8x32xf32>
    %307 = math.tanh %306 : vector<8x32xf32>
    %308 = arith.subf %281, %307 : vector<8x32xf32>
    %309 = arith.mulf %301, %308 : vector<8x32xf32>
    %310 = arith.addf %307, %309 : vector<8x32xf32>
    %c0_184 = arith.constant 0 : index
    %c7_185 = arith.constant 7 : index
    %c0_186 = arith.constant 0 : index
    %311 = vector.load %arg11[%c0_184, %c7_185, %c0_186] : memref<8x8x32xf32, #tpu.memory_space<vmem>>, vector<8x1x32xf32>
    %312 = vector.shape_cast %311 : vector<8x1x32xf32> to vector<8x32xf32>
    %cst_187 = arith.constant 0.000000e+00 : f32
    %313 = vector.broadcast %cst_187 : f32 to vector<8x32xf32>
    %314 = arith.cmpf ogt, %312, %313 : vector<8x32xf32>
    %315 = arith.select %314, %310, %281 : vector<8x32xi1>, vector<8x32xf32>
    %c0_188 = arith.constant 0 : index
    %c0_189 = arith.constant 0 : index
    %316 = vector.load %arg7[%c0_188, %c0_189] : memref<8x32xf32, #tpu.memory_space<vmem>>, vector<8x32xf32>
    tpu.vector_store %arg7[%c0_188, %c0_189], %315 {strides = array<i32>} : memref<8x32xf32, #tpu.memory_space<vmem>>, vector<8x32xf32>,
    return
  }
  func.func @transform_0(%arg0: i32) -> (i32, i32, i32) {
    %c0_i32 = arith.constant 0 : i32
    %c0_i32_0 = arith.constant 0 : i32
    %c0_i32_1 = arith.constant 0 : i32
    return %arg0, %c0_i32, %c0_i32_0 : i32, i32, i32
  }
  func.func @transform_1(%arg0: i32) -> (i32, i32, i32) {
    %c0_i32 = arith.constant 0 : i32
    %c0_i32_0 = arith.constant 0 : i32
    %c0_i32_1 = arith.constant 0 : i32
    return %arg0, %c0_i32, %c0_i32_0 : i32, i32, i32
  }
  func.func @transform_2(%arg0: i32) -> (i32, i32) {
    %c0_i32 = arith.constant 0 : i32
    %c0_i32_0 = arith.constant 0 : i32
    return %arg0, %c0_i32 : i32, i32
  }
  func.func @transform_3(%arg0: i32) -> (i32, i32, i32) {
    %c0_i32 = arith.constant 0 : i32
    %c0_i32_0 = arith.constant 0 : i32
    %c0_i32_1 = arith.constant 0 : i32
    %c0_i32_2 = arith.constant 0 : i32
    return %c0_i32, %c0_i32_0, %c0_i32_1 : i32, i32, i32
  }
  func.func @transform_4(%arg0: i32) -> (i32, i32, i32) {
    %c0_i32 = arith.constant 0 : i32
    %c0_i32_0 = arith.constant 0 : i32
    %c0_i32_1 = arith.constant 0 : i32
    %c0_i32_2 = arith.constant 0 : i32
    return %c0_i32, %c0_i32_0, %c0_i32_1 : i32, i32, i32
  }
  func.func @transform_5(%arg0: i32) -> (i32, i32, i32) {
    %c0_i32 = arith.constant 0 : i32
    %c0_i32_0 = arith.constant 0 : i32
    %c0_i32_1 = arith.constant 0 : i32
    %c0_i32_2 = arith.constant 0 : i32
    return %c0_i32, %c0_i32_0, %c0_i32_1 : i32, i32, i32
  }
  func.func @transform_6(%arg0: i32) -> (i32, i32) {
    %c0_i32 = arith.constant 0 : i32
    %c0_i32_0 = arith.constant 0 : i32
    return %arg0, %c0_i32 : i32, i32
  }
}

</mosaic_0001>

<llo_original>
// kernel: _lambda_.1
$region0: #{_lambda_.1}
  #allocation0 [shape = 'u32[]', space=smem, size = 0x4, offset = 0x4, fixed_abs, tag = 'smem constant byte address 0x4 - core index']
  #allocation1 [shape = 'u32[144,128]{1,0:T(1,128)}', space=vmem, size = 0x12000, scoped, tag = 'internal scratch']
  #allocation2 [shape = 'f32[8,8,32]{2,1,0:T(8,128)}', space=vmem, size = 0x8000, scoped, tag = 'scratch operand']
  #allocation3 [shape = 'f32[8,8,32]{2,1,0:T(8,128)}', space=vmem, size = 0x8000, scoped, tag = 'scratch operand']
  #allocation4 [shape = 'f32[8,8,32]{2,1,0:T(8,128)}', space=vmem, size = 0x8000, scoped, tag = 'scratch operand']
  #allocation5 [shape = 'f32[8,8,32]{2,1,0:T(8,128)}', space=vmem, size = 0x8000, scoped, tag = 'scratch operand']
  %s0 = inlined_call_operand.vmem [shape: bf16[16,8,32], index: 0, kind: input, shape index: {}]
  %s1 = inlined_call_operand.vmem [shape: f32[16,8,1], index: 1, kind: input, shape index: {}]
  %s2 = inlined_call_operand.vmem [shape: f32[16,32], index: 2, kind: input, shape index: {}]
  %s3 = inlined_call_operand.vmem [shape: bf16[3,32,32], index: 3, kind: input, shape index: {}]
  %s4 = inlined_call_operand.vmem [shape: bf16[3,32,32], index: 4, kind: input, shape index: {}]
  %s5 = inlined_call_operand.vmem [shape: f32[4,1,32], index: 5, kind: input, shape index: {}]
  %s6 = inlined_call_operand.hbm [shape: f32[16,32], index: 6, kind: output, shape index: {}]
  %s7 = sld [smem:[#allocation0]]
  $region57: #{_lambda_.1} parent=0
    _
  %s9 = ssub.s32 1, %s7
  %s10 = scalar_select 0, %s9, %s7
  $region1: #{_lambda_.1} parent=0
    #allocation6 [shape = 'u8[8192]{0}', space=vmem, size = 0x2000, scoped, tag = 'output window, operand 0']
    #allocation7 [shape = 's32[2]{0}', space=sflag, size = 0x8, scoped, tag = 'scoped memory for _lambda_.1']
    %11 = vsyncpa [#allocation7], 0
    %s12 = scalar_lea.sflag [#allocation7], 1
    %13 = vsyncpa %s12, 0
    loop: start=0, step=1, limit=4
    $region2: #{_lambda_.1} parent=1 // loop_pre_header
      _
    $region3: #{_lambda_.1} parent=1 // loop_header
      %s15 = sphi 0, %s19
      %p16 = scmp.ge.s32.totalorder %s15, 4
      %s25 = sphi 0, %s27
      %s28 = sphi 0, %s25
      %s29 = sphi 0, %s28
      %s45 = sphi 0, %s29
      %s51 = sphi 0, %s53
      %s54 = sphi 0, %s51
      %s55 = sphi 0, %s54
      %s71 = sphi 0, %s55
      %s77 = sphi 0, %s79
      %s80 = sphi 0, %s77
      %s81 = sphi 0, %s80
      %s97 = sphi 0, %s81
      %s101 = sphi 0, %s101
      %s103 = sphi 0, %s101
      %s104 = sphi 0, %s103
      %s118 = sphi 0, %s104
      %s122 = sphi 0, %s122
      %s124 = sphi 0, %s122
      %s125 = sphi 0, %s124
      %s139 = sphi 0, %s125
      %s143 = sphi 0, %s143
      %s145 = sphi 0, %s143
      %s146 = sphi 0, %s145
      %s160 = sphi 0, %s146
      %s166 = sphi 0, %s168
      %s169 = sphi 0, %s166
      %s170 = sphi 0, %s169
      %s186 = sphi 0, %s170
    $region4: #{_lambda_.1} parent=1 // loop_header_branch
      %18 = sbr.rel (%p16) target = $region8
    $region5: #{_lambda_.1} parent=1 // loop_body
      %s20 = ssub.s32 %s15, 1
      %s21 = ssub.s32 %s15, 2
      %s22 = sadd.s32 %s15, 1
      %s23 = ssub.s32 %s15, %s22
      %p24 = scmp.eq.s32.totalorder %s23, 0
      %s26 = sadd.s32 %s25, 1
      %s27 = scalar_select %p24, %s25, %s26
      %p30 = pneg %p24
      %p31 = scmp.eq.s32.totalorder %s15, 1
      %p32 = por %p30, %p31
      %p33 = scmp.ne.s32.totalorder %s25, %s28
      %p34 = scmp.eq.s32.totalorder %s15, 0
      %p35 = por %p33, %p34
      %p36 = scmp.ne.s32.totalorder %s25, %s28
      %p37 = scmp.eq.s32.totalorder %s20, 1
      %p38 = por %p36, %p37
      %p39 = scmp.ne.s32.totalorder %s28, %s29
      %p40 = scmp.eq.s32.totalorder %s20, 0
      %p41 = por %p39, %p40
      %p42 = scmp.ne.s32.totalorder %s28, %s29
      %p43 = scmp.eq.s32.totalorder %s21, 1
      %p44 = por %p42, %p43
      %p46 = scmp.ne.s32.totalorder %s29, %s45
      %p47 = scmp.eq.s32.totalorder %s21, 0
      %p48 = por %p46, %p47
      %s49 = ssub.s32 %s15, %s22
      %p50 = scmp.eq.s32.totalorder %s49, 0
      %s52 = sadd.s32 %s51, 1
      %s53 = scalar_select %p50, %s51, %s52
      %p56 = pneg %p50
      %p57 = scmp.eq.s32.totalorder %s15, 1
      %p58 = por %p56, %p57
      %p59 = scmp.ne.s32.totalorder %s51, %s54
      %p60 = scmp.eq.s32.totalorder %s15, 0
      %p61 = por %p59, %p60
      %p62 = scmp.ne.s32.totalorder %s51, %s54
      %p63 = scmp.eq.s32.totalorder %s20, 1
      %p64 = por %p62, %p63
      %p65 = scmp.ne.s32.totalorder %s54, %s55
      %p66 = scmp.eq.s32.totalorder %s20, 0
      %p67 = por %p65, %p66
      %p68 = scmp.ne.s32.totalorder %s54, %s55
      %p69 = scmp.eq.s32.totalorder %s21, 1
      %p70 = por %p68, %p69
      %p72 = scmp.ne.s32.totalorder %s55, %s71
      %p73 = scmp.eq.s32.totalorder %s21, 0
      %p74 = por %p72, %p73
      %s75 = ssub.s32 %s15, %s22
      %p76 = scmp.eq.s32.totalorder %s75, 0
      %s78 = sadd.s32 %s77, 1
      %s79 = scalar_select %p76, %s77, %s78
      %p82 = pneg %p76
      %p83 = scmp.eq.s32.totalorder %s15, 1
      %p84 = por %p82, %p83
      %p85 = scmp.ne.s32.totalorder %s77, %s80
      %p86 = scmp.eq.s32.totalorder %s15, 0
      %p87 = por %p85, %p86
      %p88 = scmp.ne.s32.totalorder %s77, %s80
      %p89 = scmp.eq.s32.totalorder %s20, 1
      %p90 = por %p88, %p89
      %p91 = scmp.ne.s32.totalorder %s80, %s81
      %p92 = scmp.eq.s32.totalorder %s20, 0
      %p93 = por %p91, %p92
      %p94 = scmp.ne.s32.totalorder %s80, %s81
      %p95 = scmp.eq.s32.totalorder %s21, 1
      %p96 = por %p94, %p95
      %p98 = scmp.ne.s32.totalorder %s81, %s97
      %p99 = scmp.eq.s32.totalorder %s21, 0
      %p100 = por %p98, %p99
      %s102 = sadd.s32 %s101, 1
      %p105 = scmp.eq.s32.totalorder %s15, 1
      %p106 = scmp.ne.s32.totalorder %s101, %s103
      %p107 = scmp.eq.s32.totalorder %s15, 0
      %p108 = por %p106, %p107
      %p109 = scmp.ne.s32.totalorder %s101, %s103
      %p110 = scmp.eq.s32.totalorder %s20, 1
      %p111 = por %p109, %p110
      %p112 = scmp.ne.s32.totalorder %s103, %s104
      %p113 = scmp.eq.s32.totalorder %s20, 0
      %p114 = por %p112, %p113
      %p115 = scmp.ne.s32.totalorder %s103, %s104
      %p116 = scmp.eq.s32.totalorder %s21, 1
      %p117 = por %p115, %p116
      %p119 = scmp.ne.s32.totalorder %s104, %s118
      %p120 = scmp.eq.s32.totalorder %s21, 0
      %p121 = por %p119, %p120
      %s123 = sadd.s32 %s122, 1
      %p126 = scmp.eq.s32.totalorder %s15, 1
      %p127 = scmp.ne.s32.totalorder %s122, %s124
      %p128 = scmp.eq.s32.totalorder %s15, 0
      %p129 = por %p127, %p128
      %p130 = scmp.ne.s32.totalorder %s122, %s124
      %p131 = scmp.eq.s32.totalorder %s20, 1
      %p132 = por %p130, %p131
      %p133 = scmp.ne.s32.totalorder %s124, %s125
      %p134 = scmp.eq.s32.totalorder %s20, 0
      %p135 = por %p133, %p134
      %p136 = scmp.ne.s32.totalorder %s124, %s125
      %p137 = scmp.eq.s32.totalorder %s21, 1
      %p138 = por %p136, %p137
      %p140 = scmp.ne.s32.totalorder %s125, %s139
      %p141 = scmp.eq.s32.totalorder %s21, 0
      %p142 = por %p140, %p141
      %s144 = sadd.s32 %s143, 1
      %p147 = scmp.eq.s32.totalorder %s15, 1
      %p148 = scmp.ne.s32.totalorder %s143, %s145
      %p149 = scmp.eq.s32.totalorder %s15, 0
      %p150 = por %p148, %p149
      %p151 = scmp.ne.s32.totalorder %s143, %s145
      %p152 = scmp.eq.s32.totalorder %s20, 1
      %p153 = por %p151, %p152
      %p154 = scmp.ne.s32.totalorder %s145, %s146
      %p155 = scmp.eq.s32.totalorder %s20, 0
      %p156 = por %p154, %p155
      %p157 = scmp.ne.s32.totalorder %s145, %s146
      %p158 = scmp.eq.s32.totalorder %s21, 1
      %p159 = por %p157, %p158
      %p161 = scmp.ne.s32.totalorder %s146, %s160
      %p162 = scmp.eq.s32.totalorder %s21, 0
      %p163 = por %p161, %p162
      %s164 = ssub.s32 %s15, %s22
      %p165 = scmp.eq.s32.totalorder %s164, 0
      %s167 = sadd.s32 %s166, 1
      %s168 = scalar_select %p165, %s166, %s167
      %p171 = pneg %p165
      %p172 = scmp.eq.s32.totalorder %s15, 1
      %p173 = por %p171, %p172
      %p174 = scmp.ne.s32.totalorder %s166, %s169
      %p175 = scmp.eq.s32.totalorder %s15, 0
      %p176 = por %p174, %p175
      %p177 = scmp.ne.s32.totalorder %s166, %s169
      %p178 = scmp.eq.s32.totalorder %s20, 1
      %p179 = por %p177, %p178
      %p180 = scmp.ne.s32.totalorder %s169, %s170
      %p181 = scmp.eq.s32.totalorder %s20, 0
      %p182 = por %p180, %p181
      %p183 = scmp.ne.s32.totalorder %s169, %s170
      %p184 = scmp.eq.s32.totalorder %s21, 1
      %p185 = por %p183, %p184
      %p187 = scmp.ne.s32.totalorder %s170, %s186
      %p188 = scmp.eq.s32.totalorder %s21, 0
      %p189 = por %p187, %p188
      %p190 = scmp.le.s32.totalorder 1, %s15
      %p191 = scmp.lt.s32.totalorder %s15, 3
      %p192 = pnand %p190, %p191
      %p193 = pneg %p192
      // Predicated region
      $region9: #{_lambda_.1} parent=5 // pred_check
        _
      $region10: #{_lambda_.1} parent=5 // pred_check_branch
        %195 = sbr.rel (%p192) target = $region12
      $region11: #{_lambda_.1} parent=5 // pred_region
        %s196 = ssub.s32 %s15, 1
        // Predicated region
        $region13: #{_lambda_.1} parent=11 // pred_check
          %p197 = pneg %p114
        $region14: #{_lambda_.1} parent=11 // pred_check_branch
          %199 = sbr.rel (%p197) target = $region16
        $region15: #{_lambda_.1} parent=11 // pred_region
          _
        $region16: #{_lambda_.1} parent=11 // pred_fallthru
          _
        // Predicated region
        $region17: #{_lambda_.1} parent=11 // pred_check
          %p200 = pneg %p135
        $region18: #{_lambda_.1} parent=11 // pred_check_branch
          %202 = sbr.rel (%p200) target = $region20
        $region19: #{_lambda_.1} parent=11 // pred_region
          _
        $region20: #{_lambda_.1} parent=11 // pred_fallthru
          _
        // Predicated region
        $region21: #{_lambda_.1} parent=11 // pred_check
          %p203 = pneg %p156
        $region22: #{_lambda_.1} parent=11 // pred_check_branch
          %205 = sbr.rel (%p203) target = $region24
        $region23: #{_lambda_.1} parent=11 // pred_region
          _
        $region24: #{_lambda_.1} parent=11 // pred_fallthru
          _
      $region12: #{_lambda_.1} parent=5 // pred_fallthru
        _
      %p206 = scmp.lt.s32.totalorder %s15, 2
      // Predicated region
      $region25: #{_lambda_.1} parent=5 // pred_check
        %p207 = pneg %p206
      $region26: #{_lambda_.1} parent=5 // pred_check_branch
        %209 = sbr.rel (%p207) target = $region28
      $region27: #{_lambda_.1} parent=5 // pred_region
        // Predicated region
        $region29: #{_lambda_.1} parent=27 // pred_check
          %p210 = pneg %p35
        $region30: #{_lambda_.1} parent=27 // pred_check_branch
          %212 = sbr.rel (%p210) target = $region32
        $region31: #{_lambda_.1} parent=27 // pred_region
          %s213 = smul.u32 8, %s15
          %p214 = scmp.lt.s32.totalorder %s213, 15
          %s215 = scalar_select %p214, %s213, 15
          %s216 = smul.addr %s215, 4
          %s217 = scalar_lea.vmem %s0, %s216
          %s218 = smul.u32 8, %s15
        $region32: #{_lambda_.1} parent=27 // pred_fallthru
          _
        // Predicated region
        $region33: #{_lambda_.1} parent=27 // pred_check
          %p219 = pneg %p61
        $region34: #{_lambda_.1} parent=27 // pred_check_branch
          %221 = sbr.rel (%p219) target = $region36
        $region35: #{_lambda_.1} parent=27 // pred_region
          %s222 = smul.u32 8, %s15
          %p223 = scmp.lt.s32.totalorder %s222, 15
          %s224 = scalar_select %p223, %s222, 15
          %s225 = smul.addr %s224, 8
          %s226 = scalar_lea.vmem %s1, %s225
          %s227 = smul.u32 8, %s15
        $region36: #{_lambda_.1} parent=27 // pred_fallthru
          _
        // Predicated region
        $region37: #{_lambda_.1} parent=27 // pred_check
          %p228 = pneg %p87
        $region38: #{_lambda_.1} parent=27 // pred_check_branch
          %230 = sbr.rel (%p228) target = $region40
        $region39: #{_lambda_.1} parent=27 // pred_region
          %p231 = scmp.lt.s32.totalorder %s15, 1
          %s232 = scalar_select %p231, %s15, 1
          %s233 = smul.addr %s232, 8
          %s234 = scalar_lea.vmem %s2, %s233
        $region40: #{_lambda_.1} parent=27 // pred_fallthru
          _
      $region28: #{_lambda_.1} parent=5 // pred_fallthru
        _
      %p235 = scmp.le.s32.totalorder 1, %s15
      %p236 = scmp.lt.s32.totalorder %s15, 3
      %p237 = pnand %p235, %p236
      %p238 = pneg %p237
      // Predicated region
      $region41: #{_lambda_.1} parent=5 // pred_check
        _
      $region42: #{_lambda_.1} parent=5 // pred_check_branch
        %240 = sbr.rel (%p237) target = $region44
      $region43: #{_lambda_.1} parent=5 // pred_region
        %s241 = ssub.s32 %s15, 1
        %s242 = smul.u32 8, %s20
        %p243 = scmp.lt.s32.totalorder %s242, 15
        %s244 = scalar_select %p243, %s242, 15
        %s245 = smul.addr %s244, 4
        %s246 = scalar_lea.vmem %s0, %s245
        %p247 = pneg %p41
        %p248 = pneg %p38
        %s249 = smul.u32 8, %s20
        %p250 = scmp.lt.s32.totalorder %s249, 15
        %s251 = scalar_select %p250, %s249, 15
        %s252 = smul.addr %s251, 8
        %s253 = scalar_lea.vmem %s1, %s252
        %p254 = pneg %p67
        %p255 = pneg %p64
        %p256 = scmp.lt.s32.totalorder %s20, 1
        %s257 = scalar_select %p256, %s20, 1
        %s258 = smul.addr %s257, 8
        %s259 = scalar_lea.vmem %s2, %s258
        %p260 = pneg %p93
        %p261 = pneg %p90
        %p262 = pneg %p114
        %p263 = pneg %p111
        %p264 = pneg %p135
        %p265 = pneg %p132
        %p266 = pneg %p156
        %p267 = pneg %p153
        %p268 = pneg %p182
        %p269 = pneg %p179
        %s270 = sand.u32 %s169, 1
        %s271 = scalar_lea.sflag [#allocation7], %s270
        %s272 = sand.u32 %s169, 1
        %s273 = smul.addr %s272, 8
        %s274 = scalar_lea.vmem [#allocation6], %s273
        %s275 = smul.u32 8, %s20
        %p276 = scmp.lt.s32.totalorder %s275, 15
        %s277 = scalar_select %p276, %s275, 15
        %s278 = smul.addr %s277, 4
        %s279 = scalar_lea.vmem %s0, %s278
        %s280 = smul.u32 8, %s20
        %s281 = smul.u32 8, %s20
        %p282 = scmp.lt.s32.totalorder %s281, 15
        %s283 = scalar_select %p282, %s281, 15
        %s284 = smul.addr %s283, 8
        %s285 = scalar_lea.vmem %s1, %s284
        %s286 = smul.u32 8, %s20
        %p287 = scmp.lt.s32.totalorder %s20, 1
        %s288 = scalar_select %p287, %s20, 1
        %s289 = smul.addr %s288, 8
        %s290 = scalar_lea.vmem %s2, %s289
        %v292 = vld [vmem:[%s3] sm:$0xf]
        %v293 = vld [vmem:[%s3 + $0x4] sm:$0xf]
        %v294 = vld [vmem:[%s3 + $0x8] sm:$0xf]
        %v295 = vld [vmem:[%s3 + $0xc] sm:$0xf]
        %s296 = scalar_lea.vmem %s3, 16
        %v297 = vld [vmem:[%s296] sm:$0xf]
        %v298 = vld [vmem:[%s296 + $0x4] sm:$0xf]
        %v299 = vld [vmem:[%s296 + $0x8] sm:$0xf]
        %v300 = vld [vmem:[%s296 + $0xc] sm:$0xf]
        %s301 = scalar_lea.vmem %s3, 32
        %v302 = vld [vmem:[%s301] sm:$0xf]
        %v303 = vld [vmem:[%s301 + $0x4] sm:$0xf]
        %v304 = vld [vmem:[%s301 + $0x8] sm:$0xf]
        %v305 = vld [vmem:[%s301 + $0xc] sm:$0xf]
        %v306 = vld [vmem:[%s4] sm:$0xf]
        %v307 = vld [vmem:[%s4 + $0x4] sm:$0xf]
        %v308 = vld [vmem:[%s4 + $0x8] sm:$0xf]
        %v309 = vld [vmem:[%s4 + $0xc] sm:$0xf]
        %s310 = scalar_lea.vmem %s4, 16
        %v311 = vld [vmem:[%s310] sm:$0xf]
        %v312 = vld [vmem:[%s310 + $0x4] sm:$0xf]
        %v313 = vld [vmem:[%s310 + $0x8] sm:$0xf]
        %v314 = vld [vmem:[%s310 + $0xc] sm:$0xf]
        %s315 = scalar_lea.vmem %s4, 32
        %v316 = vld [vmem:[%s315] sm:$0xf]
        %v317 = vld [vmem:[%s315 + $0x4] sm:$0xf]
        %v318 = vld [vmem:[%s315 + $0x8] sm:$0xf]
        %v319 = vld [vmem:[%s315 + $0xc] sm:$0xf]
        %v320 = vld [vmem:[%s5] sm:$0x1]
        %s321 = scalar_lea.vmem %s5, 1
        %v322 = vld [vmem:[%s321] sm:$0x1]
        %s323 = scalar_lea.vmem %s5, 2
        %v324 = vld [vmem:[%s323] sm:$0x1]
        %s325 = scalar_lea.vmem %s5, 3
        %v326 = vld [vmem:[%s325] sm:$0x1]
        %v327 = vld [vmem:[%s279] sm:$0xf]
        %v328 = vld [vmem:[%s279 + $0x4] sm:$0xf]
        %v329 = vld [vmem:[%s279 + $0x8] sm:$0xf]
        %v330 = vld [vmem:[%s279 + $0xc] sm:$0xf]
        %v331 = vld [vmem:[%s279 + $0x10] sm:$0xf]
        %v332 = vld [vmem:[%s279 + $0x14] sm:$0xf]
        %v333 = vld [vmem:[%s279 + $0x18] sm:$0xf]
        %v334 = vld [vmem:[%s279 + $0x1c] sm:$0xf]
        %v336 = vlaneseq
        %v337 = vshrl.u32 %v336, 7
        %v338 = vsub.s32 0, %v337
        %v339 = vrot.slane %v320, %v338
        %v349 = vunpack.c.l.b16 %v327
        %v350 = vunpack.c.l.b16 %v328
        %v351 = vunpack.c.l.b16 %v329
        %v352 = vunpack.c.l.b16 %v330
        %v353 = vunpack.c.l.b16 %v331
        %v354 = vunpack.c.l.b16 %v332
        %v355 = vunpack.c.l.b16 %v333
        %v356 = vunpack.c.l.b16 %v334
        %v357 = vpack.c.b16 %v350, %v349
        %v358 = vpack.c.b16 %v352, %v351
        %v359 = vpack.c.b16 %v354, %v353
        %v360 = vpack.c.b16 %v356, %v355
        %v365 = vunpack.c.l.b16 %v292
        %v366 = vunpack.c.l.b16 %v293
        %v367 = vunpack.c.l.b16 %v294
        %v368 = vunpack.c.l.b16 %v295
        %v369 = vpack.c.b16 %v366, %v365
        %v370 = vpack.c.b16 %v368, %v367
        %vm373 = vcmask 261120
        %v375 = vsel %vm373, %v357, 0
        %v378 = vsel %vm373, %v358, 0
        %v381 = vsel %vm373, %v359, 0
        %v384 = vsel %vm373, %v360, 0
        %386 = vmatprep.subr.bf16.mxu0 0
        %387 = vmatpush1.bf16.msra.mxu0 0
        %388 = vmatprep.subr.bf16.mxu0 0
        %389 = vmatpush1.bf16.msra.mxu0 0
        %390 = vmatprep.subr.bf16.mxu0 0
        %391 = vmatpush1.bf16.msra.mxu0 0
        %392 = vmatprep.subr.bf16.mxu0 0
        %393 = vmatpush1.bf16.msra.mxu0 0
        %394 = vmatprep.subr.bf16.mxu0 0
        %395 = vmatpush1.bf16.msra.mxu0 0
        %396 = vmatprep.subr.bf16.mxu0 0
        %397 = vmatpush1.bf16.msra.mxu0 0
        %398 = vmatprep.subr.bf16.mxu0 0
        %399 = vmatpush1.bf16.msra.mxu0 %v370
        %400 = vmatprep.subr.bf16.mxu0 0
        %401 = vmatpush1.bf16.msra.mxu0 %v369
        %402 = vmatprep.subr.bf16.mxu0 0
        %403 = vmatpush2.bf16.msra.mxu0 0
        %404 = vmatprep.subr.bf16.mxu0 0
        %405 = vmatpush2.bf16.msra.mxu0 0
        %406 = vmatprep.subr.bf16.mxu0 0
        %407 = vmatpush2.bf16.msra.mxu0 0
        %408 = vmatprep.subr.bf16.mxu0 0
        %409 = vmatpush2.bf16.msra.mxu0 0
        %410 = vmatprep.subr.bf16.mxu0 0
        %411 = vmatpush2.bf16.msra.mxu0 0
        %412 = vmatprep.subr.bf16.mxu0 0
        %413 = vmatpush2.bf16.msra.mxu0 0
        %414 = vmatprep.subr.bf16.mxu0 0
        %415 = vmatpush2.bf16.msra.mxu0 0
        %416 = vmatprep.subr.bf16.mxu0 0
        %417 = vmatpush2.bf16.msra.mxu0 0
        %418 = vmatprep.mubr.bf16.mxu0 0
        %419 = vmatmul.mubr.bf16.gmra.mxu0 %v375
        %v420 = vpop.f32.mrf.mxu0
        %v421 = vadd.f32 %v339, %v420
        %v422 = vpop.f32.mrf.mxu0
        %v423 = vpop.f32.mrf.mxu0
        %v424 = vadd.f32 %v339, %v423
        %v425 = vpop.f32.mrf.mxu0
        %426 = vmatprep.mubr.bf16.mxu0 0
        %427 = vmatmul.mubr.bf16.gmra.mxu0 %v378
        %v428 = vpop.f32.mrf.mxu0
        %v429 = vadd.f32 %v339, %v428
        %v430 = vpop.f32.mrf.mxu0
        %v431 = vpop.f32.mrf.mxu0
        %v432 = vadd.f32 %v339, %v431
        %v433 = vpop.f32.mrf.mxu0
        %434 = vmatprep.mubr.bf16.mxu0 0
        %435 = vmatmul.mubr.bf16.gmra.mxu0 %v381
        %v436 = vpop.f32.mrf.mxu0
        %v437 = vadd.f32 %v339, %v436
        %v438 = vpop.f32.mrf.mxu0
        %v439 = vpop.f32.mrf.mxu0
        %v440 = vadd.f32 %v339, %v439
        %v441 = vpop.f32.mrf.mxu0
        %442 = vmatprep.mubr.bf16.mxu0 0
        %443 = vmatmul.mubr.bf16.gmra.mxu0 %v384
        %v444 = vpop.f32.mrf.mxu0
        %v445 = vadd.f32 %v339, %v444
        %v446 = vpop.f32.mrf.mxu0
        %v447 = vpop.f32.mrf.mxu0
        %v448 = vadd.f32 %v339, %v447
        %v449 = vpop.f32.mrf.mxu0
        %450 = vdwg.mxu0
        %451 = vst.msk [vmem:[#allocation2] sm:$0xff] %vm373, %v421
        %452 = vst.msk [vmem:[#allocation2 + $0x8] sm:$0xff] %vm373, %v424
        %453 = vst.msk [vmem:[#allocation2 + $0x10] sm:$0xff] %vm373, %v429
        %454 = vst.msk [vmem:[#allocation2 + $0x18] sm:$0xff] %vm373, %v432
        %455 = vst.msk [vmem:[#allocation2 + $0x20] sm:$0xff] %vm373, %v437
        %456 = vst.msk [vmem:[#allocation2 + $0x28] sm:$0xff] %vm373, %v440
        %457 = vst.msk [vmem:[#allocation2 + $0x30] sm:$0xff] %vm373, %v445
        %458 = vst.msk [vmem:[#allocation2 + $0x38] sm:$0xff] %vm373, %v448
        %v460 = vlaneseq
        %v461 = vshrl.u32 %v460, 7
        %v462 = vsub.s32 0, %v461
        %v463 = vrot.slane %v322, %v462
        %v469 = vunpack.c.l.b16 %v297
        %v470 = vunpack.c.l.b16 %v298
        %v471 = vunpack.c.l.b16 %v299
        %v472 = vunpack.c.l.b16 %v300
        %v473 = vpack.c.b16 %v470, %v469
        %v474 = vpack.c.b16 %v472, %v471
        %477 = vmatprep.subr.bf16.mxu0 0
        %478 = vmatpush1.bf16.msra.mxu0 0
        %479 = vmatprep.subr.bf16.mxu0 0
        %480 = vmatpush1.bf16.msra.mxu0 0
        %481 = vmatprep.subr.bf16.mxu0 0
        %482 = vmatpush1.bf16.msra.mxu0 0
        %483 = vmatprep.subr.bf16.mxu0 0
        %484 = vmatpush1.bf16.msra.mxu0 0
        %485 = vmatprep.subr.bf16.mxu0 0
        %486 = vmatpush1.bf16.msra.mxu0 0
        %487 = vmatprep.subr.bf16.mxu0 0
        %488 = vmatpush1.bf16.msra.mxu0 0
        %489 = vmatprep.subr.bf16.mxu0 0
        %490 = vmatpush1.bf16.msra.mxu0 %v474
        %491 = vmatprep.subr.bf16.mxu0 0
        %492 = vmatpush1.bf16.msra.mxu0 %v473
        %493 = vmatprep.subr.bf16.mxu0 0
        %494 = vmatpush2.bf16.msra.mxu0 0
        %495 = vmatprep.subr.bf16.mxu0 0
        %496 = vmatpush2.bf16.msra.mxu0 0
        %497 = vmatprep.subr.bf16.mxu0 0
        %498 = vmatpush2.bf16.msra.mxu0 0
        %499 = vmatprep.subr.bf16.mxu0 0
        %500 = vmatpush2.bf16.msra.mxu0 0
        %501 = vmatprep.subr.bf16.mxu0 0
        %502 = vmatpush2.bf16.msra.mxu0 0
        %503 = vmatprep.subr.bf16.mxu0 0
        %504 = vmatpush2.bf16.msra.mxu0 0
        %505 = vmatprep.subr.bf16.mxu0 0
        %506 = vmatpush2.bf16.msra.mxu0 0
        %507 = vmatprep.subr.bf16.mxu0 0
        %508 = vmatpush2.bf16.msra.mxu0 0
        %509 = vmatprep.mubr.bf16.mxu0 0
        %510 = vmatmul.mubr.bf16.gmra.mxu0 %v375
        %v511 = vpop.f32.mrf.mxu0
        %v512 = vadd.f32 %v463, %v511
        %v513 = vpop.f32.mrf.mxu0
        %v514 = vpop.f32.mrf.mxu0
        %v515 = vadd.f32 %v463, %v514
        %v516 = vpop.f32.mrf.mxu0
        %517 = vmatprep.mubr.bf16.mxu0 0
        %518 = vmatmul.mubr.bf16.gmra.mxu0 %v378
        %v519 = vpop.f32.mrf.mxu0
        %v520 = vadd.f32 %v463, %v519
        %v521 = vpop.f32.mrf.mxu0
        %v522 = vpop.f32.mrf.mxu0
        %v523 = vadd.f32 %v463, %v522
        %v524 = vpop.f32.mrf.mxu0
        %525 = vmatprep.mubr.bf16.mxu0 0
        %526 = vmatmul.mubr.bf16.gmra.mxu0 %v381
        %v527 = vpop.f32.mrf.mxu0
        %v528 = vadd.f32 %v463, %v527
        %v529 = vpop.f32.mrf.mxu0
        %v530 = vpop.f32.mrf.mxu0
        %v531 = vadd.f32 %v463, %v530
        %v532 = vpop.f32.mrf.mxu0
        %533 = vmatprep.mubr.bf16.mxu0 0
        %534 = vmatmul.mubr.bf16.gmra.mxu0 %v384
        %v535 = vpop.f32.mrf.mxu0
        %v536 = vadd.f32 %v463, %v535
        %v537 = vpop.f32.mrf.mxu0
        %v538 = vpop.f32.mrf.mxu0
        %v539 = vadd.f32 %v463, %v538
        %v540 = vpop.f32.mrf.mxu0
        %541 = vdwg.mxu0
        %542 = vst.msk [vmem:[#allocation3] sm:$0xff] %vm373, %v512
        %543 = vst.msk [vmem:[#allocation3 + $0x8] sm:$0xff] %vm373, %v515
        %544 = vst.msk [vmem:[#allocation3 + $0x10] sm:$0xff] %vm373, %v520
        %545 = vst.msk [vmem:[#allocation3 + $0x18] sm:$0xff] %vm373, %v523
        %546 = vst.msk [vmem:[#allocation3 + $0x20] sm:$0xff] %vm373, %v528
        %547 = vst.msk [vmem:[#allocation3 + $0x28] sm:$0xff] %vm373, %v531
        %548 = vst.msk [vmem:[#allocation3 + $0x30] sm:$0xff] %vm373, %v536
        %549 = vst.msk [vmem:[#allocation3 + $0x38] sm:$0xff] %vm373, %v539
        %v551 = vlaneseq
        %v552 = vshrl.u32 %v551, 7
        %v553 = vsub.s32 0, %v552
        %v554 = vrot.slane %v324, %v553
        %v560 = vunpack.c.l.b16 %v302
        %v561 = vunpack.c.l.b16 %v303
        %v562 = vunpack.c.l.b16 %v304
        %v563 = vunpack.c.l.b16 %v305
        %v564 = vpack.c.b16 %v561, %v560
        %v565 = vpack.c.b16 %v563, %v562
        %568 = vmatprep.subr.bf16.mxu0 0
        %569 = vmatpush1.bf16.msra.mxu0 0
        %570 = vmatprep.subr.bf16.mxu0 0
        %571 = vmatpush1.bf16.msra.mxu0 0
        %572 = vmatprep.subr.bf16.mxu0 0
        %573 = vmatpush1.bf16.msra.mxu0 0
        %574 = vmatprep.subr.bf16.mxu0 0
        %575 = vmatpush1.bf16.msra.mxu0 0
        %576 = vmatprep.subr.bf16.mxu0 0
        %577 = vmatpush1.bf16.msra.mxu0 0
        %578 = vmatprep.subr.bf16.mxu0 0
        %579 = vmatpush1.bf16.msra.mxu0 0
        %580 = vmatprep.subr.bf16.mxu0 0
        %581 = vmatpush1.bf16.msra.mxu0 %v565
        %582 = vmatprep.subr.bf16.mxu0 0
        %583 = vmatpush1.bf16.msra.mxu0 %v564
        %584 = vmatprep.subr.bf16.mxu0 0
        %585 = vmatpush2.bf16.msra.mxu0 0
        %586 = vmatprep.subr.bf16.mxu0 0
        %587 = vmatpush2.bf16.msra.mxu0 0
        %588 = vmatprep.subr.bf16.mxu0 0
        %589 = vmatpush2.bf16.msra.mxu0 0
        %590 = vmatprep.subr.bf16.mxu0 0
        %591 = vmatpush2.bf16.msra.mxu0 0
        %592 = vmatprep.subr.bf16.mxu0 0
        %593 = vmatpush2.bf16.msra.mxu0 0
        %594 = vmatprep.subr.bf16.mxu0 0
        %595 = vmatpush2.bf16.msra.mxu0 0
        %596 = vmatprep.subr.bf16.mxu0 0
        %597 = vmatpush2.bf16.msra.mxu0 0
        %598 = vmatprep.subr.bf16.mxu0 0
        %599 = vmatpush2.bf16.msra.mxu0 0
        %600 = vmatprep.mubr.bf16.mxu0 0
        %601 = vmatmul.mubr.bf16.gmra.mxu0 %v375
        %v602 = vpop.f32.mrf.mxu0
        %v603 = vadd.f32 %v554, %v602
        %v604 = vpop.f32.mrf.mxu0
        %v605 = vpop.f32.mrf.mxu0
        %v606 = vadd.f32 %v554, %v605
        %v607 = vpop.f32.mrf.mxu0
        %608 = vmatprep.mubr.bf16.mxu0 0
        %609 = vmatmul.mubr.bf16.gmra.mxu0 %v378
        %v610 = vpop.f32.mrf.mxu0
        %v611 = vadd.f32 %v554, %v610
        %v612 = vpop.f32.mrf.mxu0
        %v613 = vpop.f32.mrf.mxu0
        %v614 = vadd.f32 %v554, %v613
        %v615 = vpop.f32.mrf.mxu0
        %616 = vmatprep.mubr.bf16.mxu0 0
        %617 = vmatmul.mubr.bf16.gmra.mxu0 %v381
        %v618 = vpop.f32.mrf.mxu0
        %v619 = vadd.f32 %v554, %v618
        %v620 = vpop.f32.mrf.mxu0
        %v621 = vpop.f32.mrf.mxu0
        %v622 = vadd.f32 %v554, %v621
        %v623 = vpop.f32.mrf.mxu0
        %624 = vmatprep.mubr.bf16.mxu0 0
        %625 = vmatmul.mubr.bf16.gmra.mxu0 %v384
        %v626 = vpop.f32.mrf.mxu0
        %v627 = vadd.f32 %v554, %v626
        %v628 = vpop.f32.mrf.mxu0
        %v629 = vpop.f32.mrf.mxu0
        %v630 = vadd.f32 %v554, %v629
        %v631 = vpop.f32.mrf.mxu0
        %632 = vdwg.mxu0
        %633 = vst.msk [vmem:[#allocation4] sm:$0xff] %vm373, %v603
        %634 = vst.msk [vmem:[#allocation4 + $0x8] sm:$0xff] %vm373, %v606
        %635 = vst.msk [vmem:[#allocation4 + $0x10] sm:$0xff] %vm373, %v611
        %636 = vst.msk [vmem:[#allocation4 + $0x18] sm:$0xff] %vm373, %v614
        %637 = vst.msk [vmem:[#allocation4 + $0x20] sm:$0xff] %vm373, %v619
        %638 = vst.msk [vmem:[#allocation4 + $0x28] sm:$0xff] %vm373, %v622
        %639 = vst.msk [vmem:[#allocation4 + $0x30] sm:$0xff] %vm373, %v627
        %640 = vst.msk [vmem:[#allocation4 + $0x38] sm:$0xff] %vm373, %v630
        %v641 = vld [vmem:[%s285] sm:$0xff]
        %v642 = vld [vmem:[%s285 + $0x8] sm:$0xff]
        %v643 = vld [vmem:[%s285 + $0x10] sm:$0xff]
        %v644 = vld [vmem:[%s285 + $0x18] sm:$0xff]
        %v645 = vld [vmem:[%s285 + $0x20] sm:$0xff]
        %v646 = vld [vmem:[%s285 + $0x28] sm:$0xff]
        %v647 = vld [vmem:[%s285 + $0x30] sm:$0xff]
        %v648 = vld [vmem:[%s285 + $0x38] sm:$0xff]
        %650 = vset.pattern.permute.xlu0 0
        %651 = vperm.xlu0 %650, %v641
        %v652 = vpop.permute.xlu0 %651
        %655 = vset.pattern.permute.xlu0 0
        %656 = vperm.xlu0 %655, %v642
        %v657 = vpop.permute.xlu0 %656
        %660 = vset.pattern.permute.xlu0 0
        %661 = vperm.xlu0 %660, %v643
        %v662 = vpop.permute.xlu0 %661
        %665 = vset.pattern.permute.xlu0 0
        %666 = vperm.xlu0 %665, %v644
        %v667 = vpop.permute.xlu0 %666
        %670 = vset.pattern.permute.xlu0 0
        %671 = vperm.xlu0 %670, %v645
        %v672 = vpop.permute.xlu0 %671
        %675 = vset.pattern.permute.xlu0 0
        %676 = vperm.xlu0 %675, %v646
        %v677 = vpop.permute.xlu0 %676
        %680 = vset.pattern.permute.xlu0 0
        %681 = vperm.xlu0 %680, %v647
        %v682 = vpop.permute.xlu0 %681
        %685 = vset.pattern.permute.xlu0 0
        %686 = vperm.xlu0 %685, %v648
        %v687 = vpop.permute.xlu0 %686
        %689 = vst.msk [vmem:[#allocation5] sm:$0xff] %vm373, %v652
        %690 = vst.msk [vmem:[#allocation5 + $0x8] sm:$0xff] %vm373, %v657
        %691 = vst.msk [vmem:[#allocation5 + $0x10] sm:$0xff] %vm373, %v662
        %692 = vst.msk [vmem:[#allocation5 + $0x18] sm:$0xff] %vm373, %v667
        %693 = vst.msk [vmem:[#allocation5 + $0x20] sm:$0xff] %vm373, %v672
        %694 = vst.msk [vmem:[#allocation5 + $0x28] sm:$0xff] %vm373, %v677
        %695 = vst.msk [vmem:[#allocation5 + $0x30] sm:$0xff] %vm373, %v682
        %696 = vst.msk [vmem:[#allocation5 + $0x38] sm:$0xff] %vm373, %v687
        %v698 = vlaneseq
        %v699 = vshrl.u32 %v698, 7
        %v700 = vsub.s32 0, %v699
        %v701 = vrot.slane %v326, %v700
        %v703 = vld [vmem:[%s290] sm:$0xff]
        %v704 = vpack.c.bf16 %v703, %v703
        %v709 = vunpack.c.l.b16 %v306
        %v710 = vunpack.c.l.b16 %v307
        %v711 = vunpack.c.l.b16 %v308
        %v712 = vunpack.c.l.b16 %v309
        %v713 = vpack.c.b16 %v710, %v709
        %v714 = vpack.c.b16 %v712, %v711
        %v718 = vsel %vm373, %v704, 0
        %720 = vmatprep.subr.bf16.mxu0 0
        %721 = vmatpush1.bf16.msra.mxu0 0
        %722 = vmatprep.subr.bf16.mxu0 0
        %723 = vmatpush1.bf16.msra.mxu0 0
        %724 = vmatprep.subr.bf16.mxu0 0
        %725 = vmatpush1.bf16.msra.mxu0 0
        %726 = vmatprep.subr.bf16.mxu0 0
        %727 = vmatpush1.bf16.msra.mxu0 0
        %728 = vmatprep.subr.bf16.mxu0 0
        %729 = vmatpush1.bf16.msra.mxu0 0
        %730 = vmatprep.subr.bf16.mxu0 0
        %731 = vmatpush1.bf16.msra.mxu0 0
        %732 = vmatprep.subr.bf16.mxu0 0
        %733 = vmatpush1.bf16.msra.mxu0 %v714
        %734 = vmatprep.subr.bf16.mxu0 0
        %735 = vmatpush1.bf16.msra.mxu0 %v713
        %736 = vmatprep.subr.bf16.mxu0 0
        %737 = vmatpush2.bf16.msra.mxu0 0
        %738 = vmatprep.subr.bf16.mxu0 0
        %739 = vmatpush2.bf16.msra.mxu0 0
        %740 = vmatprep.subr.bf16.mxu0 0
        %741 = vmatpush2.bf16.msra.mxu0 0
        %742 = vmatprep.subr.bf16.mxu0 0
        %743 = vmatpush2.bf16.msra.mxu0 0
        %744 = vmatprep.subr.bf16.mxu0 0
        %745 = vmatpush2.bf16.msra.mxu0 0
        %746 = vmatprep.subr.bf16.mxu0 0
        %747 = vmatpush2.bf16.msra.mxu0 0
        %748 = vmatprep.subr.bf16.mxu0 0
        %749 = vmatpush2.bf16.msra.mxu0 0
        %750 = vmatprep.subr.bf16.mxu0 0
        %751 = vmatpush2.bf16.msra.mxu0 0
        %752 = vmatprep.mubr.bf16.mxu0 0
        %753 = vmatmul.mubr.bf16.gmra.mxu0 %v718
        %v754 = vpop.f32.mrf.mxu0
        %v755 = vadd.f32 0.0, %v754
        %v756 = vpop.f32.mrf.mxu0
        %v757 = vpop.f32.mrf.mxu0
        %v758 = vpop.f32.mrf.mxu0
        %759 = vdwg.mxu0
        %v764 = vunpack.c.l.b16 %v311
        %v765 = vunpack.c.l.b16 %v312
        %v766 = vunpack.c.l.b16 %v313
        %v767 = vunpack.c.l.b16 %v314
        %v768 = vpack.c.b16 %v765, %v764
        %v769 = vpack.c.b16 %v767, %v766
        %772 = vmatprep.subr.bf16.mxu0 0
        %773 = vmatpush1.bf16.msra.mxu0 0
        %774 = vmatprep.subr.bf16.mxu0 0
        %775 = vmatpush1.bf16.msra.mxu0 0
        %776 = vmatprep.subr.bf16.mxu0 0
        %777 = vmatpush1.bf16.msra.mxu0 0
        %778 = vmatprep.subr.bf16.mxu0 0
        %779 = vmatpush1.bf16.msra.mxu0 0
        %780 = vmatprep.subr.bf16.mxu0 0
        %781 = vmatpush1.bf16.msra.mxu0 0
        %782 = vmatprep.subr.bf16.mxu0 0
        %783 = vmatpush1.bf16.msra.mxu0 0
        %784 = vmatprep.subr.bf16.mxu0 0
        %785 = vmatpush1.bf16.msra.mxu0 %v769
        %786 = vmatprep.subr.bf16.mxu0 0
        %787 = vmatpush1.bf16.msra.mxu0 %v768
        %788 = vmatprep.subr.bf16.mxu0 0
        %789 = vmatpush2.bf16.msra.mxu0 0
        %790 = vmatprep.subr.bf16.mxu0 0
        %791 = vmatpush2.bf16.msra.mxu0 0
        %792 = vmatprep.subr.bf16.mxu0 0
        %793 = vmatpush2.bf16.msra.mxu0 0
        %794 = vmatprep.subr.bf16.mxu0 0
        %795 = vmatpush2.bf16.msra.mxu0 0
        %796 = vmatprep.subr.bf16.mxu0 0
        %797 = vmatpush2.bf16.msra.mxu0 0
        %798 = vmatprep.subr.bf16.mxu0 0
        %799 = vmatpush2.bf16.msra.mxu0 0
        %800 = vmatprep.subr.bf16.mxu0 0
        %801 = vmatpush2.bf16.msra.mxu0 0
        %802 = vmatprep.subr.bf16.mxu0 0
        %803 = vmatpush2.bf16.msra.mxu0 0
        %804 = vmatprep.mubr.bf16.mxu0 0
        %805 = vmatmul.mubr.bf16.gmra.mxu0 %v718
        %v806 = vpop.f32.mrf.mxu0
        %v807 = vadd.f32 0.0, %v806
        %v808 = vpop.f32.mrf.mxu0
        %v809 = vpop.f32.mrf.mxu0
        %v810 = vpop.f32.mrf.mxu0
        %811 = vdwg.mxu0
        %v812 = vld [vmem:[#allocation2] sm:$0x1]
        %v813 = vld [vmem:[#allocation2 + $0x8] sm:$0x1]
        %v814 = vld [vmem:[#allocation2 + $0x10] sm:$0x1]
        %v815 = vld [vmem:[#allocation2 + $0x18] sm:$0x1]
        %v816 = vld [vmem:[#allocation2 + $0x20] sm:$0x1]
        %v817 = vld [vmem:[#allocation2 + $0x28] sm:$0x1]
        %v818 = vld [vmem:[#allocation2 + $0x30] sm:$0x1]
        %v819 = vld [vmem:[#allocation2 + $0x38] sm:$0x1]
        %v821 = vrot.slane %v755, 1
        %v822 = vrot.slane %v755, 2
        %v823 = vrot.slane %v755, 3
        %v824 = vrot.slane %v755, 4
        %v825 = vrot.slane %v755, 5
        %v826 = vrot.slane %v755, 6
        %v827 = vrot.slane %v755, 7
        %v836 = vadd.f32 %v812, %v755
        %v837 = vadd.f32 %v813, %v821
        %v838 = vadd.f32 %v814, %v822
        %v839 = vadd.f32 %v815, %v823
        %v840 = vadd.f32 %v816, %v824
        %v841 = vadd.f32 %v817, %v825
        %v842 = vadd.f32 %v818, %v826
        %v843 = vadd.f32 %v819, %v827
        %v844 = vxor.u32 %v836, 2147483648
        %v845 = vxor.u32 %v837, 2147483648
        %v846 = vxor.u32 %v838, 2147483648
        %v847 = vxor.u32 %v839, 2147483648
        %v848 = vxor.u32 %v840, 2147483648
        %v849 = vxor.u32 %v841, 2147483648
        %v850 = vxor.u32 %v842, 2147483648
        %v851 = vxor.u32 %v843, 2147483648
        %v852 = vmul.f32 %v844, 1.442695
        %v853 = vpow.pop %v852
        %v854 = vmul.f32 %v845, 1.442695
        %v855 = vpow.pop %v854
        %v856 = vmul.f32 %v846, 1.442695
        %v857 = vpow.pop %v856
        %v858 = vmul.f32 %v847, 1.442695
        %v859 = vpow.pop %v858
        %v860 = vmul.f32 %v848, 1.442695
        %v861 = vpow.pop %v860
        %v862 = vmul.f32 %v849, 1.442695
        %v863 = vpow.pop %v862
        %v864 = vmul.f32 %v850, 1.442695
        %v865 = vpow.pop %v864
        %v866 = vmul.f32 %v851, 1.442695
        %v867 = vpow.pop %v866
        %v868 = vadd.f32 %v853, 1.0
        %v869 = vadd.f32 %v855, 1.0
        %v870 = vadd.f32 %v857, 1.0
        %v871 = vadd.f32 %v859, 1.0
        %v872 = vadd.f32 %v861, 1.0
        %v873 = vadd.f32 %v863, 1.0
        %v874 = vadd.f32 %v865, 1.0
        %v875 = vadd.f32 %v867, 1.0
        %v876 = vrcp.pop %v868
        %v877 = vmul.f32 1.0, %v876
        %v878 = vrcp.pop %v869
        %v879 = vmul.f32 1.0, %v878
        %v880 = vrcp.pop %v870
        %v881 = vmul.f32 1.0, %v880
        %v882 = vrcp.pop %v871
        %v883 = vmul.f32 1.0, %v882
        %v884 = vrcp.pop %v872
        %v885 = vmul.f32 1.0, %v884
        %v886 = vrcp.pop %v873
        %v887 = vmul.f32 1.0, %v886
        %v888 = vrcp.pop %v874
        %v889 = vmul.f32 1.0, %v888
        %v890 = vrcp.pop %v875
        %v891 = vmul.f32 1.0, %v890
        %v892 = vld [vmem:[#allocation3] sm:$0x1]
        %v893 = vld [vmem:[#allocation3 + $0x8] sm:$0x1]
        %v894 = vld [vmem:[#allocation3 + $0x10] sm:$0x1]
        %v895 = vld [vmem:[#allocation3 + $0x18] sm:$0x1]
        %v896 = vld [vmem:[#allocation3 + $0x20] sm:$0x1]
        %v897 = vld [vmem:[#allocation3 + $0x28] sm:$0x1]
        %v898 = vld [vmem:[#allocation3 + $0x30] sm:$0x1]
        %v899 = vld [vmem:[#allocation3 + $0x38] sm:$0x1]
        %v901 = vrot.slane %v807, 1
        %v902 = vrot.slane %v807, 2
        %v903 = vrot.slane %v807, 3
        %v904 = vrot.slane %v807, 4
        %v905 = vrot.slane %v807, 5
        %v906 = vrot.slane %v807, 6
        %v907 = vrot.slane %v807, 7
        %v916 = vadd.f32 %v892, %v807
        %v917 = vadd.f32 %v893, %v901
        %v918 = vadd.f32 %v894, %v902
        %v919 = vadd.f32 %v895, %v903
        %v920 = vadd.f32 %v896, %v904
        %v921 = vadd.f32 %v897, %v905
        %v922 = vadd.f32 %v898, %v906
        %v923 = vadd.f32 %v899, %v907
        %v924 = vxor.u32 %v916, 2147483648
        %v925 = vxor.u32 %v917, 2147483648
        %v926 = vxor.u32 %v918, 2147483648
        %v927 = vxor.u32 %v919, 2147483648
        %v928 = vxor.u32 %v920, 2147483648
        %v929 = vxor.u32 %v921, 2147483648
        %v930 = vxor.u32 %v922, 2147483648
        %v931 = vxor.u32 %v923, 2147483648
        %v932 = vmul.f32 %v924, 1.442695
        %v933 = vpow.pop %v932
        %v934 = vmul.f32 %v925, 1.442695
        %v935 = vpow.pop %v934
        %v936 = vmul.f32 %v926, 1.442695
        %v937 = vpow.pop %v936
        %v938 = vmul.f32 %v927, 1.442695
        %v939 = vpow.pop %v938
        %v940 = vmul.f32 %v928, 1.442695
        %v941 = vpow.pop %v940
        %v942 = vmul.f32 %v929, 1.442695
        %v943 = vpow.pop %v942
        %v944 = vmul.f32 %v930, 1.442695
        %v945 = vpow.pop %v944
        %v946 = vmul.f32 %v931, 1.442695
        %v947 = vpow.pop %v946
        %v948 = vadd.f32 %v933, 1.0
        %v949 = vadd.f32 %v935, 1.0
        %v950 = vadd.f32 %v937, 1.0
        %v951 = vadd.f32 %v939, 1.0
        %v952 = vadd.f32 %v941, 1.0
        %v953 = vadd.f32 %v943, 1.0
        %v954 = vadd.f32 %v945, 1.0
        %v955 = vadd.f32 %v947, 1.0
        %v956 = vrcp.pop %v948
        %v957 = vmul.f32 1.0, %v956
        %v958 = vrcp.pop %v949
        %v959 = vmul.f32 1.0, %v958
        %v960 = vrcp.pop %v950
        %v961 = vmul.f32 1.0, %v960
        %v962 = vrcp.pop %v951
        %v963 = vmul.f32 1.0, %v962
        %v964 = vrcp.pop %v952
        %v965 = vmul.f32 1.0, %v964
        %v966 = vrcp.pop %v953
        %v967 = vmul.f32 1.0, %v966
        %v968 = vrcp.pop %v954
        %v969 = vmul.f32 1.0, %v968
        %v970 = vrcp.pop %v955
        %v971 = vmul.f32 1.0, %v970
        %v972 = vld [vmem:[#allocation4] sm:$0x1]
        %v973 = vld [vmem:[#allocation4 + $0x8] sm:$0x1]
        %v974 = vld [vmem:[#allocation4 + $0x10] sm:$0x1]
        %v975 = vld [vmem:[#allocation4 + $0x18] sm:$0x1]
        %v976 = vld [vmem:[#allocation4 + $0x20] sm:$0x1]
        %v977 = vld [vmem:[#allocation4 + $0x28] sm:$0x1]
        %v978 = vld [vmem:[#allocation4 + $0x30] sm:$0x1]
        %v979 = vld [vmem:[#allocation4 + $0x38] sm:$0x1]
        %v984 = vunpack.c.l.b16 %v316
        %v985 = vunpack.c.l.b16 %v317
        %v986 = vunpack.c.l.b16 %v318
        %v987 = vunpack.c.l.b16 %v319
        %v988 = vpack.c.b16 %v985, %v984
        %v989 = vpack.c.b16 %v987, %v986
        %992 = vmatprep.subr.bf16.mxu0 0
        %993 = vmatpush1.bf16.msra.mxu0 0
        %994 = vmatprep.subr.bf16.mxu0 0
        %995 = vmatpush1.bf16.msra.mxu0 0
        %996 = vmatprep.subr.bf16.mxu0 0
        %997 = vmatpush1.bf16.msra.mxu0 0
        %998 = vmatprep.subr.bf16.mxu0 0
        %999 = vmatpush1.bf16.msra.mxu0 0
        %1000 = vmatprep.subr.bf16.mxu0 0
        %1001 = vmatpush1.bf16.msra.mxu0 0
        %1002 = vmatprep.subr.bf16.mxu0 0
        %1003 = vmatpush1.bf16.msra.mxu0 0
        %1004 = vmatprep.subr.bf16.mxu0 0
        %1005 = vmatpush1.bf16.msra.mxu0 %v989
        %1006 = vmatprep.subr.bf16.mxu0 0
        %1007 = vmatpush1.bf16.msra.mxu0 %v988
        %1008 = vmatprep.subr.bf16.mxu0 0
        %1009 = vmatpush2.bf16.msra.mxu0 0
        %1010 = vmatprep.subr.bf16.mxu0 0
        %1011 = vmatpush2.bf16.msra.mxu0 0
        %1012 = vmatprep.subr.bf16.mxu0 0
        %1013 = vmatpush2.bf16.msra.mxu0 0
        %1014 = vmatprep.subr.bf16.mxu0 0
        %1015 = vmatpush2.bf16.msra.mxu0 0
        %1016 = vmatprep.subr.bf16.mxu0 0
        %1017 = vmatpush2.bf16.msra.mxu0 0
        %1018 = vmatprep.subr.bf16.mxu0 0
        %1019 = vmatpush2.bf16.msra.mxu0 0
        %1020 = vmatprep.subr.bf16.mxu0 0
        %1021 = vmatpush2.bf16.msra.mxu0 0
        %1022 = vmatprep.subr.bf16.mxu0 0
        %1023 = vmatpush2.bf16.msra.mxu0 0
        %1024 = vmatprep.mubr.bf16.mxu0 0
        %1025 = vmatmul.mubr.bf16.gmra.mxu0 %v718
        %v1026 = vpop.f32.mrf.mxu0
        %v1027 = vadd.f32 %v701, %v1026
        %v1028 = vpop.f32.mrf.mxu0
        %v1029 = vpop.f32.mrf.mxu0
        %v1030 = vpop.f32.mrf.mxu0
        %1031 = vdwg.mxu0
        %v1033 = vrot.slane %v1027, 1
        %v1034 = vrot.slane %v1027, 2
        %v1035 = vrot.slane %v1027, 3
        %v1036 = vrot.slane %v1027, 4
        %v1037 = vrot.slane %v1027, 5
        %v1038 = vrot.slane %v1027, 6
        %v1039 = vrot.slane %v1027, 7
        %v1048 = vmul.f32 %v877, %v1027
        %v1049 = vmul.f32 %v879, %v1033
        %v1050 = vmul.f32 %v881, %v1034
        %v1051 = vmul.f32 %v883, %v1035
        %v1052 = vmul.f32 %v885, %v1036
        %v1053 = vmul.f32 %v887, %v1037
        %v1054 = vmul.f32 %v889, %v1038
        %v1055 = vmul.f32 %v891, %v1039
        %v1056 = vadd.f32 %v972, %v1048
        %v1057 = vadd.f32 %v973, %v1049
        %v1058 = vadd.f32 %v974, %v1050
        %v1059 = vadd.f32 %v975, %v1051
        %v1060 = vadd.f32 %v976, %v1052
        %v1061 = vadd.f32 %v977, %v1053
        %v1062 = vadd.f32 %v978, %v1054
        %v1063 = vadd.f32 %v979, %v1055
        %v1064 = vtanh.pop %v1056
        %v1065 = vtanh.pop %v1057
        %v1066 = vtanh.pop %v1058
        %v1067 = vtanh.pop %v1059
        %v1068 = vtanh.pop %v1060
        %v1069 = vtanh.pop %v1061
        %v1070 = vtanh.pop %v1062
        %v1071 = vtanh.pop %v1063
        %v1080 = vrot.slane %v1065, 7
        %vm1081 = vcmask 1041409
        %v1082 = vsel %vm1081, %v1080, %v1064
        %v1083 = vrot.slane %v1066, 6
        %vm1084 = vcmask 1042434
        %v1085 = vsel %vm1084, %v1083, %v1082
        %v1086 = vrot.slane %v1067, 5
        %vm1087 = vcmask 1043459
        %v1088 = vsel %vm1087, %v1086, %v1085
        %v1089 = vrot.slane %v1068, 4
        %vm1090 = vcmask 1044484
        %v1091 = vsel %vm1090, %v1089, %v1088
        %v1092 = vrot.slane %v1069, 3
        %vm1093 = vcmask 1045509
        %v1094 = vsel %vm1093, %v1092, %v1091
        %v1095 = vrot.slane %v1070, 2
        %vm1096 = vcmask 1046534
        %v1097 = vsel %vm1096, %v1095, %v1094
        %v1098 = vrot.slane %v1071, 1
        %vm1099 = vcmask 1047559
        %v1100 = vsel %vm1099, %v1098, %v1097
        %v1102 = vsub.f32 %v703, %v1100
        %v1104 = vrot.slane %v1102, 1
        %v1105 = vrot.slane %v1102, 2
        %v1106 = vrot.slane %v1102, 3
        %v1107 = vrot.slane %v1102, 4
        %v1108 = vrot.slane %v1102, 5
        %v1109 = vrot.slane %v1102, 6
        %v1110 = vrot.slane %v1102, 7
        %v1119 = vmul.f32 %v957, %v1102
        %v1120 = vmul.f32 %v959, %v1104
        %v1121 = vmul.f32 %v961, %v1105
        %v1122 = vmul.f32 %v963, %v1106
        %v1123 = vmul.f32 %v965, %v1107
        %v1124 = vmul.f32 %v967, %v1108
        %v1125 = vmul.f32 %v969, %v1109
        %v1126 = vmul.f32 %v971, %v1110
        %v1127 = vadd.f32 %v1064, %v1119
        %v1128 = vadd.f32 %v1065, %v1120
        %v1129 = vadd.f32 %v1066, %v1121
        %v1130 = vadd.f32 %v1067, %v1122
        %v1131 = vadd.f32 %v1068, %v1123
        %v1132 = vadd.f32 %v1069, %v1124
        %v1133 = vadd.f32 %v1070, %v1125
        %v1134 = vadd.f32 %v1071, %v1126
        %v1135 = vld [vmem:[#allocation5] sm:$0x1]
        %v1136 = vld [vmem:[#allocation5 + $0x8] sm:$0x1]
        %v1137 = vld [vmem:[#allocation5 + $0x10] sm:$0x1]
        %v1138 = vld [vmem:[#allocation5 + $0x18] sm:$0x1]
        %v1139 = vld [vmem:[#allocation5 + $0x20] sm:$0x1]
        %v1140 = vld [vmem:[#allocation5 + $0x28] sm:$0x1]
        %v1141 = vld [vmem:[#allocation5 + $0x30] sm:$0x1]
        %v1142 = vld [vmem:[#allocation5 + $0x38] sm:$0x1]
        %vm1143 = vcmp.gt.f32.partialorder %v1135, 0.0
        %vm1144 = vcmp.gt.f32.partialorder %v1136, 0.0
        %vm1145 = vcmp.gt.f32.partialorder %v1137, 0.0
        %vm1146 = vcmp.gt.f32.partialorder %v1138, 0.0
        %vm1147 = vcmp.gt.f32.partialorder %v1139, 0.0
        %vm1148 = vcmp.gt.f32.partialorder %v1140, 0.0
        %vm1149 = vcmp.gt.f32.partialorder %v1141, 0.0
        %vm1150 = vcmp.gt.f32.partialorder %v1142, 0.0
        %v1152 = vrot.slane %v703, 1
        %v1153 = vrot.slane %v703, 2
        %v1154 = vrot.slane %v703, 3
        %v1155 = vrot.slane %v703, 4
        %v1156 = vrot.slane %v703, 5
        %v1157 = vrot.slane %v703, 6
        %v1158 = vrot.slane %v703, 7
        %v1167 = vsel %vm1143, %v1127, %v703
        %v1168 = vsel %vm1144, %v1128, %v1152
        %v1169 = vsel %vm1145, %v1129, %v1153
        %v1170 = vsel %vm1146, %v1130, %v1154
        %v1171 = vsel %vm1147, %v1131, %v1155
        %v1172 = vsel %vm1148, %v1132, %v1156
        %v1173 = vsel %vm1149, %v1133, %v1157
        %v1174 = vsel %vm1150, %v1134, %v1158
        %v1175 = vpack.c.bf16 %v1167, %v1167
        %v1176 = vpack.c.bf16 %v1168, %v1168
        %v1177 = vpack.c.bf16 %v1169, %v1169
        %v1178 = vpack.c.bf16 %v1170, %v1170
        %v1179 = vpack.c.bf16 %v1171, %v1171
        %v1180 = vpack.c.bf16 %v1172, %v1172
        %v1181 = vpack.c.bf16 %v1173, %v1173
        %v1182 = vpack.c.bf16 %v1174, %v1174
        %v1191 = vunpack.c.l.b16 %v1175
        %v1192 = vunpack.c.l.b16 %v1176
        %v1193 = vunpack.c.l.b16 %v1177
        %v1194 = vunpack.c.l.b16 %v1178
        %v1195 = vunpack.c.l.b16 %v1179
        %v1196 = vunpack.c.l.b16 %v1180
        %v1197 = vunpack.c.l.b16 %v1181
        %v1198 = vunpack.c.l.b16 %v1182
        %v1199 = vrot.slane %v1192, 7
        %v1200 = vsel %vm1081, %v1199, %v1191
        %v1201 = vrot.slane %v1193, 6
        %v1202 = vsel %vm1084, %v1201, %v1200
        %v1203 = vrot.slane %v1194, 5
        %v1204 = vsel %vm1087, %v1203, %v1202
        %v1205 = vrot.slane %v1195, 4
        %v1206 = vsel %vm1090, %v1205, %v1204
        %v1207 = vrot.slane %v1196, 3
        %v1208 = vsel %vm1093, %v1207, %v1206
        %v1209 = vrot.slane %v1197, 2
        %v1210 = vsel %vm1096, %v1209, %v1208
        %v1211 = vrot.slane %v1198, 1
        %v1212 = vsel %vm1099, %v1211, %v1210
        %v1213 = vpack.c.b16 %v1212, %v1212
        %v1215 = vsel %vm373, %v1213, 0
        %1217 = vmatprep.subr.bf16.mxu0 0
        %1218 = vmatpush1.bf16.msra.mxu0 0
        %1219 = vmatprep.subr.bf16.mxu0 0
        %1220 = vmatpush1.bf16.msra.mxu0 0
        %1221 = vmatprep.subr.bf16.mxu0 0
        %1222 = vmatpush1.bf16.msra.mxu0 0
        %1223 = vmatprep.subr.bf16.mxu0 0
        %1224 = vmatpush1.bf16.msra.mxu0 0
        %1225 = vmatprep.subr.bf16.mxu0 0
        %1226 = vmatpush1.bf16.msra.mxu0 0
        %1227 = vmatprep.subr.bf16.mxu0 0
        %1228 = vmatpush1.bf16.msra.mxu0 0
        %1229 = vmatprep.subr.bf16.mxu0 0
        %1230 = vmatpush1.bf16.msra.mxu0 %v714
        %1231 = vmatprep.subr.bf16.mxu0 0
        %1232 = vmatpush1.bf16.msra.mxu0 %v713
        %1233 = vmatprep.subr.bf16.mxu0 0
        %1234 = vmatpush2.bf16.msra.mxu0 0
        %1235 = vmatprep.subr.bf16.mxu0 0
        %1236 = vmatpush2.bf16.msra.mxu0 0
        %1237 = vmatprep.subr.bf16.mxu0 0
        %1238 = vmatpush2.bf16.msra.mxu0 0
        %1239 = vmatprep.subr.bf16.mxu0 0
        %1240 = vmatpush2.bf16.msra.mxu0 0
        %1241 = vmatprep.subr.bf16.mxu0 0
        %1242 = vmatpush2.bf16.msra.mxu0 0
        %1243 = vmatprep.subr.bf16.mxu0 0
        %1244 = vmatpush2.bf16.msra.mxu0 0
        %1245 = vmatprep.subr.bf16.mxu0 0
        %1246 = vmatpush2.bf16.msra.mxu0 0
        %1247 = vmatprep.subr.bf16.mxu0 0
        %1248 = vmatpush2.bf16.msra.mxu0 0
        %1249 = vmatprep.mubr.bf16.mxu0 0
        %1250 = vmatmul.mubr.bf16.gmra.mxu0 %v1215
        %v1251 = vpop.f32.mrf.mxu0
        %v1252 = vadd.f32 0.0, %v1251
        %v1253 = vpop.f32.mrf.mxu0
        %v1254 = vpop.f32.mrf.mxu0
        %v1255 = vpop.f32.mrf.mxu0
        %1256 = vdwg.mxu0
        %1257 = vmatprep.subr.bf16.mxu0 0
        %1258 = vmatpush1.bf16.msra.mxu0 0
        %1259 = vmatprep.subr.bf16.mxu0 0
        %1260 = vmatpush1.bf16.msra.mxu0 0
        %1261 = vmatprep.subr.bf16.mxu0 0
        %1262 = vmatpush1.bf16.msra.mxu0 0
        %1263 = vmatprep.subr.bf16.mxu0 0
        %1264 = vmatpush1.bf16.msra.mxu0 0
        %1265 = vmatprep.subr.bf16.mxu0 0
        %1266 = vmatpush1.bf16.msra.mxu0 0
        %1267 = vmatprep.subr.bf16.mxu0 0
        %1268 = vmatpush1.bf16.msra.mxu0 0
        %1269 = vmatprep.subr.bf16.mxu0 0
        %1270 = vmatpush1.bf16.msra.mxu0 %v769
        %1271 = vmatprep.subr.bf16.mxu0 0
        %1272 = vmatpush1.bf16.msra.mxu0 %v768
        %1273 = vmatprep.subr.bf16.mxu0 0
        %1274 = vmatpush2.bf16.msra.mxu0 0
        %1275 = vmatprep.subr.bf16.mxu0 0
        %1276 = vmatpush2.bf16.msra.mxu0 0
        %1277 = vmatprep.subr.bf16.mxu0 0
        %1278 = vmatpush2.bf16.msra.mxu0 0
        %1279 = vmatprep.subr.bf16.mxu0 0
        %1280 = vmatpush2.bf16.msra.mxu0 0
        %1281 = vmatprep.subr.bf16.mxu0 0
        %1282 = vmatpush2.bf16.msra.mxu0 0
        %1283 = vmatprep.subr.bf16.mxu0 0
        %1284 = vmatpush2.bf16.msra.mxu0 0
        %1285 = vmatprep.subr.bf16.mxu0 0
        %1286 = vmatpush2.bf16.msra.mxu0 0
        %1287 = vmatprep.subr.bf16.mxu0 0
        %1288 = vmatpush2.bf16.msra.mxu0 0
        %1289 = vmatprep.mubr.bf16.mxu0 0
        %1290 = vmatmul.mubr.bf16.gmra.mxu0 %v1215
        %v1291 = vpop.f32.mrf.mxu0
        %v1292 = vadd.f32 0.0, %v1291
        %v1293 = vpop.f32.mrf.mxu0
        %v1294 = vpop.f32.mrf.mxu0
        %v1295 = vpop.f32.mrf.mxu0
        %1296 = vdwg.mxu0
        %v1297 = vld [vmem:[#allocation2 + $0x1] sm:$0x1]
        %v1298 = vld [vmem:[#allocation2 + $0x9] sm:$0x1]
        %v1299 = vld [vmem:[#allocation2 + $0x11] sm:$0x1]
        %v1300 = vld [vmem:[#allocation2 + $0x19] sm:$0x1]
        %v1301 = vld [vmem:[#allocation2 + $0x21] sm:$0x1]
        %v1302 = vld [vmem:[#allocation2 + $0x29] sm:$0x1]
        %v1303 = vld [vmem:[#allocation2 + $0x31] sm:$0x1]
        %v1304 = vld [vmem:[#allocation2 + $0x39] sm:$0x1]
        %v1306 = vrot.slane %v1252, 1
        %v1307 = vrot.slane %v1252, 2
        %v1308 = vrot.slane %v1252, 3
        %v1309 = vrot.slane %v1252, 4
        %v1310 = vrot.slane %v1252, 5
        %v1311 = vrot.slane %v1252, 6
        %v1312 = vrot.slane %v1252, 7
        %v1321 = vadd.f32 %v1297, %v1252
        %v1322 = vadd.f32 %v1298, %v1306
        %v1323 = vadd.f32 %v1299, %v1307
        %v1324 = vadd.f32 %v1300, %v1308
        %v1325 = vadd.f32 %v1301, %v1309
        %v1326 = vadd.f32 %v1302, %v1310
        %v1327 = vadd.f32 %v1303, %v1311
        %v1328 = vadd.f32 %v1304, %v1312
        %v1329 = vxor.u32 %v1321, 2147483648
        %v1330 = vxor.u32 %v1322, 2147483648
        %v1331 = vxor.u32 %v1323, 2147483648
        %v1332 = vxor.u32 %v1324, 2147483648
        %v1333 = vxor.u32 %v1325, 2147483648
        %v1334 = vxor.u32 %v1326, 2147483648
        %v1335 = vxor.u32 %v1327, 2147483648
        %v1336 = vxor.u32 %v1328, 2147483648
        %v1337 = vmul.f32 %v1329, 1.442695
        %v1338 = vpow.pop %v1337
        %v1339 = vmul.f32 %v1330, 1.442695
        %v1340 = vpow.pop %v1339
        %v1341 = vmul.f32 %v1331, 1.442695
        %v1342 = vpow.pop %v1341
        %v1343 = vmul.f32 %v1332, 1.442695
        %v1344 = vpow.pop %v1343
        %v1345 = vmul.f32 %v1333, 1.442695
        %v1346 = vpow.pop %v1345
        %v1347 = vmul.f32 %v1334, 1.442695
        %v1348 = vpow.pop %v1347
        %v1349 = vmul.f32 %v1335, 1.442695
        %v1350 = vpow.pop %v1349
        %v1351 = vmul.f32 %v1336, 1.442695
        %v1352 = vpow.pop %v1351
        %v1353 = vadd.f32 %v1338, 1.0
        %v1354 = vadd.f32 %v1340, 1.0
        %v1355 = vadd.f32 %v1342, 1.0
        %v1356 = vadd.f32 %v1344, 1.0
        %v1357 = vadd.f32 %v1346, 1.0
        %v1358 = vadd.f32 %v1348, 1.0
        %v1359 = vadd.f32 %v1350, 1.0
        %v1360 = vadd.f32 %v1352, 1.0
        %v1361 = vrcp.pop %v1353
        %v1362 = vmul.f32 1.0, %v1361
        %v1363 = vrcp.pop %v1354
        %v1364 = vmul.f32 1.0, %v1363
        %v1365 = vrcp.pop %v1355
        %v1366 = vmul.f32 1.0, %v1365
        %v1367 = vrcp.pop %v1356
        %v1368 = vmul.f32 1.0, %v1367
        %v1369 = vrcp.pop %v1357
        %v1370 = vmul.f32 1.0, %v1369
        %v1371 = vrcp.pop %v1358
        %v1372 = vmul.f32 1.0, %v1371
        %v1373 = vrcp.pop %v1359
        %v1374 = vmul.f32 1.0, %v1373
        %v1375 = vrcp.pop %v1360
        %v1376 = vmul.f32 1.0, %v1375
        %v1377 = vld [vmem:[#allocation3 + $0x1] sm:$0x1]
        %v1378 = vld [vmem:[#allocation3 + $0x9] sm:$0x1]
        %v1379 = vld [vmem:[#allocation3 + $0x11] sm:$0x1]
        %v1380 = vld [vmem:[#allocation3 + $0x19] sm:$0x1]
        %v1381 = vld [vmem:[#allocation3 + $0x21] sm:$0x1]
        %v1382 = vld [vmem:[#allocation3 + $0x29] sm:$0x1]
        %v1383 = vld [vmem:[#allocation3 + $0x31] sm:$0x1]
        %v1384 = vld [vmem:[#allocation3 + $0x39] sm:$0x1]
        %v1386 = vrot.slane %v1292, 1
        %v1387 = vrot.slane %v1292, 2
        %v1388 = vrot.slane %v1292, 3
        %v1389 = vrot.slane %v1292, 4
        %v1390 = vrot.slane %v1292, 5
        %v1391 = vrot.slane %v1292, 6
        %v1392 = vrot.slane %v1292, 7
        %v1401 = vadd.f32 %v1377, %v1292
        %v1402 = vadd.f32 %v1378, %v1386
        %v1403 = vadd.f32 %v1379, %v1387
        %v1404 = vadd.f32 %v1380, %v1388
        %v1405 = vadd.f32 %v1381, %v1389
        %v1406 = vadd.f32 %v1382, %v1390
        %v1407 = vadd.f32 %v1383, %v1391
        %v1408 = vadd.f32 %v1384, %v1392
        %v1409 = vxor.u32 %v1401, 2147483648
        %v1410 = vxor.u32 %v1402, 2147483648
        %v1411 = vxor.u32 %v1403, 2147483648
        %v1412 = vxor.u32 %v1404, 2147483648
        %v1413 = vxor.u32 %v1405, 2147483648
        %v1414 = vxor.u32 %v1406, 2147483648
        %v1415 = vxor.u32 %v1407, 2147483648
        %v1416 = vxor.u32 %v1408, 2147483648
        %v1417 = vmul.f32 %v1409, 1.442695
        %v1418 = vpow.pop %v1417
        %v1419 = vmul.f32 %v1410, 1.442695
        %v1420 = vpow.pop %v1419
        %v1421 = vmul.f32 %v1411, 1.442695
        %v1422 = vpow.pop %v1421
        %v1423 = vmul.f32 %v1412, 1.442695
        %v1424 = vpow.pop %v1423
        %v1425 = vmul.f32 %v1413, 1.442695
        %v1426 = vpow.pop %v1425
        %v1427 = vmul.f32 %v1414, 1.442695
        %v1428 = vpow.pop %v1427
        %v1429 = vmul.f32 %v1415, 1.442695
        %v1430 = vpow.pop %v1429
        %v1431 = vmul.f32 %v1416, 1.442695
        %v1432 = vpow.pop %v1431
        %v1433 = vadd.f32 %v1418, 1.0
        %v1434 = vadd.f32 %v1420, 1.0
        %v1435 = vadd.f32 %v1422, 1.0
        %v1436 = vadd.f32 %v1424, 1.0
        %v1437 = vadd.f32 %v1426, 1.0
        %v1438 = vadd.f32 %v1428, 1.0
        %v1439 = vadd.f32 %v1430, 1.0
        %v1440 = vadd.f32 %v1432, 1.0
        %v1441 = vrcp.pop %v1433
        %v1442 = vmul.f32 1.0, %v1441
        %v1443 = vrcp.pop %v1434
        %v1444 = vmul.f32 1.0, %v1443
        %v1445 = vrcp.pop %v1435
        %v1446 = vmul.f32 1.0, %v1445
        %v1447 = vrcp.pop %v1436
        %v1448 = vmul.f32 1.0, %v1447
        %v1449 = vrcp.pop %v1437
        %v1450 = vmul.f32 1.0, %v1449
        %v1451 = vrcp.pop %v1438
        %v1452 = vmul.f32 1.0, %v1451
        %v1453 = vrcp.pop %v1439
        %v1454 = vmul.f32 1.0, %v1453
        %v1455 = vrcp.pop %v1440
        %v1456 = vmul.f32 1.0, %v1455
        %v1457 = vld [vmem:[#allocation4 + $0x1] sm:$0x1]
        %v1458 = vld [vmem:[#allocation4 + $0x9] sm:$0x1]
        %v1459 = vld [vmem:[#allocation4 + $0x11] sm:$0x1]
        %v1460 = vld [vmem:[#allocation4 + $0x19] sm:$0x1]
        %v1461 = vld [vmem:[#allocation4 + $0x21] sm:$0x1]
        %v1462 = vld [vmem:[#allocation4 + $0x29] sm:$0x1]
        %v1463 = vld [vmem:[#allocation4 + $0x31] sm:$0x1]
        %v1464 = vld [vmem:[#allocation4 + $0x39] sm:$0x1]
        %1465 = vmatprep.subr.bf16.mxu0 0
        %1466 = vmatpush1.bf16.msra.mxu0 0
        %1467 = vmatprep.subr.bf16.mxu0 0
        %1468 = vmatpush1.bf16.msra.mxu0 0
        %1469 = vmatprep.subr.bf16.mxu0 0
        %1470 = vmatpush1.bf16.msra.mxu0 0
        %1471 = vmatprep.subr.bf16.mxu0 0
        %1472 = vmatpush1.bf16.msra.mxu0 0
        %1473 = vmatprep.subr.bf16.mxu0 0
        %1474 = vmatpush1.bf16.msra.mxu0 0
        %1475 = vmatprep.subr.bf16.mxu0 0
        %1476 = vmatpush1.bf16.msra.mxu0 0
        %1477 = vmatprep.subr.bf16.mxu0 0
        %1478 = vmatpush1.bf16.msra.mxu0 %v989
        %1479 = vmatprep.subr.bf16.mxu0 0
        %1480 = vmatpush1.bf16.msra.mxu0 %v988
        %1481 = vmatprep.subr.bf16.mxu0 0
        %1482 = vmatpush2.bf16.msra.mxu0 0
        %1483 = vmatprep.subr.bf16.mxu0 0
        %1484 = vmatpush2.bf16.msra.mxu0 0
        %1485 = vmatprep.subr.bf16.mxu0 0
        %1486 = vmatpush2.bf16.msra.mxu0 0
        %1487 = vmatprep.subr.bf16.mxu0 0
        %1488 = vmatpush2.bf16.msra.mxu0 0
        %1489 = vmatprep.subr.bf16.mxu0 0
        %1490 = vmatpush2.bf16.msra.mxu0 0
        %1491 = vmatprep.subr.bf16.mxu0 0
        %1492 = vmatpush2.bf16.msra.mxu0 0
        %1493 = vmatprep.subr.bf16.mxu0 0
        %1494 = vmatpush2.bf16.msra.mxu0 0
        %1495 = vmatprep.subr.bf16.mxu0 0
        %1496 = vmatpush2.bf16.msra.mxu0 0
        %1497 = vmatprep.mubr.bf16.mxu0 0
        %1498 = vmatmul.mubr.bf16.gmra.mxu0 %v1215
        %v1499 = vpop.f32.mrf.mxu0
        %v1500 = vadd.f32 %v701, %v1499
        %v1501 = vpop.f32.mrf.mxu0
        %v1502 = vpop.f32.mrf.mxu0
        %v1503 = vpop.f32.mrf.mxu0
        %1504 = vdwg.mxu0
        %v1506 = vrot.slane %v1500, 1
        %v1507 = vrot.slane %v1500, 2
        %v1508 = vrot.slane %v1500, 3
        %v1509 = vrot.slane %v1500, 4
        %v1510 = vrot.slane %v1500, 5
        %v1511 = vrot.slane %v1500, 6
        %v1512 = vrot.slane %v1500, 7
        %v1521 = vmul.f32 %v1362, %v1500
        %v1522 = vmul.f32 %v1364, %v1506
        %v1523 = vmul.f32 %v1366, %v1507
        %v1524 = vmul.f32 %v1368, %v1508
        %v1525 = vmul.f32 %v1370, %v1509
        %v1526 = vmul.f32 %v1372, %v1510
        %v1527 = vmul.f32 %v1374, %v1511
        %v1528 = vmul.f32 %v1376, %v1512
        %v1529 = vadd.f32 %v1457, %v1521
        %v1530 = vadd.f32 %v1458, %v1522
        %v1531 = vadd.f32 %v1459, %v1523
        %v1532 = vadd.f32 %v1460, %v1524
        %v1533 = vadd.f32 %v1461, %v1525
        %v1534 = vadd.f32 %v1462, %v1526
        %v1535 = vadd.f32 %v1463, %v1527
        %v1536 = vadd.f32 %v1464, %v1528
        %v1537 = vtanh.pop %v1529
        %v1538 = vtanh.pop %v1530
        %v1539 = vtanh.pop %v1531
        %v1540 = vtanh.pop %v1532
        %v1541 = vtanh.pop %v1533
        %v1542 = vtanh.pop %v1534
        %v1543 = vtanh.pop %v1535
        %v1544 = vtanh.pop %v1536
        %v1545 = vsub.f32 %v1167, %v1537
        %v1546 = vsub.f32 %v1168, %v1538
        %v1547 = vsub.f32 %v1169, %v1539
        %v1548 = vsub.f32 %v1170, %v1540
        %v1549 = vsub.f32 %v1171, %v1541
        %v1550 = vsub.f32 %v1172, %v1542
        %v1551 = vsub.f32 %v1173, %v1543
        %v1552 = vsub.f32 %v1174, %v1544
        %v1553 = vmul.f32 %v1442, %v1545
        %v1554 = vmul.f32 %v1444, %v1546
        %v1555 = vmul.f32 %v1446, %v1547
        %v1556 = vmul.f32 %v1448, %v1548
        %v1557 = vmul.f32 %v1450, %v1549
        %v1558 = vmul.f32 %v1452, %v1550
        %v1559 = vmul.f32 %v1454, %v1551
        %v1560 = vmul.f32 %v1456, %v1552
        %v1561 = vadd.f32 %v1537, %v1553
        %v1562 = vadd.f32 %v1538, %v1554
        %v1563 = vadd.f32 %v1539, %v1555
        %v1564 = vadd.f32 %v1540, %v1556
        %v1565 = vadd.f32 %v1541, %v1557
        %v1566 = vadd.f32 %v1542, %v1558
        %v1567 = vadd.f32 %v1543, %v1559
        %v1568 = vadd.f32 %v1544, %v1560
        %v1569 = vld [vmem:[#allocation5 + $0x1] sm:$0x1]
        %v1570 = vld [vmem:[#allocation5 + $0x9] sm:$0x1]
        %v1571 = vld [vmem:[#allocation5 + $0x11] sm:$0x1]
        %v1572 = vld [vmem:[#allocation5 + $0x19] sm:$0x1]
        %v1573 = vld [vmem:[#allocation5 + $0x21] sm:$0x1]
        %v1574 = vld [vmem:[#allocation5 + $0x29] sm:$0x1]
        %v1575 = vld [vmem:[#allocation5 + $0x31] sm:$0x1]
        %v1576 = vld [vmem:[#allocation5 + $0x39] sm:$0x1]
        %vm1577 = vcmp.gt.f32.partialorder %v1569, 0.0
        %vm1578 = vcmp.gt.f32.partialorder %v1570, 0.0
        %vm1579 = vcmp.gt.f32.partialorder %v1571, 0.0
        %vm1580 = vcmp.gt.f32.partialorder %v1572, 0.0
        %vm1581 = vcmp.gt.f32.partialorder %v1573, 0.0
        %vm1582 = vcmp.gt.f32.partialorder %v1574, 0.0
        %vm1583 = vcmp.gt.f32.partialorder %v1575, 0.0
        %vm1584 = vcmp.gt.f32.partialorder %v1576, 0.0
        %v1585 = vsel %vm1577, %v1561, %v1167
        %v1586 = vsel %vm1578, %v1562, %v1168
        %v1587 = vsel %vm1579, %v1563, %v1169
        %v1588 = vsel %vm1580, %v1564, %v1170
        %v1589 = vsel %vm1581, %v1565, %v1171
        %v1590 = vsel %vm1582, %v1566, %v1172
        %v1591 = vsel %vm1583, %v1567, %v1173
        %v1592 = vsel %vm1584, %v1568, %v1174
        %v1593 = vpack.c.bf16 %v1585, %v1585
        %v1594 = vpack.c.bf16 %v1586, %v1586
        %v1595 = vpack.c.bf16 %v1587, %v1587
        %v1596 = vpack.c.bf16 %v1588, %v1588
        %v1597 = vpack.c.bf16 %v1589, %v1589
        %v1598 = vpack.c.bf16 %v1590, %v1590
        %v1599 = vpack.c.bf16 %v1591, %v1591
        %v1600 = vpack.c.bf16 %v1592, %v1592
        %v1609 = vunpack.c.l.b16 %v1593
        %v1610 = vunpack.c.l.b16 %v1594
        %v1611 = vunpack.c.l.b16 %v1595
        %v1612 = vunpack.c.l.b16 %v1596
        %v1613 = vunpack.c.l.b16 %v1597
        %v1614 = vunpack.c.l.b16 %v1598
        %v1615 = vunpack.c.l.b16 %v1599
        %v1616 = vunpack.c.l.b16 %v1600
        %v1617 = vrot.slane %v1610, 7
        %v1618 = vsel %vm1081, %v1617, %v1609
        %v1619 = vrot.slane %v1611, 6
        %v1620 = vsel %vm1084, %v1619, %v1618
        %v1621 = vrot.slane %v1612, 5
        %v1622 = vsel %vm1087, %v1621, %v1620
        %v1623 = vrot.slane %v1613, 4
        %v1624 = vsel %vm1090, %v1623, %v1622
        %v1625 = vrot.slane %v1614, 3
        %v1626 = vsel %vm1093, %v1625, %v1624
        %v1627 = vrot.slane %v1615, 2
        %v1628 = vsel %vm1096, %v1627, %v1626
        %v1629 = vrot.slane %v1616, 1
        %v1630 = vsel %vm1099, %v1629, %v1628
        %v1631 = vpack.c.b16 %v1630, %v1630
        %v1633 = vsel %vm373, %v1631, 0
        %1635 = vmatprep.subr.bf16.mxu0 0
        %1636 = vmatpush1.bf16.msra.mxu0 0
        %1637 = vmatprep.subr.bf16.mxu0 0
        %1638 = vmatpush1.bf16.msra.mxu0 0
        %1639 = vmatprep.subr.bf16.mxu0 0
        %1640 = vmatpush1.bf16.msra.mxu0 0
        %1641 = vmatprep.subr.bf16.mxu0 0
        %1642 = vmatpush1.bf16.msra.mxu0 0
        %1643 = vmatprep.subr.bf16.mxu0 0
        %1644 = vmatpush1.bf16.msra.mxu0 0
        %1645 = vmatprep.subr.bf16.mxu0 0
        %1646 = vmatpush1.bf16.msra.mxu0 0
        %1647 = vmatprep.subr.bf16.mxu0 0
        %1648 = vmatpush1.bf16.msra.mxu0 %v714
        %1649 = vmatprep.subr.bf16.mxu0 0
        %1650 = vmatpush1.bf16.msra.mxu0 %v713
        %1651 = vmatprep.subr.bf16.mxu0 0
        %1652 = vmatpush2.bf16.msra.mxu0 0
        %1653 = vmatprep.subr.bf16.mxu0 0
        %1654 = vmatpush2.bf16.msra.mxu0 0
        %1655 = vmatprep.subr.bf16.mxu0 0
        %1656 = vmatpush2.bf16.msra.mxu0 0
        %1657 = vmatprep.subr.bf16.mxu0 0
        %1658 = vmatpush2.bf16.msra.mxu0 0
        %1659 = vmatprep.subr.bf16.mxu0 0
        %1660 = vmatpush2.bf16.msra.mxu0 0
        %1661 = vmatprep.subr.bf16.mxu0 0
        %1662 = vmatpush2.bf16.msra.mxu0 0
        %1663 = vmatprep.subr.bf16.mxu0 0
        %1664 = vmatpush2.bf16.msra.mxu0 0
        %1665 = vmatprep.subr.bf16.mxu0 0
        %1666 = vmatpush2.bf16.msra.mxu0 0
        %1667 = vmatprep.mubr.bf16.mxu0 0
        %1668 = vmatmul.mubr.bf16.gmra.mxu0 %v1633
        %v1669 = vpop.f32.mrf.mxu0
        %v1670 = vadd.f32 0.0, %v1669
        %v1671 = vpop.f32.mrf.mxu0
        %v1672 = vpop.f32.mrf.mxu0
        %v1673 = vpop.f32.mrf.mxu0
        %1674 = vdwg.mxu0
        %1675 = vmatprep.subr.bf16.mxu0 0
        %1676 = vmatpush1.bf16.msra.mxu0 0
        %1677 = vmatprep.subr.bf16.mxu0 0
        %1678 = vmatpush1.bf16.msra.mxu0 0
        %1679 = vmatprep.subr.bf16.mxu0 0
        %1680 = vmatpush1.bf16.msra.mxu0 0
        %1681 = vmatprep.subr.bf16.mxu0 0
        %1682 = vmatpush1.bf16.msra.mxu0 0
        %1683 = vmatprep.subr.bf16.mxu0 0
        %1684 = vmatpush1.bf16.msra.mxu0 0
        %1685 = vmatprep.subr.bf16.mxu0 0
        %1686 = vmatpush1.bf16.msra.mxu0 0
        %1687 = vmatprep.subr.bf16.mxu0 0
        %1688 = vmatpush1.bf16.msra.mxu0 %v769
        %1689 = vmatprep.subr.bf16.mxu0 0
        %1690 = vmatpush1.bf16.msra.mxu0 %v768
        %1691 = vmatprep.subr.bf16.mxu0 0
        %1692 = vmatpush2.bf16.msra.mxu0 0
        %1693 = vmatprep.subr.bf16.mxu0 0
        %1694 = vmatpush2.bf16.msra.mxu0 0
        %1695 = vmatprep.subr.bf16.mxu0 0
        %1696 = vmatpush2.bf16.msra.mxu0 0
        %1697 = vmatprep.subr.bf16.mxu0 0
        %1698 = vmatpush2.bf16.msra.mxu0 0
        %1699 = vmatprep.subr.bf16.mxu0 0
        %1700 = vmatpush2.bf16.msra.mxu0 0
        %1701 = vmatprep.subr.bf16.mxu0 0
        %1702 = vmatpush2.bf16.msra.mxu0 0
        %1703 = vmatprep.subr.bf16.mxu0 0
        %1704 = vmatpush2.bf16.msra.mxu0 0
        %1705 = vmatprep.subr.bf16.mxu0 0
        %1706 = vmatpush2.bf16.msra.mxu0 0
        %1707 = vmatprep.mubr.bf16.mxu0 0
        %1708 = vmatmul.mubr.bf16.gmra.mxu0 %v1633
        %v1709 = vpop.f32.mrf.mxu0
        %v1710 = vadd.f32 0.0, %v1709
        %v1711 = vpop.f32.mrf.mxu0
        %v1712 = vpop.f32.mrf.mxu0
        %v1713 = vpop.f32.mrf.mxu0
        %1714 = vdwg.mxu0
        %v1715 = vld [vmem:[#allocation2 + $0x2] sm:$0x1]
        %v1716 = vld [vmem:[#allocation2 + $0xa] sm:$0x1]
        %v1717 = vld [vmem:[#allocation2 + $0x12] sm:$0x1]
        %v1718 = vld [vmem:[#allocation2 + $0x1a] sm:$0x1]
        %v1719 = vld [vmem:[#allocation2 + $0x22] sm:$0x1]
        %v1720 = vld [vmem:[#allocation2 + $0x2a] sm:$0x1]
        %v1721 = vld [vmem:[#allocation2 + $0x32] sm:$0x1]
        %v1722 = vld [vmem:[#allocation2 + $0x3a] sm:$0x1]
        %v1724 = vrot.slane %v1670, 1
        %v1725 = vrot.slane %v1670, 2
        %v1726 = vrot.slane %v1670, 3
        %v1727 = vrot.slane %v1670, 4
        %v1728 = vrot.slane %v1670, 5
        %v1729 = vrot.slane %v1670, 6
        %v1730 = vrot.slane %v1670, 7
        %v1739 = vadd.f32 %v1715, %v1670
        %v1740 = vadd.f32 %v1716, %v1724
        %v1741 = vadd.f32 %v1717, %v1725
        %v1742 = vadd.f32 %v1718, %v1726
        %v1743 = vadd.f32 %v1719, %v1727
        %v1744 = vadd.f32 %v1720, %v1728
        %v1745 = vadd.f32 %v1721, %v1729
        %v1746 = vadd.f32 %v1722, %v1730
        %v1747 = vxor.u32 %v1739, 2147483648
        %v1748 = vxor.u32 %v1740, 2147483648
        %v1749 = vxor.u32 %v1741, 2147483648
        %v1750 = vxor.u32 %v1742, 2147483648
        %v1751 = vxor.u32 %v1743, 2147483648
        %v1752 = vxor.u32 %v1744, 2147483648
        %v1753 = vxor.u32 %v1745, 2147483648
        %v1754 = vxor.u32 %v1746, 2147483648
        %v1755 = vmul.f32 %v1747, 1.442695
        %v1756 = vpow.pop %v1755
        %v1757 = vmul.f32 %v1748, 1.442695
        %v1758 = vpow.pop %v1757
        %v1759 = vmul.f32 %v1749, 1.442695
        %v1760 = vpow.pop %v1759
        %v1761 = vmul.f32 %v1750, 1.442695
        %v1762 = vpow.pop %v1761
        %v1763 = vmul.f32 %v1751, 1.442695
        %v1764 = vpow.pop %v1763
        %v1765 = vmul.f32 %v1752, 1.442695
        %v1766 = vpow.pop %v1765
        %v1767 = vmul.f32 %v1753, 1.442695
        %v1768 = vpow.pop %v1767
        %v1769 = vmul.f32 %v1754, 1.442695
        %v1770 = vpow.pop %v1769
        %v1771 = vadd.f32 %v1756, 1.0
        %v1772 = vadd.f32 %v1758, 1.0
        %v1773 = vadd.f32 %v1760, 1.0
        %v1774 = vadd.f32 %v1762, 1.0
        %v1775 = vadd.f32 %v1764, 1.0
        %v1776 = vadd.f32 %v1766, 1.0
        %v1777 = vadd.f32 %v1768, 1.0
        %v1778 = vadd.f32 %v1770, 1.0
        %v1779 = vrcp.pop %v1771
        %v1780 = vmul.f32 1.0, %v1779
        %v1781 = vrcp.pop %v1772
        %v1782 = vmul.f32 1.0, %v1781
        %v1783 = vrcp.pop %v1773
        %v1784 = vmul.f32 1.0, %v1783
        %v1785 = vrcp.pop %v1774
        %v1786 = vmul.f32 1.0, %v1785
        %v1787 = vrcp.pop %v1775
        %v1788 = vmul.f32 1.0, %v1787
        %v1789 = vrcp.pop %v1776
        %v1790 = vmul.f32 1.0, %v1789
        %v1791 = vrcp.pop %v1777
        %v1792 = vmul.f32 1.0, %v1791
        %v1793 = vrcp.pop %v1778
        %v1794 = vmul.f32 1.0, %v1793
        %v1795 = vld [vmem:[#allocation3 + $0x2] sm:$0x1]
        %v1796 = vld [vmem:[#allocation3 + $0xa] sm:$0x1]
        %v1797 = vld [vmem:[#allocation3 + $0x12] sm:$0x1]
        %v1798 = vld [vmem:[#allocation3 + $0x1a] sm:$0x1]
        %v1799 = vld [vmem:[#allocation3 + $0x22] sm:$0x1]
        %v1800 = vld [vmem:[#allocation3 + $0x2a] sm:$0x1]
        %v1801 = vld [vmem:[#allocation3 + $0x32] sm:$0x1]
        %v1802 = vld [vmem:[#allocation3 + $0x3a] sm:$0x1]
        %v1804 = vrot.slane %v1710, 1
        %v1805 = vrot.slane %v1710, 2
        %v1806 = vrot.slane %v1710, 3
        %v1807 = vrot.slane %v1710, 4
        %v1808 = vrot.slane %v1710, 5
        %v1809 = vrot.slane %v1710, 6
        %v1810 = vrot.slane %v1710, 7
        %v1819 = vadd.f32 %v1795, %v1710
        %v1820 = vadd.f32 %v1796, %v1804
        %v1821 = vadd.f32 %v1797, %v1805
        %v1822 = vadd.f32 %v1798, %v1806
        %v1823 = vadd.f32 %v1799, %v1807
        %v1824 = vadd.f32 %v1800, %v1808
        %v1825 = vadd.f32 %v1801, %v1809
        %v1826 = vadd.f32 %v1802, %v1810
        %v1827 = vxor.u32 %v1819, 2147483648
        %v1828 = vxor.u32 %v1820, 2147483648
        %v1829 = vxor.u32 %v1821, 2147483648
        %v1830 = vxor.u32 %v1822, 2147483648
        %v1831 = vxor.u32 %v1823, 2147483648
        %v1832 = vxor.u32 %v1824, 2147483648
        %v1833 = vxor.u32 %v1825, 2147483648
        %v1834 = vxor.u32 %v1826, 2147483648
        %v1835 = vmul.f32 %v1827, 1.442695
        %v1836 = vpow.pop %v1835
        %v1837 = vmul.f32 %v1828, 1.442695
        %v1838 = vpow.pop %v1837
        %v1839 = vmul.f32 %v1829, 1.442695
        %v1840 = vpow.pop %v1839
        %v1841 = vmul.f32 %v1830, 1.442695
        %v1842 = vpow.pop %v1841
        %v1843 = vmul.f32 %v1831, 1.442695
        %v1844 = vpow.pop %v1843
        %v1845 = vmul.f32 %v1832, 1.442695
        %v1846 = vpow.pop %v1845
        %v1847 = vmul.f32 %v1833, 1.442695
        %v1848 = vpow.pop %v1847
        %v1849 = vmul.f32 %v1834, 1.442695
        %v1850 = vpow.pop %v1849
        %v1851 = vadd.f32 %v1836, 1.0
        %v1852 = vadd.f32 %v1838, 1.0
        %v1853 = vadd.f32 %v1840, 1.0
        %v1854 = vadd.f32 %v1842, 1.0
        %v1855 = vadd.f32 %v1844, 1.0
        %v1856 = vadd.f32 %v1846, 1.0
        %v1857 = vadd.f32 %v1848, 1.0
        %v1858 = vadd.f32 %v1850, 1.0
        %v1859 = vrcp.pop %v1851
        %v1860 = vmul.f32 1.0, %v1859
        %v1861 = vrcp.pop %v1852
        %v1862 = vmul.f32 1.0, %v1861
        %v1863 = vrcp.pop %v1853
        %v1864 = vmul.f32 1.0, %v1863
        %v1865 = vrcp.pop %v1854
        %v1866 = vmul.f32 1.0, %v1865
        %v1867 = vrcp.pop %v1855
        %v1868 = vmul.f32 1.0, %v1867
        %v1869 = vrcp.pop %v1856
        %v1870 = vmul.f32 1.0, %v1869
        %v1871 = vrcp.pop %v1857
        %v1872 = vmul.f32 1.0, %v1871
        %v1873 = vrcp.pop %v1858
        %v1874 = vmul.f32 1.0, %v1873
        %v1875 = vld [vmem:[#allocation4 + $0x2] sm:$0x1]
        %v1876 = vld [vmem:[#allocation4 + $0xa] sm:$0x1]
        %v1877 = vld [vmem:[#allocation4 + $0x12] sm:$0x1]
        %v1878 = vld [vmem:[#allocation4 + $0x1a] sm:$0x1]
        %v1879 = vld [vmem:[#allocation4 + $0x22] sm:$0x1]
        %v1880 = vld [vmem:[#allocation4 + $0x2a] sm:$0x1]
        %v1881 = vld [vmem:[#allocation4 + $0x32] sm:$0x1]
        %v1882 = vld [vmem:[#allocation4 + $0x3a] sm:$0x1]
        %1883 = vmatprep.subr.bf16.mxu0 0
        %1884 = vmatpush1.bf16.msra.mxu0 0
        %1885 = vmatprep.subr.bf16.mxu0 0
        %1886 = vmatpush1.bf16.msra.mxu0 0
        %1887 = vmatprep.subr.bf16.mxu0 0
        %1888 = vmatpush1.bf16.msra.mxu0 0
        %1889 = vmatprep.subr.bf16.mxu0 0
        %1890 = vmatpush1.bf16.msra.mxu0 0
        %1891 = vmatprep.subr.bf16.mxu0 0
        %1892 = vmatpush1.bf16.msra.mxu0 0
        %1893 = vmatprep.subr.bf16.mxu0 0
        %1894 = vmatpush1.bf16.msra.mxu0 0
        %1895 = vmatprep.subr.bf16.mxu0 0
        %1896 = vmatpush1.bf16.msra.mxu0 %v989
        %1897 = vmatprep.subr.bf16.mxu0 0
        %1898 = vmatpush1.bf16.msra.mxu0 %v988
        %1899 = vmatprep.subr.bf16.mxu0 0
        %1900 = vmatpush2.bf16.msra.mxu0 0
        %1901 = vmatprep.subr.bf16.mxu0 0
        %1902 = vmatpush2.bf16.msra.mxu0 0
        %1903 = vmatprep.subr.bf16.mxu0 0
        %1904 = vmatpush2.bf16.msra.mxu0 0
        %1905 = vmatprep.subr.bf16.mxu0 0
        %1906 = vmatpush2.bf16.msra.mxu0 0
        %1907 = vmatprep.subr.bf16.mxu0 0
        %1908 = vmatpush2.bf16.msra.mxu0 0
        %1909 = vmatprep.subr.bf16.mxu0 0
        %1910 = vmatpush2.bf16.msra.mxu0 0
        %1911 = vmatprep.subr.bf16.mxu0 0
        %1912 = vmatpush2.bf16.msra.mxu0 0
        %1913 = vmatprep.subr.bf16.mxu0 0
        %1914 = vmatpush2.bf16.msra.mxu0 0
        %1915 = vmatprep.mubr.bf16.mxu0 0
        %1916 = vmatmul.mubr.bf16.gmra.mxu0 %v1633
        %v1917 = vpop.f32.mrf.mxu0
        %v1918 = vadd.f32 %v701, %v1917
        %v1919 = vpop.f32.mrf.mxu0
        %v1920 = vpop.f32.mrf.mxu0
        %v1921 = vpop.f32.mrf.mxu0
        %1922 = vdwg.mxu0
        %v1924 = vrot.slane %v1918, 1
        %v1925 = vrot.slane %v1918, 2
        %v1926 = vrot.slane %v1918, 3
        %v1927 = vrot.slane %v1918, 4
        %v1928 = vrot.slane %v1918, 5
        %v1929 = vrot.slane %v1918, 6
        %v1930 = vrot.slane %v1918, 7
        %v1939 = vmul.f32 %v1780, %v1918
        %v1940 = vmul.f32 %v1782, %v1924
        %v1941 = vmul.f32 %v1784, %v1925
        %v1942 = vmul.f32 %v1786, %v1926
        %v1943 = vmul.f32 %v1788, %v1927
        %v1944 = vmul.f32 %v1790, %v1928
        %v1945 = vmul.f32 %v1792, %v1929
        %v1946 = vmul.f32 %v1794, %v1930
        %v1947 = vadd.f32 %v1875, %v1939
        %v1948 = vadd.f32 %v1876, %v1940
        %v1949 = vadd.f32 %v1877, %v1941
        %v1950 = vadd.f32 %v1878, %v1942
        %v1951 = vadd.f32 %v1879, %v1943
        %v1952 = vadd.f32 %v1880, %v1944
        %v1953 = vadd.f32 %v1881, %v1945
        %v1954 = vadd.f32 %v1882, %v1946
        %v1955 = vtanh.pop %v1947
        %v1956 = vtanh.pop %v1948
        %v1957 = vtanh.pop %v1949
        %v1958 = vtanh.pop %v1950
        %v1959 = vtanh.pop %v1951
        %v1960 = vtanh.pop %v1952
        %v1961 = vtanh.pop %v1953
        %v1962 = vtanh.pop %v1954
        %v1963 = vsub.f32 %v1585, %v1955
        %v1964 = vsub.f32 %v1586, %v1956
        %v1965 = vsub.f32 %v1587, %v1957
        %v1966 = vsub.f32 %v1588, %v1958
        %v1967 = vsub.f32 %v1589, %v1959
        %v1968 = vsub.f32 %v1590, %v1960
        %v1969 = vsub.f32 %v1591, %v1961
        %v1970 = vsub.f32 %v1592, %v1962
        %v1971 = vmul.f32 %v1860, %v1963
        %v1972 = vmul.f32 %v1862, %v1964
        %v1973 = vmul.f32 %v1864, %v1965
        %v1974 = vmul.f32 %v1866, %v1966
        %v1975 = vmul.f32 %v1868, %v1967
        %v1976 = vmul.f32 %v1870, %v1968
        %v1977 = vmul.f32 %v1872, %v1969
        %v1978 = vmul.f32 %v1874, %v1970
        %v1979 = vadd.f32 %v1955, %v1971
        %v1980 = vadd.f32 %v1956, %v1972
        %v1981 = vadd.f32 %v1957, %v1973
        %v1982 = vadd.f32 %v1958, %v1974
        %v1983 = vadd.f32 %v1959, %v1975
        %v1984 = vadd.f32 %v1960, %v1976
        %v1985 = vadd.f32 %v1961, %v1977
        %v1986 = vadd.f32 %v1962, %v1978
        %v1987 = vld [vmem:[#allocation5 + $0x2] sm:$0x1]
        %v1988 = vld [vmem:[#allocation5 + $0xa] sm:$0x1]
        %v1989 = vld [vmem:[#allocation5 + $0x12] sm:$0x1]
        %v1990 = vld [vmem:[#allocation5 + $0x1a] sm:$0x1]
        %v1991 = vld [vmem:[#allocation5 + $0x22] sm:$0x1]
        %v1992 = vld [vmem:[#allocation5 + $0x2a] sm:$0x1]
        %v1993 = vld [vmem:[#allocation5 + $0x32] sm:$0x1]
        %v1994 = vld [vmem:[#allocation5 + $0x3a] sm:$0x1]
        %vm1995 = vcmp.gt.f32.partialorder %v1987, 0.0
        %vm1996 = vcmp.gt.f32.partialorder %v1988, 0.0
        %vm1997 = vcmp.gt.f32.partialorder %v1989, 0.0
        %vm1998 = vcmp.gt.f32.partialorder %v1990, 0.0
        %vm1999 = vcmp.gt.f32.partialorder %v1991, 0.0
        %vm2000 = vcmp.gt.f32.partialorder %v1992, 0.0
        %vm2001 = vcmp.gt.f32.partialorder %v1993, 0.0
        %vm2002 = vcmp.gt.f32.partialorder %v1994, 0.0
        %v2003 = vsel %vm1995, %v1979, %v1585
        %v2004 = vsel %vm1996, %v1980, %v1586
        %v2005 = vsel %vm1997, %v1981, %v1587
        %v2006 = vsel %vm1998, %v1982, %v1588
        %v2007 = vsel %vm1999, %v1983, %v1589
        %v2008 = vsel %vm2000, %v1984, %v1590
        %v2009 = vsel %vm2001, %v1985, %v1591
        %v2010 = vsel %vm2002, %v1986, %v1592
        %v2011 = vpack.c.bf16 %v2003, %v2003
        %v2012 = vpack.c.bf16 %v2004, %v2004
        %v2013 = vpack.c.bf16 %v2005, %v2005
        %v2014 = vpack.c.bf16 %v2006, %v2006
        %v2015 = vpack.c.bf16 %v2007, %v2007
        %v2016 = vpack.c.bf16 %v2008, %v2008
        %v2017 = vpack.c.bf16 %v2009, %v2009
        %v2018 = vpack.c.bf16 %v2010, %v2010
        %v2027 = vunpack.c.l.b16 %v2011
        %v2028 = vunpack.c.l.b16 %v2012
        %v2029 = vunpack.c.l.b16 %v2013
        %v2030 = vunpack.c.l.b16 %v2014
        %v2031 = vunpack.c.l.b16 %v2015
        %v2032 = vunpack.c.l.b16 %v2016
        %v2033 = vunpack.c.l.b16 %v2017
        %v2034 = vunpack.c.l.b16 %v2018
        %v2035 = vrot.slane %v2028, 7
        %v2036 = vsel %vm1081, %v2035, %v2027
        %v2037 = vrot.slane %v2029, 6
        %v2038 = vsel %vm1084, %v2037, %v2036
        %v2039 = vrot.slane %v2030, 5
        %v2040 = vsel %vm1087, %v2039, %v2038
        %v2041 = vrot.slane %v2031, 4
        %v2042 = vsel %vm1090, %v2041, %v2040
        %v2043 = vrot.slane %v2032, 3
        %v2044 = vsel %vm1093, %v2043, %v2042
        %v2045 = vrot.slane %v2033, 2
        %v2046 = vsel %vm1096, %v2045, %v2044
        %v2047 = vrot.slane %v2034, 1
        %v2048 = vsel %vm1099, %v2047, %v2046
        %v2049 = vpack.c.b16 %v2048, %v2048
        %v2051 = vsel %vm373, %v2049, 0
        %2053 = vmatprep.subr.bf16.mxu0 0
        %2054 = vmatpush1.bf16.msra.mxu0 0
        %2055 = vmatprep.subr.bf16.mxu0 0
        %2056 = vmatpush1.bf16.msra.mxu0 0
        %2057 = vmatprep.subr.bf16.mxu0 0
        %2058 = vmatpush1.bf16.msra.mxu0 0
        %2059 = vmatprep.subr.bf16.mxu0 0
        %2060 = vmatpush1.bf16.msra.mxu0 0
        %2061 = vmatprep.subr.bf16.mxu0 0
        %2062 = vmatpush1.bf16.msra.mxu0 0
        %2063 = vmatprep.subr.bf16.mxu0 0
        %2064 = vmatpush1.bf16.msra.mxu0 0
        %2065 = vmatprep.subr.bf16.mxu0 0
        %2066 = vmatpush1.bf16.msra.mxu0 %v714
        %2067 = vmatprep.subr.bf16.mxu0 0
        %2068 = vmatpush1.bf16.msra.mxu0 %v713
        %2069 = vmatprep.subr.bf16.mxu0 0
        %2070 = vmatpush2.bf16.msra.mxu0 0
        %2071 = vmatprep.subr.bf16.mxu0 0
        %2072 = vmatpush2.bf16.msra.mxu0 0
        %2073 = vmatprep.subr.bf16.mxu0 0
        %2074 = vmatpush2.bf16.msra.mxu0 0
        %2075 = vmatprep.subr.bf16.mxu0 0
        %2076 = vmatpush2.bf16.msra.mxu0 0
        %2077 = vmatprep.subr.bf16.mxu0 0
        %2078 = vmatpush2.bf16.msra.mxu0 0
        %2079 = vmatprep.subr.bf16.mxu0 0
        %2080 = vmatpush2.bf16.msra.mxu0 0
        %2081 = vmatprep.subr.bf16.mxu0 0
        %2082 = vmatpush2.bf16.msra.mxu0 0
        %2083 = vmatprep.subr.bf16.mxu0 0
        %2084 = vmatpush2.bf16.msra.mxu0 0
        %2085 = vmatprep.mubr.bf16.mxu0 0
        %2086 = vmatmul.mubr.bf16.gmra.mxu0 %v2051
        %v2087 = vpop.f32.mrf.mxu0
        %v2088 = vadd.f32 0.0, %v2087
        %v2089 = vpop.f32.mrf.mxu0
        %v2090 = vpop.f32.mrf.mxu0
        %v2091 = vpop.f32.mrf.mxu0
        %2092 = vdwg.mxu0
        %2093 = vmatprep.subr.bf16.mxu0 0
        %2094 = vmatpush1.bf16.msra.mxu0 0
        %2095 = vmatprep.subr.bf16.mxu0 0
        %2096 = vmatpush1.bf16.msra.mxu0 0
        %2097 = vmatprep.subr.bf16.mxu0 0
        %2098 = vmatpush1.bf16.msra.mxu0 0
        %2099 = vmatprep.subr.bf16.mxu0 0
        %2100 = vmatpush1.bf16.msra.mxu0 0
        %2101 = vmatprep.subr.bf16.mxu0 0
        %2102 = vmatpush1.bf16.msra.mxu0 0
        %2103 = vmatprep.subr.bf16.mxu0 0
        %2104 = vmatpush1.bf16.msra.mxu0 0
        %2105 = vmatprep.subr.bf16.mxu0 0
        %2106 = vmatpush1.bf16.msra.mxu0 %v769
        %2107 = vmatprep.subr.bf16.mxu0 0
        %2108 = vmatpush1.bf16.msra.mxu0 %v768
        %2109 = vmatprep.subr.bf16.mxu0 0
        %2110 = vmatpush2.bf16.msra.mxu0 0
        %2111 = vmatprep.subr.bf16.mxu0 0
        %2112 = vmatpush2.bf16.msra.mxu0 0
        %2113 = vmatprep.subr.bf16.mxu0 0
        %2114 = vmatpush2.bf16.msra.mxu0 0
        %2115 = vmatprep.subr.bf16.mxu0 0
        %2116 = vmatpush2.bf16.msra.mxu0 0
        %2117 = vmatprep.subr.bf16.mxu0 0
        %2118 = vmatpush2.bf16.msra.mxu0 0
        %2119 = vmatprep.subr.bf16.mxu0 0
        %2120 = vmatpush2.bf16.msra.mxu0 0
        %2121 = vmatprep.subr.bf16.mxu0 0
        %2122 = vmatpush2.bf16.msra.mxu0 0
        %2123 = vmatprep.subr.bf16.mxu0 0
        %2124 = vmatpush2.bf16.msra.mxu0 0
        %2125 = vmatprep.mubr.bf16.mxu0 0
        %2126 = vmatmul.mubr.bf16.gmra.mxu0 %v2051
        %v2127 = vpop.f32.mrf.mxu0
        %v2128 = vadd.f32 0.0, %v2127
        %v2129 = vpop.f32.mrf.mxu0
        %v2130 = vpop.f32.mrf.mxu0
        %v2131 = vpop.f32.mrf.mxu0
        %2132 = vdwg.mxu0
        %v2133 = vld [vmem:[#allocation2 + $0x3] sm:$0x1]
        %v2134 = vld [vmem:[#allocation2 + $0xb] sm:$0x1]
        %v2135 = vld [vmem:[#allocation2 + $0x13] sm:$0x1]
        %v2136 = vld [vmem:[#allocation2 + $0x1b] sm:$0x1]
        %v2137 = vld [vmem:[#allocation2 + $0x23] sm:$0x1]
        %v2138 = vld [vmem:[#allocation2 + $0x2b] sm:$0x1]
        %v2139 = vld [vmem:[#allocation2 + $0x33] sm:$0x1]
        %v2140 = vld [vmem:[#allocation2 + $0x3b] sm:$0x1]
        %v2142 = vrot.slane %v2088, 1
        %v2143 = vrot.slane %v2088, 2
        %v2144 = vrot.slane %v2088, 3
        %v2145 = vrot.slane %v2088, 4
        %v2146 = vrot.slane %v2088, 5
        %v2147 = vrot.slane %v2088, 6
        %v2148 = vrot.slane %v2088, 7
        %v2157 = vadd.f32 %v2133, %v2088
        %v2158 = vadd.f32 %v2134, %v2142
        %v2159 = vadd.f32 %v2135, %v2143
        %v2160 = vadd.f32 %v2136, %v2144
        %v2161 = vadd.f32 %v2137, %v2145
        %v2162 = vadd.f32 %v2138, %v2146
        %v2163 = vadd.f32 %v2139, %v2147
        %v2164 = vadd.f32 %v2140, %v2148
        %v2165 = vxor.u32 %v2157, 2147483648
        %v2166 = vxor.u32 %v2158, 2147483648
        %v2167 = vxor.u32 %v2159, 2147483648
        %v2168 = vxor.u32 %v2160, 2147483648
        %v2169 = vxor.u32 %v2161, 2147483648
        %v2170 = vxor.u32 %v2162, 2147483648
        %v2171 = vxor.u32 %v2163, 2147483648
        %v2172 = vxor.u32 %v2164, 2147483648
        %v2173 = vmul.f32 %v2165, 1.442695
        %v2174 = vpow.pop %v2173
        %v2175 = vmul.f32 %v2166, 1.442695
        %v2176 = vpow.pop %v2175
        %v2177 = vmul.f32 %v2167, 1.442695
        %v2178 = vpow.pop %v2177
        %v2179 = vmul.f32 %v2168, 1.442695
        %v2180 = vpow.pop %v2179
        %v2181 = vmul.f32 %v2169, 1.442695
        %v2182 = vpow.pop %v2181
        %v2183 = vmul.f32 %v2170, 1.442695
        %v2184 = vpow.pop %v2183
        %v2185 = vmul.f32 %v2171, 1.442695
        %v2186 = vpow.pop %v2185
        %v2187 = vmul.f32 %v2172, 1.442695
        %v2188 = vpow.pop %v2187
        %v2189 = vadd.f32 %v2174, 1.0
        %v2190 = vadd.f32 %v2176, 1.0
        %v2191 = vadd.f32 %v2178, 1.0
        %v2192 = vadd.f32 %v2180, 1.0
        %v2193 = vadd.f32 %v2182, 1.0
        %v2194 = vadd.f32 %v2184, 1.0
        %v2195 = vadd.f32 %v2186, 1.0
        %v2196 = vadd.f32 %v2188, 1.0
        %v2197 = vrcp.pop %v2189
        %v2198 = vmul.f32 1.0, %v2197
        %v2199 = vrcp.pop %v2190
        %v2200 = vmul.f32 1.0, %v2199
        %v2201 = vrcp.pop %v2191
        %v2202 = vmul.f32 1.0, %v2201
        %v2203 = vrcp.pop %v2192
        %v2204 = vmul.f32 1.0, %v2203
        %v2205 = vrcp.pop %v2193
        %v2206 = vmul.f32 1.0, %v2205
        %v2207 = vrcp.pop %v2194
        %v2208 = vmul.f32 1.0, %v2207
        %v2209 = vrcp.pop %v2195
        %v2210 = vmul.f32 1.0, %v2209
        %v2211 = vrcp.pop %v2196
        %v2212 = vmul.f32 1.0, %v2211
        %v2213 = vld [vmem:[#allocation3 + $0x3] sm:$0x1]
        %v2214 = vld [vmem:[#allocation3 + $0xb] sm:$0x1]
        %v2215 = vld [vmem:[#allocation3 + $0x13] sm:$0x1]
        %v2216 = vld [vmem:[#allocation3 + $0x1b] sm:$0x1]
        %v2217 = vld [vmem:[#allocation3 + $0x23] sm:$0x1]
        %v2218 = vld [vmem:[#allocation3 + $0x2b] sm:$0x1]
        %v2219 = vld [vmem:[#allocation3 + $0x33] sm:$0x1]
        %v2220 = vld [vmem:[#allocation3 + $0x3b] sm:$0x1]
        %v2222 = vrot.slane %v2128, 1
        %v2223 = vrot.slane %v2128, 2
        %v2224 = vrot.slane %v2128, 3
        %v2225 = vrot.slane %v2128, 4
        %v2226 = vrot.slane %v2128, 5
        %v2227 = vrot.slane %v2128, 6
        %v2228 = vrot.slane %v2128, 7
        %v2237 = vadd.f32 %v2213, %v2128
        %v2238 = vadd.f32 %v2214, %v2222
        %v2239 = vadd.f32 %v2215, %v2223
        %v2240 = vadd.f32 %v2216, %v2224
        %v2241 = vadd.f32 %v2217, %v2225
        %v2242 = vadd.f32 %v2218, %v2226
        %v2243 = vadd.f32 %v2219, %v2227
        %v2244 = vadd.f32 %v2220, %v2228
        %v2245 = vxor.u32 %v2237, 2147483648
        %v2246 = vxor.u32 %v2238, 2147483648
        %v2247 = vxor.u32 %v2239, 2147483648
        %v2248 = vxor.u32 %v2240, 2147483648
        %v2249 = vxor.u32 %v2241, 2147483648
        %v2250 = vxor.u32 %v2242, 2147483648
        %v2251 = vxor.u32 %v2243, 2147483648
        %v2252 = vxor.u32 %v2244, 2147483648
        %v2253 = vmul.f32 %v2245, 1.442695
        %v2254 = vpow.pop %v2253
        %v2255 = vmul.f32 %v2246, 1.442695
        %v2256 = vpow.pop %v2255
        %v2257 = vmul.f32 %v2247, 1.442695
        %v2258 = vpow.pop %v2257
        %v2259 = vmul.f32 %v2248, 1.442695
        %v2260 = vpow.pop %v2259
        %v2261 = vmul.f32 %v2249, 1.442695
        %v2262 = vpow.pop %v2261
        %v2263 = vmul.f32 %v2250, 1.442695
        %v2264 = vpow.pop %v2263
        %v2265 = vmul.f32 %v2251, 1.442695
        %v2266 = vpow.pop %v2265
        %v2267 = vmul.f32 %v2252, 1.442695
        %v2268 = vpow.pop %v2267
        %v2269 = vadd.f32 %v2254, 1.0
        %v2270 = vadd.f32 %v2256, 1.0
        %v2271 = vadd.f32 %v2258, 1.0
        %v2272 = vadd.f32 %v2260, 1.0
        %v2273 = vadd.f32 %v2262, 1.0
        %v2274 = vadd.f32 %v2264, 1.0
        %v2275 = vadd.f32 %v2266, 1.0
        %v2276 = vadd.f32 %v2268, 1.0
        %v2277 = vrcp.pop %v2269
        %v2278 = vmul.f32 1.0, %v2277
        %v2279 = vrcp.pop %v2270
        %v2280 = vmul.f32 1.0, %v2279
        %v2281 = vrcp.pop %v2271
        %v2282 = vmul.f32 1.0, %v2281
        %v2283 = vrcp.pop %v2272
        %v2284 = vmul.f32 1.0, %v2283
        %v2285 = vrcp.pop %v2273
        %v2286 = vmul.f32 1.0, %v2285
        %v2287 = vrcp.pop %v2274
        %v2288 = vmul.f32 1.0, %v2287
        %v2289 = vrcp.pop %v2275
        %v2290 = vmul.f32 1.0, %v2289
        %v2291 = vrcp.pop %v2276
        %v2292 = vmul.f32 1.0, %v2291
        %v2293 = vld [vmem:[#allocation4 + $0x3] sm:$0x1]
        %v2294 = vld [vmem:[#allocation4 + $0xb] sm:$0x1]
        %v2295 = vld [vmem:[#allocation4 + $0x13] sm:$0x1]
        %v2296 = vld [vmem:[#allocation4 + $0x1b] sm:$0x1]
        %v2297 = vld [vmem:[#allocation4 + $0x23] sm:$0x1]
        %v2298 = vld [vmem:[#allocation4 + $0x2b] sm:$0x1]
        %v2299 = vld [vmem:[#allocation4 + $0x33] sm:$0x1]
        %v2300 = vld [vmem:[#allocation4 + $0x3b] sm:$0x1]
        %2301 = vmatprep.subr.bf16.mxu0 0
        %2302 = vmatpush1.bf16.msra.mxu0 0
        %2303 = vmatprep.subr.bf16.mxu0 0
        %2304 = vmatpush1.bf16.msra.mxu0 0
        %2305 = vmatprep.subr.bf16.mxu0 0
        %2306 = vmatpush1.bf16.msra.mxu0 0
        %2307 = vmatprep.subr.bf16.mxu0 0
        %2308 = vmatpush1.bf16.msra.mxu0 0
        %2309 = vmatprep.subr.bf16.mxu0 0
        %2310 = vmatpush1.bf16.msra.mxu0 0
        %2311 = vmatprep.subr.bf16.mxu0 0
        %2312 = vmatpush1.bf16.msra.mxu0 0
        %2313 = vmatprep.subr.bf16.mxu0 0
        %2314 = vmatpush1.bf16.msra.mxu0 %v989
        %2315 = vmatprep.subr.bf16.mxu0 0
        %2316 = vmatpush1.bf16.msra.mxu0 %v988
        %2317 = vmatprep.subr.bf16.mxu0 0
        %2318 = vmatpush2.bf16.msra.mxu0 0
        %2319 = vmatprep.subr.bf16.mxu0 0
        %2320 = vmatpush2.bf16.msra.mxu0 0
        %2321 = vmatprep.subr.bf16.mxu0 0
        %2322 = vmatpush2.bf16.msra.mxu0 0
        %2323 = vmatprep.subr.bf16.mxu0 0
        %2324 = vmatpush2.bf16.msra.mxu0 0
        %2325 = vmatprep.subr.bf16.mxu0 0
        %2326 = vmatpush2.bf16.msra.mxu0 0
        %2327 = vmatprep.subr.bf16.mxu0 0
        %2328 = vmatpush2.bf16.msra.mxu0 0
        %2329 = vmatprep.subr.bf16.mxu0 0
        %2330 = vmatpush2.bf16.msra.mxu0 0
        %2331 = vmatprep.subr.bf16.mxu0 0
        %2332 = vmatpush2.bf16.msra.mxu0 0
        %2333 = vmatprep.mubr.bf16.mxu0 0
        %2334 = vmatmul.mubr.bf16.gmra.mxu0 %v2051
        %v2335 = vpop.f32.mrf.mxu0
        %v2336 = vadd.f32 %v701, %v2335
        %v2337 = vpop.f32.mrf.mxu0
        %v2338 = vpop.f32.mrf.mxu0
        %v2339 = vpop.f32.mrf.mxu0
        %2340 = vdwg.mxu0
        %v2342 = vrot.slane %v2336, 1
        %v2343 = vrot.slane %v2336, 2
        %v2344 = vrot.slane %v2336, 3
        %v2345 = vrot.slane %v2336, 4
        %v2346 = vrot.slane %v2336, 5
        %v2347 = vrot.slane %v2336, 6
        %v2348 = vrot.slane %v2336, 7
        %v2357 = vmul.f32 %v2198, %v2336
        %v2358 = vmul.f32 %v2200, %v2342
        %v2359 = vmul.f32 %v2202, %v2343
        %v2360 = vmul.f32 %v2204, %v2344
        %v2361 = vmul.f32 %v2206, %v2345
        %v2362 = vmul.f32 %v2208, %v2346
        %v2363 = vmul.f32 %v2210, %v2347
        %v2364 = vmul.f32 %v2212, %v2348
        %v2365 = vadd.f32 %v2293, %v2357
        %v2366 = vadd.f32 %v2294, %v2358
        %v2367 = vadd.f32 %v2295, %v2359
        %v2368 = vadd.f32 %v2296, %v2360
        %v2369 = vadd.f32 %v2297, %v2361
        %v2370 = vadd.f32 %v2298, %v2362
        %v2371 = vadd.f32 %v2299, %v2363
        %v2372 = vadd.f32 %v2300, %v2364
        %v2373 = vtanh.pop %v2365
        %v2374 = vtanh.pop %v2366
        %v2375 = vtanh.pop %v2367
        %v2376 = vtanh.pop %v2368
        %v2377 = vtanh.pop %v2369
        %v2378 = vtanh.pop %v2370
        %v2379 = vtanh.pop %v2371
        %v2380 = vtanh.pop %v2372
        %v2381 = vsub.f32 %v2003, %v2373
        %v2382 = vsub.f32 %v2004, %v2374
        %v2383 = vsub.f32 %v2005, %v2375
        %v2384 = vsub.f32 %v2006, %v2376
        %v2385 = vsub.f32 %v2007, %v2377
        %v2386 = vsub.f32 %v2008, %v2378
        %v2387 = vsub.f32 %v2009, %v2379
        %v2388 = vsub.f32 %v2010, %v2380
        %v2389 = vmul.f32 %v2278, %v2381
        %v2390 = vmul.f32 %v2280, %v2382
        %v2391 = vmul.f32 %v2282, %v2383
        %v2392 = vmul.f32 %v2284, %v2384
        %v2393 = vmul.f32 %v2286, %v2385
        %v2394 = vmul.f32 %v2288, %v2386
        %v2395 = vmul.f32 %v2290, %v2387
        %v2396 = vmul.f32 %v2292, %v2388
        %v2397 = vadd.f32 %v2373, %v2389
        %v2398 = vadd.f32 %v2374, %v2390
        %v2399 = vadd.f32 %v2375, %v2391
        %v2400 = vadd.f32 %v2376, %v2392
        %v2401 = vadd.f32 %v2377, %v2393
        %v2402 = vadd.f32 %v2378, %v2394
        %v2403 = vadd.f32 %v2379, %v2395
        %v2404 = vadd.f32 %v2380, %v2396
        %v2405 = vld [vmem:[#allocation5 + $0x3] sm:$0x1]
        %v2406 = vld [vmem:[#allocation5 + $0xb] sm:$0x1]
        %v2407 = vld [vmem:[#allocation5 + $0x13] sm:$0x1]
        %v2408 = vld [vmem:[#allocation5 + $0x1b] sm:$0x1]
        %v2409 = vld [vmem:[#allocation5 + $0x23] sm:$0x1]
        %v2410 = vld [vmem:[#allocation5 + $0x2b] sm:$0x1]
        %v2411 = vld [vmem:[#allocation5 + $0x33] sm:$0x1]
        %v2412 = vld [vmem:[#allocation5 + $0x3b] sm:$0x1]
        %vm2413 = vcmp.gt.f32.partialorder %v2405, 0.0
        %vm2414 = vcmp.gt.f32.partialorder %v2406, 0.0
        %vm2415 = vcmp.gt.f32.partialorder %v2407, 0.0
        %vm2416 = vcmp.gt.f32.partialorder %v2408, 0.0
        %vm2417 = vcmp.gt.f32.partialorder %v2409, 0.0
        %vm2418 = vcmp.gt.f32.partialorder %v2410, 0.0
        %vm2419 = vcmp.gt.f32.partialorder %v2411, 0.0
        %vm2420 = vcmp.gt.f32.partialorder %v2412, 0.0
        %v2421 = vsel %vm2413, %v2397, %v2003
        %v2422 = vsel %vm2414, %v2398, %v2004
        %v2423 = vsel %vm2415, %v2399, %v2005
        %v2424 = vsel %vm2416, %v2400, %v2006
        %v2425 = vsel %vm2417, %v2401, %v2007
        %v2426 = vsel %vm2418, %v2402, %v2008
        %v2427 = vsel %vm2419, %v2403, %v2009
        %v2428 = vsel %vm2420, %v2404, %v2010
        %v2429 = vpack.c.bf16 %v2421, %v2421
        %v2430 = vpack.c.bf16 %v2422, %v2422
        %v2431 = vpack.c.bf16 %v2423, %v2423
        %v2432 = vpack.c.bf16 %v2424, %v2424
        %v2433 = vpack.c.bf16 %v2425, %v2425
        %v2434 = vpack.c.bf16 %v2426, %v2426
        %v2435 = vpack.c.bf16 %v2427, %v2427
        %v2436 = vpack.c.bf16 %v2428, %v2428
        %v2445 = vunpack.c.l.b16 %v2429
        %v2446 = vunpack.c.l.b16 %v2430
        %v2447 = vunpack.c.l.b16 %v2431
        %v2448 = vunpack.c.l.b16 %v2432
        %v2449 = vunpack.c.l.b16 %v2433
        %v2450 = vunpack.c.l.b16 %v2434
        %v2451 = vunpack.c.l.b16 %v2435
        %v2452 = vunpack.c.l.b16 %v2436
        %v2453 = vrot.slane %v2446, 7
        %v2454 = vsel %vm1081, %v2453, %v2445
        %v2455 = vrot.slane %v2447, 6
        %v2456 = vsel %vm1084, %v2455, %v2454
        %v2457 = vrot.slane %v2448, 5
        %v2458 = vsel %vm1087, %v2457, %v2456
        %v2459 = vrot.slane %v2449, 4
        %v2460 = vsel %vm1090, %v2459, %v2458
        %v2461 = vrot.slane %v2450, 3
        %v2462 = vsel %vm1093, %v2461, %v2460
        %v2463 = vrot.slane %v2451, 2
        %v2464 = vsel %vm1096, %v2463, %v2462
        %v2465 = vrot.slane %v2452, 1
        %v2466 = vsel %vm1099, %v2465, %v2464
        %v2467 = vpack.c.b16 %v2466, %v2466
        %v2469 = vsel %vm373, %v2467, 0
        %2471 = vmatprep.subr.bf16.mxu0 0
        %2472 = vmatpush1.bf16.msra.mxu0 0
        %2473 = vmatprep.subr.bf16.mxu0 0
        %2474 = vmatpush1.bf16.msra.mxu0 0
        %2475 = vmatprep.subr.bf16.mxu0 0
        %2476 = vmatpush1.bf16.msra.mxu0 0
        %2477 = vmatprep.subr.bf16.mxu0 0
        %2478 = vmatpush1.bf16.msra.mxu0 0
        %2479 = vmatprep.subr.bf16.mxu0 0
        %2480 = vmatpush1.bf16.msra.mxu0 0
        %2481 = vmatprep.subr.bf16.mxu0 0
        %2482 = vmatpush1.bf16.msra.mxu0 0
        %2483 = vmatprep.subr.bf16.mxu0 0
        %2484 = vmatpush1.bf16.msra.mxu0 %v714
        %2485 = vmatprep.subr.bf16.mxu0 0
        %2486 = vmatpush1.bf16.msra.mxu0 %v713
        %2487 = vmatprep.subr.bf16.mxu0 0
        %2488 = vmatpush2.bf16.msra.mxu0 0
        %2489 = vmatprep.subr.bf16.mxu0 0
        %2490 = vmatpush2.bf16.msra.mxu0 0
        %2491 = vmatprep.subr.bf16.mxu0 0
        %2492 = vmatpush2.bf16.msra.mxu0 0
        %2493 = vmatprep.subr.bf16.mxu0 0
        %2494 = vmatpush2.bf16.msra.mxu0 0
        %2495 = vmatprep.subr.bf16.mxu0 0
        %2496 = vmatpush2.bf16.msra.mxu0 0
        %2497 = vmatprep.subr.bf16.mxu0 0
        %2498 = vmatpush2.bf16.msra.mxu0 0
        %2499 = vmatprep.subr.bf16.mxu0 0
        %2500 = vmatpush2.bf16.msra.mxu0 0
        %2501 = vmatprep.subr.bf16.mxu0 0
        %2502 = vmatpush2.bf16.msra.mxu0 0
        %2503 = vmatprep.mubr.bf16.mxu0 0
        %2504 = vmatmul.mubr.bf16.gmra.mxu0 %v2469
        %v2505 = vpop.f32.mrf.mxu0
        %v2506 = vadd.f32 0.0, %v2505
        %v2507 = vpop.f32.mrf.mxu0
        %v2508 = vpop.f32.mrf.mxu0
        %v2509 = vpop.f32.mrf.mxu0
        %2510 = vdwg.mxu0
        %2511 = vmatprep.subr.bf16.mxu0 0
        %2512 = vmatpush1.bf16.msra.mxu0 0
        %2513 = vmatprep.subr.bf16.mxu0 0
        %2514 = vmatpush1.bf16.msra.mxu0 0
        %2515 = vmatprep.subr.bf16.mxu0 0
        %2516 = vmatpush1.bf16.msra.mxu0 0
        %2517 = vmatprep.subr.bf16.mxu0 0
        %2518 = vmatpush1.bf16.msra.mxu0 0
        %2519 = vmatprep.subr.bf16.mxu0 0
        %2520 = vmatpush1.bf16.msra.mxu0 0
        %2521 = vmatprep.subr.bf16.mxu0 0
        %2522 = vmatpush1.bf16.msra.mxu0 0
        %2523 = vmatprep.subr.bf16.mxu0 0
        %2524 = vmatpush1.bf16.msra.mxu0 %v769
        %2525 = vmatprep.subr.bf16.mxu0 0
        %2526 = vmatpush1.bf16.msra.mxu0 %v768
        %2527 = vmatprep.subr.bf16.mxu0 0
        %2528 = vmatpush2.bf16.msra.mxu0 0
        %2529 = vmatprep.subr.bf16.mxu0 0
        %2530 = vmatpush2.bf16.msra.mxu0 0
        %2531 = vmatprep.subr.bf16.mxu0 0
        %2532 = vmatpush2.bf16.msra.mxu0 0
        %2533 = vmatprep.subr.bf16.mxu0 0
        %2534 = vmatpush2.bf16.msra.mxu0 0
        %2535 = vmatprep.subr.bf16.mxu0 0
        %2536 = vmatpush2.bf16.msra.mxu0 0
        %2537 = vmatprep.subr.bf16.mxu0 0
        %2538 = vmatpush2.bf16.msra.mxu0 0
        %2539 = vmatprep.subr.bf16.mxu0 0
        %2540 = vmatpush2.bf16.msra.mxu0 0
        %2541 = vmatprep.subr.bf16.mxu0 0
        %2542 = vmatpush2.bf16.msra.mxu0 0
        %2543 = vmatprep.mubr.bf16.mxu0 0
        %2544 = vmatmul.mubr.bf16.gmra.mxu0 %v2469
        %v2545 = vpop.f32.mrf.mxu0
        %v2546 = vadd.f32 0.0, %v2545
        %v2547 = vpop.f32.mrf.mxu0
        %v2548 = vpop.f32.mrf.mxu0
        %v2549 = vpop.f32.mrf.mxu0
        %2550 = vdwg.mxu0
        %v2551 = vld [vmem:[#allocation2 + $0x4] sm:$0x1]
        %v2552 = vld [vmem:[#allocation2 + $0xc] sm:$0x1]
        %v2553 = vld [vmem:[#allocation2 + $0x14] sm:$0x1]
        %v2554 = vld [vmem:[#allocation2 + $0x1c] sm:$0x1]
        %v2555 = vld [vmem:[#allocation2 + $0x24] sm:$0x1]
        %v2556 = vld [vmem:[#allocation2 + $0x2c] sm:$0x1]
        %v2557 = vld [vmem:[#allocation2 + $0x34] sm:$0x1]
        %v2558 = vld [vmem:[#allocation2 + $0x3c] sm:$0x1]
        %v2560 = vrot.slane %v2506, 1
        %v2561 = vrot.slane %v2506, 2
        %v2562 = vrot.slane %v2506, 3
        %v2563 = vrot.slane %v2506, 4
        %v2564 = vrot.slane %v2506, 5
        %v2565 = vrot.slane %v2506, 6
        %v2566 = vrot.slane %v2506, 7
        %v2575 = vadd.f32 %v2551, %v2506
        %v2576 = vadd.f32 %v2552, %v2560
        %v2577 = vadd.f32 %v2553, %v2561
        %v2578 = vadd.f32 %v2554, %v2562
        %v2579 = vadd.f32 %v2555, %v2563
        %v2580 = vadd.f32 %v2556, %v2564
        %v2581 = vadd.f32 %v2557, %v2565
        %v2582 = vadd.f32 %v2558, %v2566
        %v2583 = vxor.u32 %v2575, 2147483648
        %v2584 = vxor.u32 %v2576, 2147483648
        %v2585 = vxor.u32 %v2577, 2147483648
        %v2586 = vxor.u32 %v2578, 2147483648
        %v2587 = vxor.u32 %v2579, 2147483648
        %v2588 = vxor.u32 %v2580, 2147483648
        %v2589 = vxor.u32 %v2581, 2147483648
        %v2590 = vxor.u32 %v2582, 2147483648
        %v2591 = vmul.f32 %v2583, 1.442695
        %v2592 = vpow.pop %v2591
        %v2593 = vmul.f32 %v2584, 1.442695
        %v2594 = vpow.pop %v2593
        %v2595 = vmul.f32 %v2585, 1.442695
        %v2596 = vpow.pop %v2595
        %v2597 = vmul.f32 %v2586, 1.442695
        %v2598 = vpow.pop %v2597
        %v2599 = vmul.f32 %v2587, 1.442695
        %v2600 = vpow.pop %v2599
        %v2601 = vmul.f32 %v2588, 1.442695
        %v2602 = vpow.pop %v2601
        %v2603 = vmul.f32 %v2589, 1.442695
        %v2604 = vpow.pop %v2603
        %v2605 = vmul.f32 %v2590, 1.442695
        %v2606 = vpow.pop %v2605
        %v2607 = vadd.f32 %v2592, 1.0
        %v2608 = vadd.f32 %v2594, 1.0
        %v2609 = vadd.f32 %v2596, 1.0
        %v2610 = vadd.f32 %v2598, 1.0
        %v2611 = vadd.f32 %v2600, 1.0
        %v2612 = vadd.f32 %v2602, 1.0
        %v2613 = vadd.f32 %v2604, 1.0
        %v2614 = vadd.f32 %v2606, 1.0
        %v2615 = vrcp.pop %v2607
        %v2616 = vmul.f32 1.0, %v2615
        %v2617 = vrcp.pop %v2608
        %v2618 = vmul.f32 1.0, %v2617
        %v2619 = vrcp.pop %v2609
        %v2620 = vmul.f32 1.0, %v2619
        %v2621 = vrcp.pop %v2610
        %v2622 = vmul.f32 1.0, %v2621
        %v2623 = vrcp.pop %v2611
        %v2624 = vmul.f32 1.0, %v2623
        %v2625 = vrcp.pop %v2612
        %v2626 = vmul.f32 1.0, %v2625
        %v2627 = vrcp.pop %v2613
        %v2628 = vmul.f32 1.0, %v2627
        %v2629 = vrcp.pop %v2614
        %v2630 = vmul.f32 1.0, %v2629
        %v2631 = vld [vmem:[#allocation3 + $0x4] sm:$0x1]
        %v2632 = vld [vmem:[#allocation3 + $0xc] sm:$0x1]
        %v2633 = vld [vmem:[#allocation3 + $0x14] sm:$0x1]
        %v2634 = vld [vmem:[#allocation3 + $0x1c] sm:$0x1]
        %v2635 = vld [vmem:[#allocation3 + $0x24] sm:$0x1]
        %v2636 = vld [vmem:[#allocation3 + $0x2c] sm:$0x1]
        %v2637 = vld [vmem:[#allocation3 + $0x34] sm:$0x1]
        %v2638 = vld [vmem:[#allocation3 + $0x3c] sm:$0x1]
        %v2640 = vrot.slane %v2546, 1
        %v2641 = vrot.slane %v2546, 2
        %v2642 = vrot.slane %v2546, 3
        %v2643 = vrot.slane %v2546, 4
        %v2644 = vrot.slane %v2546, 5
        %v2645 = vrot.slane %v2546, 6
        %v2646 = vrot.slane %v2546, 7
        %v2655 = vadd.f32 %v2631, %v2546
        %v2656 = vadd.f32 %v2632, %v2640
        %v2657 = vadd.f32 %v2633, %v2641
        %v2658 = vadd.f32 %v2634, %v2642
        %v2659 = vadd.f32 %v2635, %v2643
        %v2660 = vadd.f32 %v2636, %v2644
        %v2661 = vadd.f32 %v2637, %v2645
        %v2662 = vadd.f32 %v2638, %v2646
        %v2663 = vxor.u32 %v2655, 2147483648
        %v2664 = vxor.u32 %v2656, 2147483648
        %v2665 = vxor.u32 %v2657, 2147483648
        %v2666 = vxor.u32 %v2658, 2147483648
        %v2667 = vxor.u32 %v2659, 2147483648
        %v2668 = vxor.u32 %v2660, 2147483648
        %v2669 = vxor.u32 %v2661, 2147483648
        %v2670 = vxor.u32 %v2662, 2147483648
        %v2671 = vmul.f32 %v2663, 1.442695
        %v2672 = vpow.pop %v2671
        %v2673 = vmul.f32 %v2664, 1.442695
        %v2674 = vpow.pop %v2673
        %v2675 = vmul.f32 %v2665, 1.442695
        %v2676 = vpow.pop %v2675
        %v2677 = vmul.f32 %v2666, 1.442695
        %v2678 = vpow.pop %v2677
        %v2679 = vmul.f32 %v2667, 1.442695
        %v2680 = vpow.pop %v2679
        %v2681 = vmul.f32 %v2668, 1.442695
        %v2682 = vpow.pop %v2681
        %v2683 = vmul.f32 %v2669, 1.442695
        %v2684 = vpow.pop %v2683
        %v2685 = vmul.f32 %v2670, 1.442695
        %v2686 = vpow.pop %v2685
        %v2687 = vadd.f32 %v2672, 1.0
        %v2688 = vadd.f32 %v2674, 1.0
        %v2689 = vadd.f32 %v2676, 1.0
        %v2690 = vadd.f32 %v2678, 1.0
        %v2691 = vadd.f32 %v2680, 1.0
        %v2692 = vadd.f32 %v2682, 1.0
        %v2693 = vadd.f32 %v2684, 1.0
        %v2694 = vadd.f32 %v2686, 1.0
        %v2695 = vrcp.pop %v2687
        %v2696 = vmul.f32 1.0, %v2695
        %v2697 = vrcp.pop %v2688
        %v2698 = vmul.f32 1.0, %v2697
        %v2699 = vrcp.pop %v2689
        %v2700 = vmul.f32 1.0, %v2699
        %v2701 = vrcp.pop %v2690
        %v2702 = vmul.f32 1.0, %v2701
        %v2703 = vrcp.pop %v2691
        %v2704 = vmul.f32 1.0, %v2703
        %v2705 = vrcp.pop %v2692
        %v2706 = vmul.f32 1.0, %v2705
        %v2707 = vrcp.pop %v2693
        %v2708 = vmul.f32 1.0, %v2707
        %v2709 = vrcp.pop %v2694
        %v2710 = vmul.f32 1.0, %v2709
        %v2711 = vld [vmem:[#allocation4 + $0x4] sm:$0x1]
        %v2712 = vld [vmem:[#allocation4 + $0xc] sm:$0x1]
        %v2713 = vld [vmem:[#allocation4 + $0x14] sm:$0x1]
        %v2714 = vld [vmem:[#allocation4 + $0x1c] sm:$0x1]
        %v2715 = vld [vmem:[#allocation4 + $0x24] sm:$0x1]
        %v2716 = vld [vmem:[#allocation4 + $0x2c] sm:$0x1]
        %v2717 = vld [vmem:[#allocation4 + $0x34] sm:$0x1]
        %v2718 = vld [vmem:[#allocation4 + $0x3c] sm:$0x1]
        %2719 = vmatprep.subr.bf16.mxu0 0
        %2720 = vmatpush1.bf16.msra.mxu0 0
        %2721 = vmatprep.subr.bf16.mxu0 0
        %2722 = vmatpush1.bf16.msra.mxu0 0
        %2723 = vmatprep.subr.bf16.mxu0 0
        %2724 = vmatpush1.bf16.msra.mxu0 0
        %2725 = vmatprep.subr.bf16.mxu0 0
        %2726 = vmatpush1.bf16.msra.mxu0 0
        %2727 = vmatprep.subr.bf16.mxu0 0
        %2728 = vmatpush1.bf16.msra.mxu0 0
        %2729 = vmatprep.subr.bf16.mxu0 0
        %2730 = vmatpush1.bf16.msra.mxu0 0
        %2731 = vmatprep.subr.bf16.mxu0 0
        %2732 = vmatpush1.bf16.msra.mxu0 %v989
        %2733 = vmatprep.subr.bf16.mxu0 0
        %2734 = vmatpush1.bf16.msra.mxu0 %v988
        %2735 = vmatprep.subr.bf16.mxu0 0
        %2736 = vmatpush2.bf16.msra.mxu0 0
        %2737 = vmatprep.subr.bf16.mxu0 0
        %2738 = vmatpush2.bf16.msra.mxu0 0
        %2739 = vmatprep.subr.bf16.mxu0 0
        %2740 = vmatpush2.bf16.msra.mxu0 0
        %2741 = vmatprep.subr.bf16.mxu0 0
        %2742 = vmatpush2.bf16.msra.mxu0 0
        %2743 = vmatprep.subr.bf16.mxu0 0
        %2744 = vmatpush2.bf16.msra.mxu0 0
        %2745 = vmatprep.subr.bf16.mxu0 0
        %2746 = vmatpush2.bf16.msra.mxu0 0
        %2747 = vmatprep.subr.bf16.mxu0 0
        %2748 = vmatpush2.bf16.msra.mxu0 0
        %2749 = vmatprep.subr.bf16.mxu0 0
        %2750 = vmatpush2.bf16.msra.mxu0 0
        %2751 = vmatprep.mubr.bf16.mxu0 0
        %2752 = vmatmul.mubr.bf16.gmra.mxu0 %v2469
        %v2753 = vpop.f32.mrf.mxu0
        %v2754 = vadd.f32 %v701, %v2753
        %v2755 = vpop.f32.mrf.mxu0
        %v2756 = vpop.f32.mrf.mxu0
        %v2757 = vpop.f32.mrf.mxu0
        %2758 = vdwg.mxu0
        %v2760 = vrot.slane %v2754, 1
        %v2761 = vrot.slane %v2754, 2
        %v2762 = vrot.slane %v2754, 3
        %v2763 = vrot.slane %v2754, 4
        %v2764 = vrot.slane %v2754, 5
        %v2765 = vrot.slane %v2754, 6
        %v2766 = vrot.slane %v2754, 7
        %v2775 = vmul.f32 %v2616, %v2754
        %v2776 = vmul.f32 %v2618, %v2760
        %v2777 = vmul.f32 %v2620, %v2761
        %v2778 = vmul.f32 %v2622, %v2762
        %v2779 = vmul.f32 %v2624, %v2763
        %v2780 = vmul.f32 %v2626, %v2764
        %v2781 = vmul.f32 %v2628, %v2765
        %v2782 = vmul.f32 %v2630, %v2766
        %v2783 = vadd.f32 %v2711, %v2775
        %v2784 = vadd.f32 %v2712, %v2776
        %v2785 = vadd.f32 %v2713, %v2777
        %v2786 = vadd.f32 %v2714, %v2778
        %v2787 = vadd.f32 %v2715, %v2779
        %v2788 = vadd.f32 %v2716, %v2780
        %v2789 = vadd.f32 %v2717, %v2781
        %v2790 = vadd.f32 %v2718, %v2782
        %v2791 = vtanh.pop %v2783
        %v2792 = vtanh.pop %v2784
        %v2793 = vtanh.pop %v2785
        %v2794 = vtanh.pop %v2786
        %v2795 = vtanh.pop %v2787
        %v2796 = vtanh.pop %v2788
        %v2797 = vtanh.pop %v2789
        %v2798 = vtanh.pop %v2790
        %v2799 = vsub.f32 %v2421, %v2791
        %v2800 = vsub.f32 %v2422, %v2792
        %v2801 = vsub.f32 %v2423, %v2793
        %v2802 = vsub.f32 %v2424, %v2794
        %v2803 = vsub.f32 %v2425, %v2795
        %v2804 = vsub.f32 %v2426, %v2796
        %v2805 = vsub.f32 %v2427, %v2797
        %v2806 = vsub.f32 %v2428, %v2798
        %v2807 = vmul.f32 %v2696, %v2799
        %v2808 = vmul.f32 %v2698, %v2800
        %v2809 = vmul.f32 %v2700, %v2801
        %v2810 = vmul.f32 %v2702, %v2802
        %v2811 = vmul.f32 %v2704, %v2803
        %v2812 = vmul.f32 %v2706, %v2804
        %v2813 = vmul.f32 %v2708, %v2805
        %v2814 = vmul.f32 %v2710, %v2806
        %v2815 = vadd.f32 %v2791, %v2807
        %v2816 = vadd.f32 %v2792, %v2808
        %v2817 = vadd.f32 %v2793, %v2809
        %v2818 = vadd.f32 %v2794, %v2810
        %v2819 = vadd.f32 %v2795, %v2811
        %v2820 = vadd.f32 %v2796, %v2812
        %v2821 = vadd.f32 %v2797, %v2813
        %v2822 = vadd.f32 %v2798, %v2814
        %v2823 = vld [vmem:[#allocation5 + $0x4] sm:$0x1]
        %v2824 = vld [vmem:[#allocation5 + $0xc] sm:$0x1]
        %v2825 = vld [vmem:[#allocation5 + $0x14] sm:$0x1]
        %v2826 = vld [vmem:[#allocation5 + $0x1c] sm:$0x1]
        %v2827 = vld [vmem:[#allocation5 + $0x24] sm:$0x1]
        %v2828 = vld [vmem:[#allocation5 + $0x2c] sm:$0x1]
        %v2829 = vld [vmem:[#allocation5 + $0x34] sm:$0x1]
        %v2830 = vld [vmem:[#allocation5 + $0x3c] sm:$0x1]
        %vm2831 = vcmp.gt.f32.partialorder %v2823, 0.0
        %vm2832 = vcmp.gt.f32.partialorder %v2824, 0.0
        %vm2833 = vcmp.gt.f32.partialorder %v2825, 0.0
        %vm2834 = vcmp.gt.f32.partialorder %v2826, 0.0
        %vm2835 = vcmp.gt.f32.partialorder %v2827, 0.0
        %vm2836 = vcmp.gt.f32.partialorder %v2828, 0.0
        %vm2837 = vcmp.gt.f32.partialorder %v2829, 0.0
        %vm2838 = vcmp.gt.f32.partialorder %v2830, 0.0
        %v2839 = vsel %vm2831, %v2815, %v2421
        %v2840 = vsel %vm2832, %v2816, %v2422
        %v2841 = vsel %vm2833, %v2817, %v2423
        %v2842 = vsel %vm2834, %v2818, %v2424
        %v2843 = vsel %vm2835, %v2819, %v2425
        %v2844 = vsel %vm2836, %v2820, %v2426
        %v2845 = vsel %vm2837, %v2821, %v2427
        %v2846 = vsel %vm2838, %v2822, %v2428
        %v2847 = vpack.c.bf16 %v2839, %v2839
        %v2848 = vpack.c.bf16 %v2840, %v2840
        %v2849 = vpack.c.bf16 %v2841, %v2841
        %v2850 = vpack.c.bf16 %v2842, %v2842
        %v2851 = vpack.c.bf16 %v2843, %v2843
        %v2852 = vpack.c.bf16 %v2844, %v2844
        %v2853 = vpack.c.bf16 %v2845, %v2845
        %v2854 = vpack.c.bf16 %v2846, %v2846
        %v2863 = vunpack.c.l.b16 %v2847
        %v2864 = vunpack.c.l.b16 %v2848
        %v2865 = vunpack.c.l.b16 %v2849
        %v2866 = vunpack.c.l.b16 %v2850
        %v2867 = vunpack.c.l.b16 %v2851
        %v2868 = vunpack.c.l.b16 %v2852
        %v2869 = vunpack.c.l.b16 %v2853
        %v2870 = vunpack.c.l.b16 %v2854
        %v2871 = vrot.slane %v2864, 7
        %v2872 = vsel %vm1081, %v2871, %v2863
        %v2873 = vrot.slane %v2865, 6
        %v2874 = vsel %vm1084, %v2873, %v2872
        %v2875 = vrot.slane %v2866, 5
        %v2876 = vsel %vm1087, %v2875, %v2874
        %v2877 = vrot.slane %v2867, 4
        %v2878 = vsel %vm1090, %v2877, %v2876
        %v2879 = vrot.slane %v2868, 3
        %v2880 = vsel %vm1093, %v2879, %v2878
        %v2881 = vrot.slane %v2869, 2
        %v2882 = vsel %vm1096, %v2881, %v2880
        %v2883 = vrot.slane %v2870, 1
        %v2884 = vsel %vm1099, %v2883, %v2882
        %v2885 = vpack.c.b16 %v2884, %v2884
        %v2887 = vsel %vm373, %v2885, 0
        %2889 = vmatprep.subr.bf16.mxu0 0
        %2890 = vmatpush1.bf16.msra.mxu0 0
        %2891 = vmatprep.subr.bf16.mxu0 0
        %2892 = vmatpush1.bf16.msra.mxu0 0
        %2893 = vmatprep.subr.bf16.mxu0 0
        %2894 = vmatpush1.bf16.msra.mxu0 0
        %2895 = vmatprep.subr.bf16.mxu0 0
        %2896 = vmatpush1.bf16.msra.mxu0 0
        %2897 = vmatprep.subr.bf16.mxu0 0
        %2898 = vmatpush1.bf16.msra.mxu0 0
        %2899 = vmatprep.subr.bf16.mxu0 0
        %2900 = vmatpush1.bf16.msra.mxu0 0
        %2901 = vmatprep.subr.bf16.mxu0 0
        %2902 = vmatpush1.bf16.msra.mxu0 %v714
        %2903 = vmatprep.subr.bf16.mxu0 0
        %2904 = vmatpush1.bf16.msra.mxu0 %v713
        %2905 = vmatprep.subr.bf16.mxu0 0
        %2906 = vmatpush2.bf16.msra.mxu0 0
        %2907 = vmatprep.subr.bf16.mxu0 0
        %2908 = vmatpush2.bf16.msra.mxu0 0
        %2909 = vmatprep.subr.bf16.mxu0 0
        %2910 = vmatpush2.bf16.msra.mxu0 0
        %2911 = vmatprep.subr.bf16.mxu0 0
        %2912 = vmatpush2.bf16.msra.mxu0 0
        %2913 = vmatprep.subr.bf16.mxu0 0
        %2914 = vmatpush2.bf16.msra.mxu0 0
        %2915 = vmatprep.subr.bf16.mxu0 0
        %2916 = vmatpush2.bf16.msra.mxu0 0
        %2917 = vmatprep.subr.bf16.mxu0 0
        %2918 = vmatpush2.bf16.msra.mxu0 0
        %2919 = vmatprep.subr.bf16.mxu0 0
        %2920 = vmatpush2.bf16.msra.mxu0 0
        %2921 = vmatprep.mubr.bf16.mxu0 0
        %2922 = vmatmul.mubr.bf16.gmra.mxu0 %v2887
        %v2923 = vpop.f32.mrf.mxu0
        %v2924 = vadd.f32 0.0, %v2923
        %v2925 = vpop.f32.mrf.mxu0
        %v2926 = vpop.f32.mrf.mxu0
        %v2927 = vpop.f32.mrf.mxu0
        %2928 = vdwg.mxu0
        %2929 = vmatprep.subr.bf16.mxu0 0
        %2930 = vmatpush1.bf16.msra.mxu0 0
        %2931 = vmatprep.subr.bf16.mxu0 0
        %2932 = vmatpush1.bf16.msra.mxu0 0
        %2933 = vmatprep.subr.bf16.mxu0 0
        %2934 = vmatpush1.bf16.msra.mxu0 0
        %2935 = vmatprep.subr.bf16.mxu0 0
        %2936 = vmatpush1.bf16.msra.mxu0 0
        %2937 = vmatprep.subr.bf16.mxu0 0
        %2938 = vmatpush1.bf16.msra.mxu0 0
        %2939 = vmatprep.subr.bf16.mxu0 0
        %2940 = vmatpush1.bf16.msra.mxu0 0
        %2941 = vmatprep.subr.bf16.mxu0 0
        %2942 = vmatpush1.bf16.msra.mxu0 %v769
        %2943 = vmatprep.subr.bf16.mxu0 0
        %2944 = vmatpush1.bf16.msra.mxu0 %v768
        %2945 = vmatprep.subr.bf16.mxu0 0
        %2946 = vmatpush2.bf16.msra.mxu0 0
        %2947 = vmatprep.subr.bf16.mxu0 0
        %2948 = vmatpush2.bf16.msra.mxu0 0
        %2949 = vmatprep.subr.bf16.mxu0 0
        %2950 = vmatpush2.bf16.msra.mxu0 0
        %2951 = vmatprep.subr.bf16.mxu0 0
        %2952 = vmatpush2.bf16.msra.mxu0 0
        %2953 = vmatprep.subr.bf16.mxu0 0
        %2954 = vmatpush2.bf16.msra.mxu0 0
        %2955 = vmatprep.subr.bf16.mxu0 0
        %2956 = vmatpush2.bf16.msra.mxu0 0
        %2957 = vmatprep.subr.bf16.mxu0 0
        %2958 = vmatpush2.bf16.msra.mxu0 0
        %2959 = vmatprep.subr.bf16.mxu0 0
        %2960 = vmatpush2.bf16.msra.mxu0 0
        %2961 = vmatprep.mubr.bf16.mxu0 0
        %2962 = vmatmul.mubr.bf16.gmra.mxu0 %v2887
        %v2963 = vpop.f32.mrf.mxu0
        %v2964 = vadd.f32 0.0, %v2963
        %v2965 = vpop.f32.mrf.mxu0
        %v2966 = vpop.f32.mrf.mxu0
        %v2967 = vpop.f32.mrf.mxu0
        %2968 = vdwg.mxu0
        %v2969 = vld [vmem:[#allocation2 + $0x5] sm:$0x1]
        %v2970 = vld [vmem:[#allocation2 + $0xd] sm:$0x1]
        %v2971 = vld [vmem:[#allocation2 + $0x15] sm:$0x1]
        %v2972 = vld [vmem:[#allocation2 + $0x1d] sm:$0x1]
        %v2973 = vld [vmem:[#allocation2 + $0x25] sm:$0x1]
        %v2974 = vld [vmem:[#allocation2 + $0x2d] sm:$0x1]
        %v2975 = vld [vmem:[#allocation2 + $0x35] sm:$0x1]
        %v2976 = vld [vmem:[#allocation2 + $0x3d] sm:$0x1]
        %v2978 = vrot.slane %v2924, 1
        %v2979 = vrot.slane %v2924, 2
        %v2980 = vrot.slane %v2924, 3
        %v2981 = vrot.slane %v2924, 4
        %v2982 = vrot.slane %v2924, 5
        %v2983 = vrot.slane %v2924, 6
        %v2984 = vrot.slane %v2924, 7
        %v2993 = vadd.f32 %v2969, %v2924
        %v2994 = vadd.f32 %v2970, %v2978
        %v2995 = vadd.f32 %v2971, %v2979
        %v2996 = vadd.f32 %v2972, %v2980
        %v2997 = vadd.f32 %v2973, %v2981
        %v2998 = vadd.f32 %v2974, %v2982
        %v2999 = vadd.f32 %v2975, %v2983
        %v3000 = vadd.f32 %v2976, %v2984
        %v3001 = vxor.u32 %v2993, 2147483648
        %v3002 = vxor.u32 %v2994, 2147483648
        %v3003 = vxor.u32 %v2995, 2147483648
        %v3004 = vxor.u32 %v2996, 2147483648
        %v3005 = vxor.u32 %v2997, 2147483648
        %v3006 = vxor.u32 %v2998, 2147483648
        %v3007 = vxor.u32 %v2999, 2147483648
        %v3008 = vxor.u32 %v3000, 2147483648
        %v3009 = vmul.f32 %v3001, 1.442695
        %v3010 = vpow.pop %v3009
        %v3011 = vmul.f32 %v3002, 1.442695
        %v3012 = vpow.pop %v3011
        %v3013 = vmul.f32 %v3003, 1.442695
        %v3014 = vpow.pop %v3013
        %v3015 = vmul.f32 %v3004, 1.442695
        %v3016 = vpow.pop %v3015
        %v3017 = vmul.f32 %v3005, 1.442695
        %v3018 = vpow.pop %v3017
        %v3019 = vmul.f32 %v3006, 1.442695
        %v3020 = vpow.pop %v3019
        %v3021 = vmul.f32 %v3007, 1.442695
        %v3022 = vpow.pop %v3021
        %v3023 = vmul.f32 %v3008, 1.442695
        %v3024 = vpow.pop %v3023
        %v3025 = vadd.f32 %v3010, 1.0
        %v3026 = vadd.f32 %v3012, 1.0
        %v3027 = vadd.f32 %v3014, 1.0
        %v3028 = vadd.f32 %v3016, 1.0
        %v3029 = vadd.f32 %v3018, 1.0
        %v3030 = vadd.f32 %v3020, 1.0
        %v3031 = vadd.f32 %v3022, 1.0
        %v3032 = vadd.f32 %v3024, 1.0
        %v3033 = vrcp.pop %v3025
        %v3034 = vmul.f32 1.0, %v3033
        %v3035 = vrcp.pop %v3026
        %v3036 = vmul.f32 1.0, %v3035
        %v3037 = vrcp.pop %v3027
        %v3038 = vmul.f32 1.0, %v3037
        %v3039 = vrcp.pop %v3028
        %v3040 = vmul.f32 1.0, %v3039
        %v3041 = vrcp.pop %v3029
        %v3042 = vmul.f32 1.0, %v3041
        %v3043 = vrcp.pop %v3030
        %v3044 = vmul.f32 1.0, %v3043
        %v3045 = vrcp.pop %v3031
        %v3046 = vmul.f32 1.0, %v3045
        %v3047 = vrcp.pop %v3032
        %v3048 = vmul.f32 1.0, %v3047
        %v3049 = vld [vmem:[#allocation3 + $0x5] sm:$0x1]
        %v3050 = vld [vmem:[#allocation3 + $0xd] sm:$0x1]
        %v3051 = vld [vmem:[#allocation3 + $0x15] sm:$0x1]
        %v3052 = vld [vmem:[#allocation3 + $0x1d] sm:$0x1]
        %v3053 = vld [vmem:[#allocation3 + $0x25] sm:$0x1]
        %v3054 = vld [vmem:[#allocation3 + $0x2d] sm:$0x1]
        %v3055 = vld [vmem:[#allocation3 + $0x35] sm:$0x1]
        %v3056 = vld [vmem:[#allocation3 + $0x3d] sm:$0x1]
        %v3058 = vrot.slane %v2964, 1
        %v3059 = vrot.slane %v2964, 2
        %v3060 = vrot.slane %v2964, 3
        %v3061 = vrot.slane %v2964, 4
        %v3062 = vrot.slane %v2964, 5
        %v3063 = vrot.slane %v2964, 6
        %v3064 = vrot.slane %v2964, 7
        %v3073 = vadd.f32 %v3049, %v2964
        %v3074 = vadd.f32 %v3050, %v3058
        %v3075 = vadd.f32 %v3051, %v3059
        %v3076 = vadd.f32 %v3052, %v3060
        %v3077 = vadd.f32 %v3053, %v3061
        %v3078 = vadd.f32 %v3054, %v3062
        %v3079 = vadd.f32 %v3055, %v3063
        %v3080 = vadd.f32 %v3056, %v3064
        %v3081 = vxor.u32 %v3073, 2147483648
        %v3082 = vxor.u32 %v3074, 2147483648
        %v3083 = vxor.u32 %v3075, 2147483648
        %v3084 = vxor.u32 %v3076, 2147483648
        %v3085 = vxor.u32 %v3077, 2147483648
        %v3086 = vxor.u32 %v3078, 2147483648
        %v3087 = vxor.u32 %v3079, 2147483648
        %v3088 = vxor.u32 %v3080, 2147483648
        %v3089 = vmul.f32 %v3081, 1.442695
        %v3090 = vpow.pop %v3089
        %v3091 = vmul.f32 %v3082, 1.442695
        %v3092 = vpow.pop %v3091
        %v3093 = vmul.f32 %v3083, 1.442695
        %v3094 = vpow.pop %v3093
        %v3095 = vmul.f32 %v3084, 1.442695
        %v3096 = vpow.pop %v3095
        %v3097 = vmul.f32 %v3085, 1.442695
        %v3098 = vpow.pop %v3097
        %v3099 = vmul.f32 %v3086, 1.442695
        %v3100 = vpow.pop %v3099
        %v3101 = vmul.f32 %v3087, 1.442695
        %v3102 = vpow.pop %v3101
        %v3103 = vmul.f32 %v3088, 1.442695
        %v3104 = vpow.pop %v3103
        %v3105 = vadd.f32 %v3090, 1.0
        %v3106 = vadd.f32 %v3092, 1.0
        %v3107 = vadd.f32 %v3094, 1.0
        %v3108 = vadd.f32 %v3096, 1.0
        %v3109 = vadd.f32 %v3098, 1.0
        %v3110 = vadd.f32 %v3100, 1.0
        %v3111 = vadd.f32 %v3102, 1.0
        %v3112 = vadd.f32 %v3104, 1.0
        %v3113 = vrcp.pop %v3105
        %v3114 = vmul.f32 1.0, %v3113
        %v3115 = vrcp.pop %v3106
        %v3116 = vmul.f32 1.0, %v3115
        %v3117 = vrcp.pop %v3107
        %v3118 = vmul.f32 1.0, %v3117
        %v3119 = vrcp.pop %v3108
        %v3120 = vmul.f32 1.0, %v3119
        %v3121 = vrcp.pop %v3109
        %v3122 = vmul.f32 1.0, %v3121
        %v3123 = vrcp.pop %v3110
        %v3124 = vmul.f32 1.0, %v3123
        %v3125 = vrcp.pop %v3111
        %v3126 = vmul.f32 1.0, %v3125
        %v3127 = vrcp.pop %v3112
        %v3128 = vmul.f32 1.0, %v3127
        %v3129 = vld [vmem:[#allocation4 + $0x5] sm:$0x1]
        %v3130 = vld [vmem:[#allocation4 + $0xd] sm:$0x1]
        %v3131 = vld [vmem:[#allocation4 + $0x15] sm:$0x1]
        %v3132 = vld [vmem:[#allocation4 + $0x1d] sm:$0x1]
        %v3133 = vld [vmem:[#allocation4 + $0x25] sm:$0x1]
        %v3134 = vld [vmem:[#allocation4 + $0x2d] sm:$0x1]
        %v3135 = vld [vmem:[#allocation4 + $0x35] sm:$0x1]
        %v3136 = vld [vmem:[#allocation4 + $0x3d] sm:$0x1]
        %3137 = vmatprep.subr.bf16.mxu0 0
        %3138 = vmatpush1.bf16.msra.mxu0 0
        %3139 = vmatprep.subr.bf16.mxu0 0
        %3140 = vmatpush1.bf16.msra.mxu0 0
        %3141 = vmatprep.subr.bf16.mxu0 0
        %3142 = vmatpush1.bf16.msra.mxu0 0
        %3143 = vmatprep.subr.bf16.mxu0 0
        %3144 = vmatpush1.bf16.msra.mxu0 0
        %3145 = vmatprep.subr.bf16.mxu0 0
        %3146 = vmatpush1.bf16.msra.mxu0 0
        %3147 = vmatprep.subr.bf16.mxu0 0
        %3148 = vmatpush1.bf16.msra.mxu0 0
        %3149 = vmatprep.subr.bf16.mxu0 0
        %3150 = vmatpush1.bf16.msra.mxu0 %v989
        %3151 = vmatprep.subr.bf16.mxu0 0
        %3152 = vmatpush1.bf16.msra.mxu0 %v988
        %3153 = vmatprep.subr.bf16.mxu0 0
        %3154 = vmatpush2.bf16.msra.mxu0 0
        %3155 = vmatprep.subr.bf16.mxu0 0
        %3156 = vmatpush2.bf16.msra.mxu0 0
        %3157 = vmatprep.subr.bf16.mxu0 0
        %3158 = vmatpush2.bf16.msra.mxu0 0
        %3159 = vmatprep.subr.bf16.mxu0 0
        %3160 = vmatpush2.bf16.msra.mxu0 0
        %3161 = vmatprep.subr.bf16.mxu0 0
        %3162 = vmatpush2.bf16.msra.mxu0 0
        %3163 = vmatprep.subr.bf16.mxu0 0
        %3164 = vmatpush2.bf16.msra.mxu0 0
        %3165 = vmatprep.subr.bf16.mxu0 0
        %3166 = vmatpush2.bf16.msra.mxu0 0
        %3167 = vmatprep.subr.bf16.mxu0 0
        %3168 = vmatpush2.bf16.msra.mxu0 0
        %3169 = vmatprep.mubr.bf16.mxu0 0
        %3170 = vmatmul.mubr.bf16.gmra.mxu0 %v2887
        %v3171 = vpop.f32.mrf.mxu0
        %v3172 = vadd.f32 %v701, %v3171
        %v3173 = vpop.f32.mrf.mxu0
        %v3174 = vpop.f32.mrf.mxu0
        %v3175 = vpop.f32.mrf.mxu0
        %3176 = vdwg.mxu0
        %v3178 = vrot.slane %v3172, 1
        %v3179 = vrot.slane %v3172, 2
        %v3180 = vrot.slane %v3172, 3
        %v3181 = vrot.slane %v3172, 4
        %v3182 = vrot.slane %v3172, 5
        %v3183 = vrot.slane %v3172, 6
        %v3184 = vrot.slane %v3172, 7
        %v3193 = vmul.f32 %v3034, %v3172
        %v3194 = vmul.f32 %v3036, %v3178
        %v3195 = vmul.f32 %v3038, %v3179
        %v3196 = vmul.f32 %v3040, %v3180
        %v3197 = vmul.f32 %v3042, %v3181
        %v3198 = vmul.f32 %v3044, %v3182
        %v3199 = vmul.f32 %v3046, %v3183
        %v3200 = vmul.f32 %v3048, %v3184
        %v3201 = vadd.f32 %v3129, %v3193
        %v3202 = vadd.f32 %v3130, %v3194
        %v3203 = vadd.f32 %v3131, %v3195
        %v3204 = vadd.f32 %v3132, %v3196
        %v3205 = vadd.f32 %v3133, %v3197
        %v3206 = vadd.f32 %v3134, %v3198
        %v3207 = vadd.f32 %v3135, %v3199
        %v3208 = vadd.f32 %v3136, %v3200
        %v3209 = vtanh.pop %v3201
        %v3210 = vtanh.pop %v3202
        %v3211 = vtanh.pop %v3203
        %v3212 = vtanh.pop %v3204
        %v3213 = vtanh.pop %v3205
        %v3214 = vtanh.pop %v3206
        %v3215 = vtanh.pop %v3207
        %v3216 = vtanh.pop %v3208
        %v3217 = vsub.f32 %v2839, %v3209
        %v3218 = vsub.f32 %v2840, %v3210
        %v3219 = vsub.f32 %v2841, %v3211
        %v3220 = vsub.f32 %v2842, %v3212
        %v3221 = vsub.f32 %v2843, %v3213
        %v3222 = vsub.f32 %v2844, %v3214
        %v3223 = vsub.f32 %v2845, %v3215
        %v3224 = vsub.f32 %v2846, %v3216
        %v3225 = vmul.f32 %v3114, %v3217
        %v3226 = vmul.f32 %v3116, %v3218
        %v3227 = vmul.f32 %v3118, %v3219
        %v3228 = vmul.f32 %v3120, %v3220
        %v3229 = vmul.f32 %v3122, %v3221
        %v3230 = vmul.f32 %v3124, %v3222
        %v3231 = vmul.f32 %v3126, %v3223
        %v3232 = vmul.f32 %v3128, %v3224
        %v3233 = vadd.f32 %v3209, %v3225
        %v3234 = vadd.f32 %v3210, %v3226
        %v3235 = vadd.f32 %v3211, %v3227
        %v3236 = vadd.f32 %v3212, %v3228
        %v3237 = vadd.f32 %v3213, %v3229
        %v3238 = vadd.f32 %v3214, %v3230
        %v3239 = vadd.f32 %v3215, %v3231
        %v3240 = vadd.f32 %v3216, %v3232
        %v3241 = vld [vmem:[#allocation5 + $0x5] sm:$0x1]
        %v3242 = vld [vmem:[#allocation5 + $0xd] sm:$0x1]
        %v3243 = vld [vmem:[#allocation5 + $0x15] sm:$0x1]
        %v3244 = vld [vmem:[#allocation5 + $0x1d] sm:$0x1]
        %v3245 = vld [vmem:[#allocation5 + $0x25] sm:$0x1]
        %v3246 = vld [vmem:[#allocation5 + $0x2d] sm:$0x1]
        %v3247 = vld [vmem:[#allocation5 + $0x35] sm:$0x1]
        %v3248 = vld [vmem:[#allocation5 + $0x3d] sm:$0x1]
        %vm3249 = vcmp.gt.f32.partialorder %v3241, 0.0
        %vm3250 = vcmp.gt.f32.partialorder %v3242, 0.0
        %vm3251 = vcmp.gt.f32.partialorder %v3243, 0.0
        %vm3252 = vcmp.gt.f32.partialorder %v3244, 0.0
        %vm3253 = vcmp.gt.f32.partialorder %v3245, 0.0
        %vm3254 = vcmp.gt.f32.partialorder %v3246, 0.0
        %vm3255 = vcmp.gt.f32.partialorder %v3247, 0.0
        %vm3256 = vcmp.gt.f32.partialorder %v3248, 0.0
        %v3257 = vsel %vm3249, %v3233, %v2839
        %v3258 = vsel %vm3250, %v3234, %v2840
        %v3259 = vsel %vm3251, %v3235, %v2841
        %v3260 = vsel %vm3252, %v3236, %v2842
        %v3261 = vsel %vm3253, %v3237, %v2843
        %v3262 = vsel %vm3254, %v3238, %v2844
        %v3263 = vsel %vm3255, %v3239, %v2845
        %v3264 = vsel %vm3256, %v3240, %v2846
        %v3265 = vpack.c.bf16 %v3257, %v3257
        %v3266 = vpack.c.bf16 %v3258, %v3258
        %v3267 = vpack.c.bf16 %v3259, %v3259
        %v3268 = vpack.c.bf16 %v3260, %v3260
        %v3269 = vpack.c.bf16 %v3261, %v3261
        %v3270 = vpack.c.bf16 %v3262, %v3262
        %v3271 = vpack.c.bf16 %v3263, %v3263
        %v3272 = vpack.c.bf16 %v3264, %v3264
        %v3281 = vunpack.c.l.b16 %v3265
        %v3282 = vunpack.c.l.b16 %v3266
        %v3283 = vunpack.c.l.b16 %v3267
        %v3284 = vunpack.c.l.b16 %v3268
        %v3285 = vunpack.c.l.b16 %v3269
        %v3286 = vunpack.c.l.b16 %v3270
        %v3287 = vunpack.c.l.b16 %v3271
        %v3288 = vunpack.c.l.b16 %v3272
        %v3289 = vrot.slane %v3282, 7
        %v3290 = vsel %vm1081, %v3289, %v3281
        %v3291 = vrot.slane %v3283, 6
        %v3292 = vsel %vm1084, %v3291, %v3290
        %v3293 = vrot.slane %v3284, 5
        %v3294 = vsel %vm1087, %v3293, %v3292
        %v3295 = vrot.slane %v3285, 4
        %v3296 = vsel %vm1090, %v3295, %v3294
        %v3297 = vrot.slane %v3286, 3
        %v3298 = vsel %vm1093, %v3297, %v3296
        %v3299 = vrot.slane %v3287, 2
        %v3300 = vsel %vm1096, %v3299, %v3298
        %v3301 = vrot.slane %v3288, 1
        %v3302 = vsel %vm1099, %v3301, %v3300
        %v3303 = vpack.c.b16 %v3302, %v3302
        %v3305 = vsel %vm373, %v3303, 0
        %3307 = vmatprep.subr.bf16.mxu0 0
        %3308 = vmatpush1.bf16.msra.mxu0 0
        %3309 = vmatprep.subr.bf16.mxu0 0
        %3310 = vmatpush1.bf16.msra.mxu0 0
        %3311 = vmatprep.subr.bf16.mxu0 0
        %3312 = vmatpush1.bf16.msra.mxu0 0
        %3313 = vmatprep.subr.bf16.mxu0 0
        %3314 = vmatpush1.bf16.msra.mxu0 0
        %3315 = vmatprep.subr.bf16.mxu0 0
        %3316 = vmatpush1.bf16.msra.mxu0 0
        %3317 = vmatprep.subr.bf16.mxu0 0
        %3318 = vmatpush1.bf16.msra.mxu0 0
        %3319 = vmatprep.subr.bf16.mxu0 0
        %3320 = vmatpush1.bf16.msra.mxu0 %v714
        %3321 = vmatprep.subr.bf16.mxu0 0
        %3322 = vmatpush1.bf16.msra.mxu0 %v713
        %3323 = vmatprep.subr.bf16.mxu0 0
        %3324 = vmatpush2.bf16.msra.mxu0 0
        %3325 = vmatprep.subr.bf16.mxu0 0
        %3326 = vmatpush2.bf16.msra.mxu0 0
        %3327 = vmatprep.subr.bf16.mxu0 0
        %3328 = vmatpush2.bf16.msra.mxu0 0
        %3329 = vmatprep.subr.bf16.mxu0 0
        %3330 = vmatpush2.bf16.msra.mxu0 0
        %3331 = vmatprep.subr.bf16.mxu0 0
        %3332 = vmatpush2.bf16.msra.mxu0 0
        %3333 = vmatprep.subr.bf16.mxu0 0
        %3334 = vmatpush2.bf16.msra.mxu0 0
        %3335 = vmatprep.subr.bf16.mxu0 0
        %3336 = vmatpush2.bf16.msra.mxu0 0
        %3337 = vmatprep.subr.bf16.mxu0 0
        %3338 = vmatpush2.bf16.msra.mxu0 0
        %3339 = vmatprep.mubr.bf16.mxu0 0
        %3340 = vmatmul.mubr.bf16.gmra.mxu0 %v3305
        %v3341 = vpop.f32.mrf.mxu0
        %v3342 = vadd.f32 0.0, %v3341
        %v3343 = vpop.f32.mrf.mxu0
        %v3344 = vpop.f32.mrf.mxu0
        %v3345 = vpop.f32.mrf.mxu0
        %3346 = vdwg.mxu0
        %3347 = vmatprep.subr.bf16.mxu0 0
        %3348 = vmatpush1.bf16.msra.mxu0 0
        %3349 = vmatprep.subr.bf16.mxu0 0
        %3350 = vmatpush1.bf16.msra.mxu0 0
        %3351 = vmatprep.subr.bf16.mxu0 0
        %3352 = vmatpush1.bf16.msra.mxu0 0
        %3353 = vmatprep.subr.bf16.mxu0 0
        %3354 = vmatpush1.bf16.msra.mxu0 0
        %3355 = vmatprep.subr.bf16.mxu0 0
        %3356 = vmatpush1.bf16.msra.mxu0 0
        %3357 = vmatprep.subr.bf16.mxu0 0
        %3358 = vmatpush1.bf16.msra.mxu0 0
        %3359 = vmatprep.subr.bf16.mxu0 0
        %3360 = vmatpush1.bf16.msra.mxu0 %v769
        %3361 = vmatprep.subr.bf16.mxu0 0
        %3362 = vmatpush1.bf16.msra.mxu0 %v768
        %3363 = vmatprep.subr.bf16.mxu0 0
        %3364 = vmatpush2.bf16.msra.mxu0 0
        %3365 = vmatprep.subr.bf16.mxu0 0
        %3366 = vmatpush2.bf16.msra.mxu0 0
        %3367 = vmatprep.subr.bf16.mxu0 0
        %3368 = vmatpush2.bf16.msra.mxu0 0
        %3369 = vmatprep.subr.bf16.mxu0 0
        %3370 = vmatpush2.bf16.msra.mxu0 0
        %3371 = vmatprep.subr.bf16.mxu0 0
        %3372 = vmatpush2.bf16.msra.mxu0 0
        %3373 = vmatprep.subr.bf16.mxu0 0
        %3374 = vmatpush2.bf16.msra.mxu0 0
        %3375 = vmatprep.subr.bf16.mxu0 0
        %3376 = vmatpush2.bf16.msra.mxu0 0
        %3377 = vmatprep.subr.bf16.mxu0 0
        %3378 = vmatpush2.bf16.msra.mxu0 0
        %3379 = vmatprep.mubr.bf16.mxu0 0
        %3380 = vmatmul.mubr.bf16.gmra.mxu0 %v3305
        %v3381 = vpop.f32.mrf.mxu0
        %v3382 = vadd.f32 0.0, %v3381
        %v3383 = vpop.f32.mrf.mxu0
        %v3384 = vpop.f32.mrf.mxu0
        %v3385 = vpop.f32.mrf.mxu0
        %3386 = vdwg.mxu0
        %v3387 = vld [vmem:[#allocation2 + $0x6] sm:$0x1]
        %v3388 = vld [vmem:[#allocation2 + $0xe] sm:$0x1]
        %v3389 = vld [vmem:[#allocation2 + $0x16] sm:$0x1]
        %v3390 = vld [vmem:[#allocation2 + $0x1e] sm:$0x1]
        %v3391 = vld [vmem:[#allocation2 + $0x26] sm:$0x1]
        %v3392 = vld [vmem:[#allocation2 + $0x2e] sm:$0x1]
        %v3393 = vld [vmem:[#allocation2 + $0x36] sm:$0x1]
        %v3394 = vld [vmem:[#allocation2 + $0x3e] sm:$0x1]
        %v3396 = vrot.slane %v3342, 1
        %v3397 = vrot.slane %v3342, 2
        %v3398 = vrot.slane %v3342, 3
        %v3399 = vrot.slane %v3342, 4
        %v3400 = vrot.slane %v3342, 5
        %v3401 = vrot.slane %v3342, 6
        %v3402 = vrot.slane %v3342, 7
        %v3411 = vadd.f32 %v3387, %v3342
        %v3412 = vadd.f32 %v3388, %v3396
        %v3413 = vadd.f32 %v3389, %v3397
        %v3414 = vadd.f32 %v3390, %v3398
        %v3415 = vadd.f32 %v3391, %v3399
        %v3416 = vadd.f32 %v3392, %v3400
        %v3417 = vadd.f32 %v3393, %v3401
        %v3418 = vadd.f32 %v3394, %v3402
        %v3419 = vxor.u32 %v3411, 2147483648
        %v3420 = vxor.u32 %v3412, 2147483648
        %v3421 = vxor.u32 %v3413, 2147483648
        %v3422 = vxor.u32 %v3414, 2147483648
        %v3423 = vxor.u32 %v3415, 2147483648
        %v3424 = vxor.u32 %v3416, 2147483648
        %v3425 = vxor.u32 %v3417, 2147483648
        %v3426 = vxor.u32 %v3418, 2147483648
        %v3427 = vmul.f32 %v3419, 1.442695
        %v3428 = vpow.pop %v3427
        %v3429 = vmul.f32 %v3420, 1.442695
        %v3430 = vpow.pop %v3429
        %v3431 = vmul.f32 %v3421, 1.442695
        %v3432 = vpow.pop %v3431
        %v3433 = vmul.f32 %v3422, 1.442695
        %v3434 = vpow.pop %v3433
        %v3435 = vmul.f32 %v3423, 1.442695
        %v3436 = vpow.pop %v3435
        %v3437 = vmul.f32 %v3424, 1.442695
        %v3438 = vpow.pop %v3437
        %v3439 = vmul.f32 %v3425, 1.442695
        %v3440 = vpow.pop %v3439
        %v3441 = vmul.f32 %v3426, 1.442695
        %v3442 = vpow.pop %v3441
        %v3443 = vadd.f32 %v3428, 1.0
        %v3444 = vadd.f32 %v3430, 1.0
        %v3445 = vadd.f32 %v3432, 1.0
        %v3446 = vadd.f32 %v3434, 1.0
        %v3447 = vadd.f32 %v3436, 1.0
        %v3448 = vadd.f32 %v3438, 1.0
        %v3449 = vadd.f32 %v3440, 1.0
        %v3450 = vadd.f32 %v3442, 1.0
        %v3451 = vrcp.pop %v3443
        %v3452 = vmul.f32 1.0, %v3451
        %v3453 = vrcp.pop %v3444
        %v3454 = vmul.f32 1.0, %v3453
        %v3455 = vrcp.pop %v3445
        %v3456 = vmul.f32 1.0, %v3455
        %v3457 = vrcp.pop %v3446
        %v3458 = vmul.f32 1.0, %v3457
        %v3459 = vrcp.pop %v3447
        %v3460 = vmul.f32 1.0, %v3459
        %v3461 = vrcp.pop %v3448
        %v3462 = vmul.f32 1.0, %v3461
        %v3463 = vrcp.pop %v3449
        %v3464 = vmul.f32 1.0, %v3463
        %v3465 = vrcp.pop %v3450
        %v3466 = vmul.f32 1.0, %v3465
        %v3467 = vld [vmem:[#allocation3 + $0x6] sm:$0x1]
        %v3468 = vld [vmem:[#allocation3 + $0xe] sm:$0x1]
        %v3469 = vld [vmem:[#allocation3 + $0x16] sm:$0x1]
        %v3470 = vld [vmem:[#allocation3 + $0x1e] sm:$0x1]
        %v3471 = vld [vmem:[#allocation3 + $0x26] sm:$0x1]
        %v3472 = vld [vmem:[#allocation3 + $0x2e] sm:$0x1]
        %v3473 = vld [vmem:[#allocation3 + $0x36] sm:$0x1]
        %v3474 = vld [vmem:[#allocation3 + $0x3e] sm:$0x1]
        %v3476 = vrot.slane %v3382, 1
        %v3477 = vrot.slane %v3382, 2
        %v3478 = vrot.slane %v3382, 3
        %v3479 = vrot.slane %v3382, 4
        %v3480 = vrot.slane %v3382, 5
        %v3481 = vrot.slane %v3382, 6
        %v3482 = vrot.slane %v3382, 7
        %v3491 = vadd.f32 %v3467, %v3382
        %v3492 = vadd.f32 %v3468, %v3476
        %v3493 = vadd.f32 %v3469, %v3477
        %v3494 = vadd.f32 %v3470, %v3478
        %v3495 = vadd.f32 %v3471, %v3479
        %v3496 = vadd.f32 %v3472, %v3480
        %v3497 = vadd.f32 %v3473, %v3481
        %v3498 = vadd.f32 %v3474, %v3482
        %v3499 = vxor.u32 %v3491, 2147483648
        %v3500 = vxor.u32 %v3492, 2147483648
        %v3501 = vxor.u32 %v3493, 2147483648
        %v3502 = vxor.u32 %v3494, 2147483648
        %v3503 = vxor.u32 %v3495, 2147483648
        %v3504 = vxor.u32 %v3496, 2147483648
        %v3505 = vxor.u32 %v3497, 2147483648
        %v3506 = vxor.u32 %v3498, 2147483648
        %v3507 = vmul.f32 %v3499, 1.442695
        %v3508 = vpow.pop %v3507
        %v3509 = vmul.f32 %v3500, 1.442695
        %v3510 = vpow.pop %v3509
        %v3511 = vmul.f32 %v3501, 1.442695
        %v3512 = vpow.pop %v3511
        %v3513 = vmul.f32 %v3502, 1.442695
        %v3514 = vpow.pop %v3513
        %v3515 = vmul.f32 %v3503, 1.442695
        %v3516 = vpow.pop %v3515
        %v3517 = vmul.f32 %v3504, 1.442695
        %v3518 = vpow.pop %v3517
        %v3519 = vmul.f32 %v3505, 1.442695
        %v3520 = vpow.pop %v3519
        %v3521 = vmul.f32 %v3506, 1.442695
        %v3522 = vpow.pop %v3521
        %v3523 = vadd.f32 %v3508, 1.0
        %v3524 = vadd.f32 %v3510, 1.0
        %v3525 = vadd.f32 %v3512, 1.0
        %v3526 = vadd.f32 %v3514, 1.0
        %v3527 = vadd.f32 %v3516, 1.0
        %v3528 = vadd.f32 %v3518, 1.0
        %v3529 = vadd.f32 %v3520, 1.0
        %v3530 = vadd.f32 %v3522, 1.0
        %v3531 = vrcp.pop %v3523
        %v3532 = vmul.f32 1.0, %v3531
        %v3533 = vrcp.pop %v3524
        %v3534 = vmul.f32 1.0, %v3533
        %v3535 = vrcp.pop %v3525
        %v3536 = vmul.f32 1.0, %v3535
        %v3537 = vrcp.pop %v3526
        %v3538 = vmul.f32 1.0, %v3537
        %v3539 = vrcp.pop %v3527
        %v3540 = vmul.f32 1.0, %v3539
        %v3541 = vrcp.pop %v3528
        %v3542 = vmul.f32 1.0, %v3541
        %v3543 = vrcp.pop %v3529
        %v3544 = vmul.f32 1.0, %v3543
        %v3545 = vrcp.pop %v3530
        %v3546 = vmul.f32 1.0, %v3545
        %v3547 = vld [vmem:[#allocation4 + $0x6] sm:$0x1]
        %v3548 = vld [vmem:[#allocation4 + $0xe] sm:$0x1]
        %v3549 = vld [vmem:[#allocation4 + $0x16] sm:$0x1]
        %v3550 = vld [vmem:[#allocation4 + $0x1e] sm:$0x1]
        %v3551 = vld [vmem:[#allocation4 + $0x26] sm:$0x1]
        %v3552 = vld [vmem:[#allocation4 + $0x2e] sm:$0x1]
        %v3553 = vld [vmem:[#allocation4 + $0x36] sm:$0x1]
        %v3554 = vld [vmem:[#allocation4 + $0x3e] sm:$0x1]
        %3555 = vmatprep.subr.bf16.mxu0 0
        %3556 = vmatpush1.bf16.msra.mxu0 0
        %3557 = vmatprep.subr.bf16.mxu0 0
        %3558 = vmatpush1.bf16.msra.mxu0 0
        %3559 = vmatprep.subr.bf16.mxu0 0
        %3560 = vmatpush1.bf16.msra.mxu0 0
        %3561 = vmatprep.subr.bf16.mxu0 0
        %3562 = vmatpush1.bf16.msra.mxu0 0
        %3563 = vmatprep.subr.bf16.mxu0 0
        %3564 = vmatpush1.bf16.msra.mxu0 0
        %3565 = vmatprep.subr.bf16.mxu0 0
        %3566 = vmatpush1.bf16.msra.mxu0 0
        %3567 = vmatprep.subr.bf16.mxu0 0
        %3568 = vmatpush1.bf16.msra.mxu0 %v989
        %3569 = vmatprep.subr.bf16.mxu0 0
        %3570 = vmatpush1.bf16.msra.mxu0 %v988
        %3571 = vmatprep.subr.bf16.mxu0 0
        %3572 = vmatpush2.bf16.msra.mxu0 0
        %3573 = vmatprep.subr.bf16.mxu0 0
        %3574 = vmatpush2.bf16.msra.mxu0 0
        %3575 = vmatprep.subr.bf16.mxu0 0
        %3576 = vmatpush2.bf16.msra.mxu0 0
        %3577 = vmatprep.subr.bf16.mxu0 0
        %3578 = vmatpush2.bf16.msra.mxu0 0
        %3579 = vmatprep.subr.bf16.mxu0 0
        %3580 = vmatpush2.bf16.msra.mxu0 0
        %3581 = vmatprep.subr.bf16.mxu0 0
        %3582 = vmatpush2.bf16.msra.mxu0 0
        %3583 = vmatprep.subr.bf16.mxu0 0
        %3584 = vmatpush2.bf16.msra.mxu0 0
        %3585 = vmatprep.subr.bf16.mxu0 0
        %3586 = vmatpush2.bf16.msra.mxu0 0
        %3587 = vmatprep.mubr.bf16.mxu0 0
        %3588 = vmatmul.mubr.bf16.gmra.mxu0 %v3305
        %v3589 = vpop.f32.mrf.mxu0
        %v3590 = vadd.f32 %v701, %v3589
        %v3591 = vpop.f32.mrf.mxu0
        %v3592 = vpop.f32.mrf.mxu0
        %v3593 = vpop.f32.mrf.mxu0
        %3594 = vdwg.mxu0
        %v3596 = vrot.slane %v3590, 1
        %v3597 = vrot.slane %v3590, 2
        %v3598 = vrot.slane %v3590, 3
        %v3599 = vrot.slane %v3590, 4
        %v3600 = vrot.slane %v3590, 5
        %v3601 = vrot.slane %v3590, 6
        %v3602 = vrot.slane %v3590, 7
        %v3611 = vmul.f32 %v3452, %v3590
        %v3612 = vmul.f32 %v3454, %v3596
        %v3613 = vmul.f32 %v3456, %v3597
        %v3614 = vmul.f32 %v3458, %v3598
        %v3615 = vmul.f32 %v3460, %v3599
        %v3616 = vmul.f32 %v3462, %v3600
        %v3617 = vmul.f32 %v3464, %v3601
        %v3618 = vmul.f32 %v3466, %v3602
        %v3619 = vadd.f32 %v3547, %v3611
        %v3620 = vadd.f32 %v3548, %v3612
        %v3621 = vadd.f32 %v3549, %v3613
        %v3622 = vadd.f32 %v3550, %v3614
        %v3623 = vadd.f32 %v3551, %v3615
        %v3624 = vadd.f32 %v3552, %v3616
        %v3625 = vadd.f32 %v3553, %v3617
        %v3626 = vadd.f32 %v3554, %v3618
        %v3627 = vtanh.pop %v3619
        %v3628 = vtanh.pop %v3620
        %v3629 = vtanh.pop %v3621
        %v3630 = vtanh.pop %v3622
        %v3631 = vtanh.pop %v3623
        %v3632 = vtanh.pop %v3624
        %v3633 = vtanh.pop %v3625
        %v3634 = vtanh.pop %v3626
        %v3635 = vsub.f32 %v3257, %v3627
        %v3636 = vsub.f32 %v3258, %v3628
        %v3637 = vsub.f32 %v3259, %v3629
        %v3638 = vsub.f32 %v3260, %v3630
        %v3639 = vsub.f32 %v3261, %v3631
        %v3640 = vsub.f32 %v3262, %v3632
        %v3641 = vsub.f32 %v3263, %v3633
        %v3642 = vsub.f32 %v3264, %v3634
        %v3643 = vmul.f32 %v3532, %v3635
        %v3644 = vmul.f32 %v3534, %v3636
        %v3645 = vmul.f32 %v3536, %v3637
        %v3646 = vmul.f32 %v3538, %v3638
        %v3647 = vmul.f32 %v3540, %v3639
        %v3648 = vmul.f32 %v3542, %v3640
        %v3649 = vmul.f32 %v3544, %v3641
        %v3650 = vmul.f32 %v3546, %v3642
        %v3651 = vadd.f32 %v3627, %v3643
        %v3652 = vadd.f32 %v3628, %v3644
        %v3653 = vadd.f32 %v3629, %v3645
        %v3654 = vadd.f32 %v3630, %v3646
        %v3655 = vadd.f32 %v3631, %v3647
        %v3656 = vadd.f32 %v3632, %v3648
        %v3657 = vadd.f32 %v3633, %v3649
        %v3658 = vadd.f32 %v3634, %v3650
        %v3659 = vld [vmem:[#allocation5 + $0x6] sm:$0x1]
        %v3660 = vld [vmem:[#allocation5 + $0xe] sm:$0x1]
        %v3661 = vld [vmem:[#allocation5 + $0x16] sm:$0x1]
        %v3662 = vld [vmem:[#allocation5 + $0x1e] sm:$0x1]
        %v3663 = vld [vmem:[#allocation5 + $0x26] sm:$0x1]
        %v3664 = vld [vmem:[#allocation5 + $0x2e] sm:$0x1]
        %v3665 = vld [vmem:[#allocation5 + $0x36] sm:$0x1]
        %v3666 = vld [vmem:[#allocation5 + $0x3e] sm:$0x1]
        %vm3667 = vcmp.gt.f32.partialorder %v3659, 0.0
        %vm3668 = vcmp.gt.f32.partialorder %v3660, 0.0
        %vm3669 = vcmp.gt.f32.partialorder %v3661, 0.0
        %vm3670 = vcmp.gt.f32.partialorder %v3662, 0.0
        %vm3671 = vcmp.gt.f32.partialorder %v3663, 0.0
        %vm3672 = vcmp.gt.f32.partialorder %v3664, 0.0
        %vm3673 = vcmp.gt.f32.partialorder %v3665, 0.0
        %vm3674 = vcmp.gt.f32.partialorder %v3666, 0.0
        %v3675 = vsel %vm3667, %v3651, %v3257
        %v3676 = vsel %vm3668, %v3652, %v3258
        %v3677 = vsel %vm3669, %v3653, %v3259
        %v3678 = vsel %vm3670, %v3654, %v3260
        %v3679 = vsel %vm3671, %v3655, %v3261
        %v3680 = vsel %vm3672, %v3656, %v3262
        %v3681 = vsel %vm3673, %v3657, %v3263
        %v3682 = vsel %vm3674, %v3658, %v3264
        %v3683 = vpack.c.bf16 %v3675, %v3675
        %v3684 = vpack.c.bf16 %v3676, %v3676
        %v3685 = vpack.c.bf16 %v3677, %v3677
        %v3686 = vpack.c.bf16 %v3678, %v3678
        %v3687 = vpack.c.bf16 %v3679, %v3679
        %v3688 = vpack.c.bf16 %v3680, %v3680
        %v3689 = vpack.c.bf16 %v3681, %v3681
        %v3690 = vpack.c.bf16 %v3682, %v3682
        %v3699 = vunpack.c.l.b16 %v3683
        %v3700 = vunpack.c.l.b16 %v3684
        %v3701 = vunpack.c.l.b16 %v3685
        %v3702 = vunpack.c.l.b16 %v3686
        %v3703 = vunpack.c.l.b16 %v3687
        %v3704 = vunpack.c.l.b16 %v3688
        %v3705 = vunpack.c.l.b16 %v3689
        %v3706 = vunpack.c.l.b16 %v3690
        %v3707 = vrot.slane %v3700, 7
        %v3708 = vsel %vm1081, %v3707, %v3699
        %v3709 = vrot.slane %v3701, 6
        %v3710 = vsel %vm1084, %v3709, %v3708
        %v3711 = vrot.slane %v3702, 5
        %v3712 = vsel %vm1087, %v3711, %v3710
        %v3713 = vrot.slane %v3703, 4
        %v3714 = vsel %vm1090, %v3713, %v3712
        %v3715 = vrot.slane %v3704, 3
        %v3716 = vsel %vm1093, %v3715, %v3714
        %v3717 = vrot.slane %v3705, 2
        %v3718 = vsel %vm1096, %v3717, %v3716
        %v3719 = vrot.slane %v3706, 1
        %v3720 = vsel %vm1099, %v3719, %v3718
        %v3721 = vpack.c.b16 %v3720, %v3720
        %v3723 = vsel %vm373, %v3721, 0
        %3725 = vmatprep.subr.bf16.mxu0 0
        %3726 = vmatpush1.bf16.msra.mxu0 0
        %3727 = vmatprep.subr.bf16.mxu0 0
        %3728 = vmatpush1.bf16.msra.mxu0 0
        %3729 = vmatprep.subr.bf16.mxu0 0
        %3730 = vmatpush1.bf16.msra.mxu0 0
        %3731 = vmatprep.subr.bf16.mxu0 0
        %3732 = vmatpush1.bf16.msra.mxu0 0
        %3733 = vmatprep.subr.bf16.mxu0 0
        %3734 = vmatpush1.bf16.msra.mxu0 0
        %3735 = vmatprep.subr.bf16.mxu0 0
        %3736 = vmatpush1.bf16.msra.mxu0 0
        %3737 = vmatprep.subr.bf16.mxu0 0
        %3738 = vmatpush1.bf16.msra.mxu0 %v714
        %3739 = vmatprep.subr.bf16.mxu0 0
        %3740 = vmatpush1.bf16.msra.mxu0 %v713
        %3741 = vmatprep.subr.bf16.mxu0 0
        %3742 = vmatpush2.bf16.msra.mxu0 0
        %3743 = vmatprep.subr.bf16.mxu0 0
        %3744 = vmatpush2.bf16.msra.mxu0 0
        %3745 = vmatprep.subr.bf16.mxu0 0
        %3746 = vmatpush2.bf16.msra.mxu0 0
        %3747 = vmatprep.subr.bf16.mxu0 0
        %3748 = vmatpush2.bf16.msra.mxu0 0
        %3749 = vmatprep.subr.bf16.mxu0 0
        %3750 = vmatpush2.bf16.msra.mxu0 0
        %3751 = vmatprep.subr.bf16.mxu0 0
        %3752 = vmatpush2.bf16.msra.mxu0 0
        %3753 = vmatprep.subr.bf16.mxu0 0
        %3754 = vmatpush2.bf16.msra.mxu0 0
        %3755 = vmatprep.subr.bf16.mxu0 0
        %3756 = vmatpush2.bf16.msra.mxu0 0
        %3757 = vmatprep.mubr.bf16.mxu0 0
        %3758 = vmatmul.mubr.bf16.gmra.mxu0 %v3723
        %v3759 = vpop.f32.mrf.mxu0
        %v3760 = vadd.f32 0.0, %v3759
        %v3761 = vpop.f32.mrf.mxu0
        %v3762 = vpop.f32.mrf.mxu0
        %v3763 = vpop.f32.mrf.mxu0
        %3764 = vdwg.mxu0
        %3765 = vmatprep.subr.bf16.mxu0 0
        %3766 = vmatpush1.bf16.msra.mxu0 0
        %3767 = vmatprep.subr.bf16.mxu0 0
        %3768 = vmatpush1.bf16.msra.mxu0 0
        %3769 = vmatprep.subr.bf16.mxu0 0
        %3770 = vmatpush1.bf16.msra.mxu0 0
        %3771 = vmatprep.subr.bf16.mxu0 0
        %3772 = vmatpush1.bf16.msra.mxu0 0
        %3773 = vmatprep.subr.bf16.mxu0 0
        %3774 = vmatpush1.bf16.msra.mxu0 0
        %3775 = vmatprep.subr.bf16.mxu0 0
        %3776 = vmatpush1.bf16.msra.mxu0 0
        %3777 = vmatprep.subr.bf16.mxu0 0
        %3778 = vmatpush1.bf16.msra.mxu0 %v769
        %3779 = vmatprep.subr.bf16.mxu0 0
        %3780 = vmatpush1.bf16.msra.mxu0 %v768
        %3781 = vmatprep.subr.bf16.mxu0 0
        %3782 = vmatpush2.bf16.msra.mxu0 0
        %3783 = vmatprep.subr.bf16.mxu0 0
        %3784 = vmatpush2.bf16.msra.mxu0 0
        %3785 = vmatprep.subr.bf16.mxu0 0
        %3786 = vmatpush2.bf16.msra.mxu0 0
        %3787 = vmatprep.subr.bf16.mxu0 0
        %3788 = vmatpush2.bf16.msra.mxu0 0
        %3789 = vmatprep.subr.bf16.mxu0 0
        %3790 = vmatpush2.bf16.msra.mxu0 0
        %3791 = vmatprep.subr.bf16.mxu0 0
        %3792 = vmatpush2.bf16.msra.mxu0 0
        %3793 = vmatprep.subr.bf16.mxu0 0
        %3794 = vmatpush2.bf16.msra.mxu0 0
        %3795 = vmatprep.subr.bf16.mxu0 0
        %3796 = vmatpush2.bf16.msra.mxu0 0
        %3797 = vmatprep.mubr.bf16.mxu0 0
        %3798 = vmatmul.mubr.bf16.gmra.mxu0 %v3723
        %v3799 = vpop.f32.mrf.mxu0
        %v3800 = vadd.f32 0.0, %v3799
        %v3801 = vpop.f32.mrf.mxu0
        %v3802 = vpop.f32.mrf.mxu0
        %v3803 = vpop.f32.mrf.mxu0
        %3804 = vdwg.mxu0
        %v3805 = vld [vmem:[#allocation2 + $0x7] sm:$0x1]
        %v3806 = vld [vmem:[#allocation2 + $0xf] sm:$0x1]
        %v3807 = vld [vmem:[#allocation2 + $0x17] sm:$0x1]
        %v3808 = vld [vmem:[#allocation2 + $0x1f] sm:$0x1]
        %v3809 = vld [vmem:[#allocation2 + $0x27] sm:$0x1]
        %v3810 = vld [vmem:[#allocation2 + $0x2f] sm:$0x1]
        %v3811 = vld [vmem:[#allocation2 + $0x37] sm:$0x1]
        %v3812 = vld [vmem:[#allocation2 + $0x3f] sm:$0x1]
        %v3814 = vrot.slane %v3760, 1
        %v3815 = vrot.slane %v3760, 2
        %v3816 = vrot.slane %v3760, 3
        %v3817 = vrot.slane %v3760, 4
        %v3818 = vrot.slane %v3760, 5
        %v3819 = vrot.slane %v3760, 6
        %v3820 = vrot.slane %v3760, 7
        %v3829 = vadd.f32 %v3805, %v3760
        %v3830 = vadd.f32 %v3806, %v3814
        %v3831 = vadd.f32 %v3807, %v3815
        %v3832 = vadd.f32 %v3808, %v3816
        %v3833 = vadd.f32 %v3809, %v3817
        %v3834 = vadd.f32 %v3810, %v3818
        %v3835 = vadd.f32 %v3811, %v3819
        %v3836 = vadd.f32 %v3812, %v3820
        %v3837 = vxor.u32 %v3829, 2147483648
        %v3838 = vxor.u32 %v3830, 2147483648
        %v3839 = vxor.u32 %v3831, 2147483648
        %v3840 = vxor.u32 %v3832, 2147483648
        %v3841 = vxor.u32 %v3833, 2147483648
        %v3842 = vxor.u32 %v3834, 2147483648
        %v3843 = vxor.u32 %v3835, 2147483648
        %v3844 = vxor.u32 %v3836, 2147483648
        %v3845 = vmul.f32 %v3837, 1.442695
        %v3846 = vpow.pop %v3845
        %v3847 = vmul.f32 %v3838, 1.442695
        %v3848 = vpow.pop %v3847
        %v3849 = vmul.f32 %v3839, 1.442695
        %v3850 = vpow.pop %v3849
        %v3851 = vmul.f32 %v3840, 1.442695
        %v3852 = vpow.pop %v3851
        %v3853 = vmul.f32 %v3841, 1.442695
        %v3854 = vpow.pop %v3853
        %v3855 = vmul.f32 %v3842, 1.442695
        %v3856 = vpow.pop %v3855
        %v3857 = vmul.f32 %v3843, 1.442695
        %v3858 = vpow.pop %v3857
        %v3859 = vmul.f32 %v3844, 1.442695
        %v3860 = vpow.pop %v3859
        %v3861 = vadd.f32 %v3846, 1.0
        %v3862 = vadd.f32 %v3848, 1.0
        %v3863 = vadd.f32 %v3850, 1.0
        %v3864 = vadd.f32 %v3852, 1.0
        %v3865 = vadd.f32 %v3854, 1.0
        %v3866 = vadd.f32 %v3856, 1.0
        %v3867 = vadd.f32 %v3858, 1.0
        %v3868 = vadd.f32 %v3860, 1.0
        %v3869 = vrcp.pop %v3861
        %v3870 = vmul.f32 1.0, %v3869
        %v3871 = vrcp.pop %v3862
        %v3872 = vmul.f32 1.0, %v3871
        %v3873 = vrcp.pop %v3863
        %v3874 = vmul.f32 1.0, %v3873
        %v3875 = vrcp.pop %v3864
        %v3876 = vmul.f32 1.0, %v3875
        %v3877 = vrcp.pop %v3865
        %v3878 = vmul.f32 1.0, %v3877
        %v3879 = vrcp.pop %v3866
        %v3880 = vmul.f32 1.0, %v3879
        %v3881 = vrcp.pop %v3867
        %v3882 = vmul.f32 1.0, %v3881
        %v3883 = vrcp.pop %v3868
        %v3884 = vmul.f32 1.0, %v3883
        %v3885 = vld [vmem:[#allocation3 + $0x7] sm:$0x1]
        %v3886 = vld [vmem:[#allocation3 + $0xf] sm:$0x1]
        %v3887 = vld [vmem:[#allocation3 + $0x17] sm:$0x1]
        %v3888 = vld [vmem:[#allocation3 + $0x1f] sm:$0x1]
        %v3889 = vld [vmem:[#allocation3 + $0x27] sm:$0x1]
        %v3890 = vld [vmem:[#allocation3 + $0x2f] sm:$0x1]
        %v3891 = vld [vmem:[#allocation3 + $0x37] sm:$0x1]
        %v3892 = vld [vmem:[#allocation3 + $0x3f] sm:$0x1]
        %v3894 = vrot.slane %v3800, 1
        %v3895 = vrot.slane %v3800, 2
        %v3896 = vrot.slane %v3800, 3
        %v3897 = vrot.slane %v3800, 4
        %v3898 = vrot.slane %v3800, 5
        %v3899 = vrot.slane %v3800, 6
        %v3900 = vrot.slane %v3800, 7
        %v3909 = vadd.f32 %v3885, %v3800
        %v3910 = vadd.f32 %v3886, %v3894
        %v3911 = vadd.f32 %v3887, %v3895
        %v3912 = vadd.f32 %v3888, %v3896
        %v3913 = vadd.f32 %v3889, %v3897
        %v3914 = vadd.f32 %v3890, %v3898
        %v3915 = vadd.f32 %v3891, %v3899
        %v3916 = vadd.f32 %v3892, %v3900
        %v3917 = vxor.u32 %v3909, 2147483648
        %v3918 = vxor.u32 %v3910, 2147483648
        %v3919 = vxor.u32 %v3911, 2147483648
        %v3920 = vxor.u32 %v3912, 2147483648
        %v3921 = vxor.u32 %v3913, 2147483648
        %v3922 = vxor.u32 %v3914, 2147483648
        %v3923 = vxor.u32 %v3915, 2147483648
        %v3924 = vxor.u32 %v3916, 2147483648
        %v3925 = vmul.f32 %v3917, 1.442695
        %v3926 = vpow.pop %v3925
        %v3927 = vmul.f32 %v3918, 1.442695
        %v3928 = vpow.pop %v3927
        %v3929 = vmul.f32 %v3919, 1.442695
        %v3930 = vpow.pop %v3929
        %v3931 = vmul.f32 %v3920, 1.442695
        %v3932 = vpow.pop %v3931
        %v3933 = vmul.f32 %v3921, 1.442695
        %v3934 = vpow.pop %v3933
        %v3935 = vmul.f32 %v3922, 1.442695
        %v3936 = vpow.pop %v3935
        %v3937 = vmul.f32 %v3923, 1.442695
        %v3938 = vpow.pop %v3937
        %v3939 = vmul.f32 %v3924, 1.442695
        %v3940 = vpow.pop %v3939
        %v3941 = vadd.f32 %v3926, 1.0
        %v3942 = vadd.f32 %v3928, 1.0
        %v3943 = vadd.f32 %v3930, 1.0
        %v3944 = vadd.f32 %v3932, 1.0
        %v3945 = vadd.f32 %v3934, 1.0
        %v3946 = vadd.f32 %v3936, 1.0
        %v3947 = vadd.f32 %v3938, 1.0
        %v3948 = vadd.f32 %v3940, 1.0
        %v3949 = vrcp.pop %v3941
        %v3950 = vmul.f32 1.0, %v3949
        %v3951 = vrcp.pop %v3942
        %v3952 = vmul.f32 1.0, %v3951
        %v3953 = vrcp.pop %v3943
        %v3954 = vmul.f32 1.0, %v3953
        %v3955 = vrcp.pop %v3944
        %v3956 = vmul.f32 1.0, %v3955
        %v3957 = vrcp.pop %v3945
        %v3958 = vmul.f32 1.0, %v3957
        %v3959 = vrcp.pop %v3946
        %v3960 = vmul.f32 1.0, %v3959
        %v3961 = vrcp.pop %v3947
        %v3962 = vmul.f32 1.0, %v3961
        %v3963 = vrcp.pop %v3948
        %v3964 = vmul.f32 1.0, %v3963
        %v3965 = vld [vmem:[#allocation4 + $0x7] sm:$0x1]
        %v3966 = vld [vmem:[#allocation4 + $0xf] sm:$0x1]
        %v3967 = vld [vmem:[#allocation4 + $0x17] sm:$0x1]
        %v3968 = vld [vmem:[#allocation4 + $0x1f] sm:$0x1]
        %v3969 = vld [vmem:[#allocation4 + $0x27] sm:$0x1]
        %v3970 = vld [vmem:[#allocation4 + $0x2f] sm:$0x1]
        %v3971 = vld [vmem:[#allocation4 + $0x37] sm:$0x1]
        %v3972 = vld [vmem:[#allocation4 + $0x3f] sm:$0x1]
        %3973 = vmatprep.subr.bf16.mxu0 0
        %3974 = vmatpush1.bf16.msra.mxu0 0
        %3975 = vmatprep.subr.bf16.mxu0 0
        %3976 = vmatpush1.bf16.msra.mxu0 0
        %3977 = vmatprep.subr.bf16.mxu0 0
        %3978 = vmatpush1.bf16.msra.mxu0 0
        %3979 = vmatprep.subr.bf16.mxu0 0
        %3980 = vmatpush1.bf16.msra.mxu0 0
        %3981 = vmatprep.subr.bf16.mxu0 0
        %3982 = vmatpush1.bf16.msra.mxu0 0
        %3983 = vmatprep.subr.bf16.mxu0 0
        %3984 = vmatpush1.bf16.msra.mxu0 0
        %3985 = vmatprep.subr.bf16.mxu0 0
        %3986 = vmatpush1.bf16.msra.mxu0 %v989
        %3987 = vmatprep.subr.bf16.mxu0 0
        %3988 = vmatpush1.bf16.msra.mxu0 %v988
        %3989 = vmatprep.subr.bf16.mxu0 0
        %3990 = vmatpush2.bf16.msra.mxu0 0
        %3991 = vmatprep.subr.bf16.mxu0 0
        %3992 = vmatpush2.bf16.msra.mxu0 0
        %3993 = vmatprep.subr.bf16.mxu0 0
        %3994 = vmatpush2.bf16.msra.mxu0 0
        %3995 = vmatprep.subr.bf16.mxu0 0
        %3996 = vmatpush2.bf16.msra.mxu0 0
        %3997 = vmatprep.subr.bf16.mxu0 0
        %3998 = vmatpush2.bf16.msra.mxu0 0
        %3999 = vmatprep.subr.bf16.mxu0 0
        %4000 = vmatpush2.bf16.msra.mxu0 0
        %4001 = vmatprep.subr.bf16.mxu0 0
        %4002 = vmatpush2.bf16.msra.mxu0 0
        %4003 = vmatprep.subr.bf16.mxu0 0
        %4004 = vmatpush2.bf16.msra.mxu0 0
        %4005 = vmatprep.mubr.bf16.mxu0 0
        %4006 = vmatmul.mubr.bf16.gmra.mxu0 %v3723
        %v4007 = vpop.f32.mrf.mxu0
        %v4008 = vadd.f32 %v701, %v4007
        %v4009 = vpop.f32.mrf.mxu0
        %v4010 = vpop.f32.mrf.mxu0
        %v4011 = vpop.f32.mrf.mxu0
        %4012 = vdwg.mxu0
        %v4014 = vrot.slane %v4008, 1
        %v4015 = vrot.slane %v4008, 2
        %v4016 = vrot.slane %v4008, 3
        %v4017 = vrot.slane %v4008, 4
        %v4018 = vrot.slane %v4008, 5
        %v4019 = vrot.slane %v4008, 6
        %v4020 = vrot.slane %v4008, 7
        %v4029 = vmul.f32 %v3870, %v4008
        %v4030 = vmul.f32 %v3872, %v4014
        %v4031 = vmul.f32 %v3874, %v4015
        %v4032 = vmul.f32 %v3876, %v4016
        %v4033 = vmul.f32 %v3878, %v4017
        %v4034 = vmul.f32 %v3880, %v4018
        %v4035 = vmul.f32 %v3882, %v4019
        %v4036 = vmul.f32 %v3884, %v4020
        %v4037 = vadd.f32 %v3965, %v4029
        %v4038 = vadd.f32 %v3966, %v4030
        %v4039 = vadd.f32 %v3967, %v4031
        %v4040 = vadd.f32 %v3968, %v4032
        %v4041 = vadd.f32 %v3969, %v4033
        %v4042 = vadd.f32 %v3970, %v4034
        %v4043 = vadd.f32 %v3971, %v4035
        %v4044 = vadd.f32 %v3972, %v4036
        %v4045 = vtanh.pop %v4037
        %v4046 = vtanh.pop %v4038
        %v4047 = vtanh.pop %v4039
        %v4048 = vtanh.pop %v4040
        %v4049 = vtanh.pop %v4041
        %v4050 = vtanh.pop %v4042
        %v4051 = vtanh.pop %v4043
        %v4052 = vtanh.pop %v4044
        %v4053 = vsub.f32 %v3675, %v4045
        %v4054 = vsub.f32 %v3676, %v4046
        %v4055 = vsub.f32 %v3677, %v4047
        %v4056 = vsub.f32 %v3678, %v4048
        %v4057 = vsub.f32 %v3679, %v4049
        %v4058 = vsub.f32 %v3680, %v4050
        %v4059 = vsub.f32 %v3681, %v4051
        %v4060 = vsub.f32 %v3682, %v4052
        %v4061 = vmul.f32 %v3950, %v4053
        %v4062 = vmul.f32 %v3952, %v4054
        %v4063 = vmul.f32 %v3954, %v4055
        %v4064 = vmul.f32 %v3956, %v4056
        %v4065 = vmul.f32 %v3958, %v4057
        %v4066 = vmul.f32 %v3960, %v4058
        %v4067 = vmul.f32 %v3962, %v4059
        %v4068 = vmul.f32 %v3964, %v4060
        %v4069 = vadd.f32 %v4045, %v4061
        %v4070 = vadd.f32 %v4046, %v4062
        %v4071 = vadd.f32 %v4047, %v4063
        %v4072 = vadd.f32 %v4048, %v4064
        %v4073 = vadd.f32 %v4049, %v4065
        %v4074 = vadd.f32 %v4050, %v4066
        %v4075 = vadd.f32 %v4051, %v4067
        %v4076 = vadd.f32 %v4052, %v4068
        %v4077 = vld [vmem:[#allocation5 + $0x7] sm:$0x1]
        %v4078 = vld [vmem:[#allocation5 + $0xf] sm:$0x1]
        %v4079 = vld [vmem:[#allocation5 + $0x17] sm:$0x1]
        %v4080 = vld [vmem:[#allocation5 + $0x1f] sm:$0x1]
        %v4081 = vld [vmem:[#allocation5 + $0x27] sm:$0x1]
        %v4082 = vld [vmem:[#allocation5 + $0x2f] sm:$0x1]
        %v4083 = vld [vmem:[#allocation5 + $0x37] sm:$0x1]
        %v4084 = vld [vmem:[#allocation5 + $0x3f] sm:$0x1]
        %vm4085 = vcmp.gt.f32.partialorder %v4077, 0.0
        %vm4086 = vcmp.gt.f32.partialorder %v4078, 0.0
        %vm4087 = vcmp.gt.f32.partialorder %v4079, 0.0
        %vm4088 = vcmp.gt.f32.partialorder %v4080, 0.0
        %vm4089 = vcmp.gt.f32.partialorder %v4081, 0.0
        %vm4090 = vcmp.gt.f32.partialorder %v4082, 0.0
        %vm4091 = vcmp.gt.f32.partialorder %v4083, 0.0
        %vm4092 = vcmp.gt.f32.partialorder %v4084, 0.0
        %v4093 = vsel %vm4085, %v4069, %v3675
        %v4094 = vsel %vm4086, %v4070, %v3676
        %v4095 = vsel %vm4087, %v4071, %v3677
        %v4096 = vsel %vm4088, %v4072, %v3678
        %v4097 = vsel %vm4089, %v4073, %v3679
        %v4098 = vsel %vm4090, %v4074, %v3680
        %v4099 = vsel %vm4091, %v4075, %v3681
        %v4100 = vsel %vm4092, %v4076, %v3682
        %v4109 = vrot.slane %v4094, 7
        %v4110 = vsel %vm1081, %v4109, %v4093
        %v4111 = vrot.slane %v4095, 6
        %v4112 = vsel %vm1084, %v4111, %v4110
        %v4113 = vrot.slane %v4096, 5
        %v4114 = vsel %vm1087, %v4113, %v4112
        %v4115 = vrot.slane %v4097, 4
        %v4116 = vsel %vm1090, %v4115, %v4114
        %v4117 = vrot.slane %v4098, 3
        %v4118 = vsel %vm1093, %v4117, %v4116
        %v4119 = vrot.slane %v4099, 2
        %v4120 = vsel %vm1096, %v4119, %v4118
        %v4121 = vrot.slane %v4100, 1
        %v4122 = vsel %vm1099, %v4121, %v4120
        %4124 = vst.msk [vmem:[%s274] sm:$0xff] %vm373, %v4122
        %s4125 = sand.u32 %s169, 1
        %s4126 = scalar_lea.sflag [#allocation7], %s4125
        %s4127 = sand.u32 %s169, 1
        %s4128 = smul.addr %s4127, 8
        %s4129 = scalar_lea.vmem [#allocation6], %s4128
        // Predicated region
        $region45: #{_lambda_.1} parent=43 // pred_check
          %p4130 = pneg %p179
        $region46: #{_lambda_.1} parent=43 // pred_check_branch
          %4132 = sbr.rel (%p4130) target = $region48
        $region47: #{_lambda_.1} parent=43 // pred_region
          %s4134 = ssub.s32 128, 128
          %4135 = vsyncadd %s4126, %s4134
          %s4136 = smul.addr %s20, 128
          %s4137 = scalar_lea.hbm %s6, %s4136
          %s4139 = sshll.u32 %s4129, 4
          %s4140 = int_to_ptr.vmem [resolvable:$true] %s4139
          %4142 = dma.vmem_to_hbm [thread:$0]  %s4140, 128, %s4137, %s4126
        $region48: #{_lambda_.1} parent=43 // pred_fallthru
          _
      $region44: #{_lambda_.1} parent=5 // pred_fallthru
        _
      %p4143 = scmp.le.s32.totalorder 2, %s15
      // Predicated region
      $region49: #{_lambda_.1} parent=5 // pred_check
        %p4144 = pneg %p4143
      $region50: #{_lambda_.1} parent=5 // pred_check_branch
        %4146 = sbr.rel (%p4144) target = $region52
      $region51: #{_lambda_.1} parent=5 // pred_region
        %s4147 = ssub.s32 %s15, 2
        // Predicated region
        $region53: #{_lambda_.1} parent=51 // pred_check
          %p4148 = pneg %p185
        $region54: #{_lambda_.1} parent=51 // pred_check_branch
          %4150 = sbr.rel (%p4148) target = $region56
        $region55: #{_lambda_.1} parent=51 // pred_region
          %s4151 = sand.u32 %s170, 1
          %s4152 = scalar_lea.sflag [#allocation7], %s4151
          %s4153 = sand.u32 %s170, 1
          %s4154 = smul.addr %s4153, 8
          %s4155 = scalar_lea.vmem [#allocation6], %s4154
          %4156 = dma.done %s4152, 128
        $region56: #{_lambda_.1} parent=51 // pred_fallthru
          _
      $region52: #{_lambda_.1} parent=5 // pred_fallthru
        _
    $region6: #{_lambda_.1} parent=1 // loop_footer
      %s19 = sadd.s32 1, %s15
    $region7: #{_lambda_.1} parent=1 // loop_footer_branch
      %14 = sbr.rel target = $region3
    $region8: #{_lambda_.1} parent=1 // loop_exit
      _
    %4157 = vsyncpa [#allocation7], 1
    %s4158 = scalar_lea.sflag [#allocation7], 1
    %4159 = vsyncpa %s4158, 1

</llo_original>
